<compile_context>
chip_gen: v7x
topology: tpu7x:2x2x1
jax: 0.10.0
libtpu: 0.0.40
codegen_flags: <defaults>
</compile_context>

<pallas_src>
import functools

import jax
import jax.numpy as jnp
from jax.experimental import pallas as pl
from jax.experimental.pallas import tpu as pltpu

# ----------------------------- tiling constants ------------------------------
LANE = 128          # lane quantum (last dim)
SUB = 8             # sublane quantum (second-to-last dim)
TM = 256            # output-row tile   (multiple of 128 -> fine on v5e & v6e/v7x)
TN = 256            # output-col tile
TK = 512            # contraction tile
VMEM_LIMIT = 32 * 1024 * 1024   # safe on v5e/v6e (128 MiB) and v7x (64 MiB)

AGG_DTYPE = jnp.bfloat16        # MXU operand dtype for dense-adjacency aggregation
                                # (f32 accumulation via preferred_element_type)


def _ru(x, m):
    return (x + m - 1) // m * m


def _pad_to(x, rows, cols):
    r, c = x.shape
    if r == rows and c == cols:
        return x
    return jnp.pad(x, ((0, rows - r), (0, cols - c)))


# --------------------------- fused tiled matmul kernel ------------------------

def _fused_mm_kernel(*args, nterms, has_bias, has_add, has_mul, relu):
    n_in = 2 * nterms + int(has_bias) + int(has_add) + int(has_mul)
    in_refs = args[:n_in]
    o_ref = args[n_in]
    acc_ref = args[n_in + 1]

    @pl.when(pl.program_id(2) == 0)
    def _init():
        acc_ref[...] = jnp.zeros_like(acc_ref)

    part = None
    for t in range(nterms):
        a = in_refs[2 * t][...]
        b = in_refs[2 * t + 1][...]
        if a.dtype != b.dtype:           # safety: promote mixed-dtype terms
            a = a.astype(jnp.float32)
            b = b.astype(jnp.float32)
        d = jnp.dot(a, b, preferred_element_type=jnp.float32)
        part = d if part is None else part + d
    acc_ref[...] += part

    @pl.when(pl.program_id(2) == pl.num_programs(2) - 1)
    def _finalize():
        r = acc_ref[...]
        idx = 2 * nterms
        if has_bias:
            r = r + in_refs[idx][...]
            idx += 1
        if has_add:
            r = r + in_refs[idx][...]
            idx += 1
        if relu:
            r = jnp.maximum(r, 0.0)
        if has_mul:
            r = r * in_refs[idx][...]
        o_ref[...] = r.astype(o_ref.dtype)


def fused_matmul(terms, bias=None, add=None, mul=None, relu=False,
                 operand_dtype=None):
    """out = (sum_t A_t @ B_t) [+ bias] [+ add] [relu] [* mul]   (f32 out)."""
    M = terms[0][0].shape[0]
    N = terms[0][1].shape[1]
    Kp = max(_ru(a.shape[1], LANE) for a, _ in terms)
    Mp = _ru(M, SUB)
    Np = _ru(N, LANE)
    tm = min(TM, Mp)
    tn = min(TN, Np)
    tk = min(TK, Kp)
    Mp = _ru(Mp, tm)
    Np = _ru(Np, tn)
    Kp = _ru(Kp, tk)

    inputs, in_specs = [], []
    for a, b in terms:
        if operand_dtype is not None:
            a = a.astype(operand_dtype)
            b = b.astype(operand_dtype)
        inputs.append(_pad_to(a, Mp, Kp))
        in_specs.append(pl.BlockSpec((tm, tk), lambda i, j, k: (i, k)))
        inputs.append(_pad_to(b, Kp, Np))
        in_specs.append(pl.BlockSpec((tk, tn), lambda i, j, k: (k, j)))

    has_bias = bias is not None
    if has_bias:
        inputs.append(_pad_to(bias.reshape(1, -1).astype(jnp.float32), 1, Np))
        in_specs.append(pl.BlockSpec((1, tn), lambda i, j, k: (0, j)))
    has_add = add is not None
    if has_add:
        inputs.append(_pad_to(add.astype(jnp.float32), Mp, Np))
        in_specs.append(pl.BlockSpec((tm, tn), lambda i, j, k: (i, j)))
    has_mul = mul is not None
    if has_mul:
        inputs.append(_pad_to(mul.astype(jnp.float32), Mp, Np))
        in_specs.append(pl.BlockSpec((tm, tn), lambda i, j, k: (i, j)))

    out = pl.pallas_call(
        functools.partial(_fused_mm_kernel, nterms=len(terms),
                          has_bias=has_bias, has_add=has_add,
                          has_mul=has_mul, relu=relu),
        out_shape=jax.ShapeDtypeStruct((Mp, Np), jnp.float32),
        grid=(Mp // tm, Np // tn, Kp // tk),
        in_specs=in_specs,
        out_specs=pl.BlockSpec((tm, tn), lambda i, j, k: (i, j)),
        scratch_shapes=[pltpu.VMEM((tm, tn), jnp.float32)],
        compiler_params=pltpu.CompilerParams(
            dimension_semantics=("parallel", "parallel", "arbitrary"),
            vmem_limit_bytes=VMEM_LIMIT),
    )(*inputs)
    return out[:M, :N]


# ------------------- fused gate (logits+softmax+tree sum+residual) ------------

def _gate_tree_kernel(t_ref, g_ref, gb_ref, cur_ref, o_ref, *, num_tree,
                      tree_weight):
    # t_ref: [L, tm, Hp]   g_ref: [L, Hp]   gb_ref: [1, L]   cur_ref: [tm, Hp]
    raw = []
    for l in range(num_tree):
        g_row = g_ref[l:l + 1, :]                                    # [1, Hp]
        logit = jnp.sum(t_ref[l] * g_row, axis=1, keepdims=True)     # [tm, 1]
        raw.append(logit + gb_ref[:, l:l + 1])
    m = raw[0]
    for l in range(1, num_tree):
        m = jnp.maximum(m, raw[l])
    es = [jnp.exp(r - m) for r in raw]
    denom = es[0]
    for l in range(1, num_tree):
        denom = denom + es[l]
    acc = es[0] * t_ref[0]
    for l in range(1, num_tree):
        acc = acc + es[l] * t_ref[l]
    x_tree = acc * pl.reciprocal(denom, approx=True)
    o_ref[...] = cur_ref[...] + tree_weight * x_tree


def gate_tree(tree_outs, G, gb, cur, tree_weight):
    L = len(tree_outs)
    N, H = cur.shape
    Np0 = _ru(N, SUB)
    Hp = _ru(H, LANE)
    tm = min(TM, Np0)
    Np = _ru(Np0, tm)
    t = jnp.stack([_pad_to(ti, Np, Hp) for ti in tree_outs], axis=0)  # [L,Np,Hp]
    Gp = _pad_to(G, L, Hp)
    gbp = gb.reshape(1, L)
    curp = _pad_to(cur, Np, Hp)
    out = pl.pallas_call(
        functools.partial(_gate_tree_kernel, num_tree=L,
                          tree_weight=float(tree_weight)),
        out_shape=jax.ShapeDtypeStruct((Np, Hp), jnp.float32),
        grid=(Np // tm,),
        in_specs=[pl.BlockSpec((L, tm, Hp), lambda i: (0, i, 0)),
                  pl.BlockSpec((L, Hp), lambda i: (0, 0)),
                  pl.BlockSpec((1, L), lambda i: (0, 0)),
                  pl.BlockSpec((tm, Hp), lambda i: (i, 0))],
        out_specs=pl.BlockSpec((tm, Hp), lambda i: (i, 0)),
        compiler_params=pltpu.CompilerParams(
            dimension_semantics=("parallel",),
            vmem_limit_bytes=VMEM_LIMIT),
    )(t, Gp, gbp, curp)
    return out[:N, :H]


# ---------------- fused edge-mask (linear + global min/max normalize) ---------

def _edge_mask_kernel(h_ref, w_ref, b_ref, o_ref, *, e_valid):
    z = jnp.sum(h_ref[...] * w_ref[...], axis=1, keepdims=True) + b_ref[...]
    row = jax.lax.broadcasted_iota(jnp.int32, z.shape, 0)
    valid = row < e_valid
    zmin = jnp.min(jnp.where(valid, z, jnp.inf))
    zmax = jnp.max(jnp.where(valid, z, -jnp.inf))
    denom = zmax - zmin
    denom = jnp.where(denom == 0.0, 1.0, denom)   # guard (reference would NaN)
    norm = jnp.where(valid, (z - zmin) / denom, 0.0)
    o_ref[...] = jnp.broadcast_to(norm, o_ref.shape)  # lane-dense store


def edge_mask_norm(h1, w2, b2):
    # Global min/max needs a full view -> one block (fine for moderate E;
    # would become a two-pass kernel at very large edge counts).
    E, F = h1.shape
    Ep = _ru(E, SUB)
    Fp = _ru(F, LANE)
    out = pl.pallas_call(
        functools.partial(_edge_mask_kernel, e_valid=E),
        out_shape=jax.ShapeDtypeStruct((Ep, LANE), jnp.float32),
        grid=(1,),
        in_specs=[pl.BlockSpec((Ep, Fp), lambda i: (0, 0)),
                  pl.BlockSpec((1, Fp), lambda i: (0, 0)),
                  pl.BlockSpec((1, 1), lambda i: (0, 0))],
        out_specs=pl.BlockSpec((Ep, LANE), lambda i: (0, 0)),
        compiler_params=pltpu.CompilerParams(
            dimension_semantics=("arbitrary",),
            vmem_limit_bytes=VMEM_LIMIT),
    )(_pad_to(h1, Ep, Fp), _pad_to(w2.reshape(1, -1), 1, Fp), b2.reshape(1, 1))
    return out[:E, :1]


# ------------------ fused head (linear + clamp + log_softmax) -----------------

def _head_kernel(x_ref, w_ref, b_ref, o_ref, acc_ref, *, n_valid):
    @pl.when(pl.program_id(1) == 0)
    def _init():
        acc_ref[...] = jnp.zeros_like(acc_ref)

    acc_ref[...] += jnp.dot(x_ref[...], w_ref[...],
                            preferred_element_type=jnp.float32)

    @pl.when(pl.program_id(1) == pl.num_programs(1) - 1)
    def _finalize():
        z = acc_ref[...] + b_ref[...]
        z = jnp.clip(z, -1e10, 1e10)
        col = jax.lax.broadcasted_iota(jnp.int32, z.shape, 1)
        valid = col < n_valid
        zm = jnp.where(valid, z, -jnp.inf)
        m = jnp.max(zm, axis=1, keepdims=True)
        e = jnp.where(valid, jnp.exp(z - m), 0.0)
        lse = jnp.log(jnp.sum(e, axis=1, keepdims=True))
        o_ref[...] = jnp.where(valid, z - m - lse, 0.0)


def head(x, w, b):
    M, K = x.shape
    N = w.shape[1]
    Mp = _ru(M, SUB)
    Kp = _ru(K, LANE)
    Np = _ru(N, LANE)          # log_softmax row fits in a single lane-dense tile
    tm = min(TM, Mp)
    tk = min(TK, Kp)
    Mp = _ru(Mp, tm)
    Kp = _ru(Kp, tk)
    out = pl.pallas_call(
        functools.partial(_head_kernel, n_valid=N),
        out_shape=jax.ShapeDtypeStruct((Mp, Np), jnp.float32),
        grid=(Mp // tm, Kp // tk),
        in_specs=[pl.BlockSpec((tm, tk), lambda i, k: (i, k)),
                  pl.BlockSpec((tk, Np), lambda i, k: (k, 0)),
                  pl.BlockSpec((1, Np), lambda i, k: (0, 0))],
        out_specs=pl.BlockSpec((tm, Np), lambda i, k: (i, 0)),
        scratch_shapes=[pltpu.VMEM((tm, Np), jnp.float32)],
        compiler_params=pltpu.CompilerParams(
            dimension_semantics=("parallel", "arbitrary"),
            vmem_limit_bytes=VMEM_LIMIT),
    )(_pad_to(x, Mp, Kp), _pad_to(w, Kp, Np),
      _pad_to(b.reshape(1, -1), 1, Np))
    return out[:M, :N]


# ------------------------- graph glue (plain JAX) ----------------------------

def mean_adj(edges, N):
    """Row-normalized adjacency so A @ X = mean over incoming neighbors."""
    src, dst = edges[0], edges[1]
    A = jnp.zeros((N, N), jnp.float32).at[dst, src].add(1.0)
    deg = jnp.sum(A, axis=1, keepdims=True)
    A = jnp.where(deg > 0, A / jnp.maximum(deg, 1.0), 0.0)
    return A.astype(AGG_DTYPE)     # bf16: halves HBM bytes of the N^2 operand


def gcn_adj(edges, edge_weight, N):
    """GCN symmetric normalization with edge weights + self loops."""
    src, dst = edges[0], edges[1]
    w = edge_weight.reshape(-1).astype(jnp.float32)
    A = jnp.zeros((N, N), jnp.float32).at[dst, src].add(w)
    # add self-loop weight 1 only where no self-loop exists (PyG
    # add_remaining_self_loops semantics; zero-weight self-loops treated as absent)
    diag = jnp.diagonal(A)
    A = A + jnp.diag(jnp.where(diag == 0.0, 1.0, 0.0))
    deg = jnp.sum(A, axis=1)
    dinv = jnp.where(deg > 0, jax.lax.rsqrt(deg), 0.0)
    return (A * dinv[:, None] * dinv[None, :]).astype(AGG_DTYPE)


# ------------------------------ model pieces ---------------------------------

def sage_conv(x, A_mean, p, hidden, relu=False):
    """SAGEConv(mean): lin_l(mean_aggr(x)) + lin_r(x) + b — fully fused."""
    in_feat = x.shape[1]
    if in_feat <= hidden:
        # aggregate in the narrower input space, then one 2-term projection kernel
        aggr = fused_matmul([(A_mean, x)], operand_dtype=AGG_DTYPE)
        return fused_matmul([(aggr, p['Wl']), (x, p['Wr'])], bias=p['b'], relu=relu)
    else:
        # project first -> smaller N x N aggregation matmul
        xl = fused_matmul([(x, p['Wl'])])
        aggr = fused_matmul([(A_mean, xl)], operand_dtype=AGG_DTYPE)
        return fused_matmul([(x, p['Wr'])], bias=p['b'], add=aggr, relu=relu)


def gcn_conv(x, A_norm, p, relu=False):
    xw = fused_matmul([(x, p['W'])])                                    # X @ W
    return fused_matmul([(A_norm, xw)], bias=p['b'], relu=relu,
                        operand_dtype=AGG_DTYPE)                        # Â(XW)+b


def layer_agg(x, main_edges, tree_edges, p, N, hidden, tree_weight):
    A_main = mean_adj(main_edges, N)
    cur = x
    L = len(p['convs'])
    for li, cp in enumerate(p['convs']):
        cur = sage_conv(cur, A_main, cp, hidden, relu=(li != L - 1))
        # dropout: eval mode -> identity
    tree_outs = []
    for j, tp in enumerate(p['tree']):
        A_t = mean_adj(tree_edges[j], N)
        tree_outs.append(sage_conv(x, A_t, tp, hidden, relu=True))
        # dropout: eval mode -> identity
    # fused: gate logits + softmax + weighted tree sum + (cur + w * x_tree)
    return gate_tree(tree_outs, p['gates']['G'], p['gates']['b'], cur, tree_weight)


def layer_agg_edge(x, edges, edge_attr, gcn_params, N):
    A = gcn_adj(edges, edge_attr, N)
    h = x
    L = len(gcn_params)
    for li, gp in enumerate(gcn_params):
        h = gcn_conv(h, A, gp, relu=(li != L - 1))
        # dropout: eval mode -> identity
    return h


def model_forward(x, graphs, params, *, hidden, tree_weight=1.0):
    N = x.shape[0]
    R = len(graphs)
    em = params['edge_mlp']
    layer_outputs, edge_attrs = [], []
    for i in range(R):
        main_edges = graphs[i]['main']
        lo = layer_agg(x, main_edges, graphs[i]['tree'],
                       params['layers'][i], N, hidden, tree_weight)     # [N, H]

        # edge MLP: Linear(3H,F)+ReLU as two matmul terms; constant edge-type
        # block folded into the bias row (edge_type is identical for all edges).
        src, dst = main_edges[0], main_edges[1]
        lo_src = jnp.take(lo, src, axis=0)
        lo_dst = jnp.take(lo, dst, axis=0)
        eb1 = params['edge_emb'][i] @ em['W1c'] + em['b1']              # [F]
        h1 = fused_matmul([(lo_src, em['W1a']), (lo_dst, em['W1b'])],
                          bias=eb1, relu=True)                          # [E, F]
        edge_attrs.append(edge_mask_norm(h1, em['W2'], em['b2']))       # [E, 1]

        # feat mask: Linear(2H+F,F) with node-type block folded into bias;
        # x * feat_mask fused into the same kernel.
        fm = params['feat_mask'][i]
        fb = params['node_emb'][i] @ fm['W_nt'] + fm['b']               # [F]
        layer_outputs.append(fused_matmul([(lo, fm['W_lo']), (x, fm['W_x'])],
                                          bias=fb, mul=x))              # [N, F]

    hetro_outs = [layer_agg_edge(layer_outputs[i], graphs[i]['main'],
                                 edge_attrs[i], params['hetro'][i], N)
                  for i in range(R)]
    x_temp = jnp.concatenate(hetro_outs, axis=1)                        # [N, H*R]
    logp = head(x_temp, params['linear']['W'], params['linear']['b'])
    return logp, x_temp


# ------------------------------ parameters -----------------------------------

def init_params(key, in_feat, hidden, out_feat, R, num_layers, layers_tree,
                hetero_layers):
    keys = jax.random.split(key, 1024)
    it = iter(keys)

    def nxt():
        return next(it)

    def lin(i_d, o_d):
        return (0.1 * jax.random.normal(nxt(), (i_d, o_d))).astype(jnp.float32)

    def vec(d):
        return (0.05 * jax.random.normal(nxt(), (d,))).astype(jnp.float32)

    def sage(i_d, o_d):
        return {'Wl': lin(i_d, o_d), 'Wr': lin(i_d, o_d), 'b': vec(o_d)}

    layers = []
    for _ in range(R):
        convs = [sage(in_feat if l == 0 else hidden, hidden)
                 for l in range(num_layers)]
        tree = [sage(in_feat, hidden) for _ in range(layers_tree)]
        gates = {'G': (0.1 * jax.random.normal(nxt(), (layers_tree, hidden))
                       ).astype(jnp.float32),
                 'b': vec(layers_tree)}
        layers.append({'convs': convs, 'tree': tree, 'gates': gates})
        # note: Layer_AGG.bias parameter is unused in the reference forward.

    hetro = [[{'W': lin(in_feat if l == 0 else hidden, hidden), 'b': vec(hidden)}
              for l in range(hetero_layers)] for _ in range(R)]

    return {
        'node_emb': (0.1 * jax.random.normal(nxt(), (R, hidden))).astype(jnp.float32),
        'edge_emb': (0.1 * jax.random.normal(nxt(), (R, hidden))).astype(jnp.float32),
        'layers': layers,
        'feat_mask': [{'W_lo': lin(hidden, in_feat), 'W_x': lin(in_feat, in_feat),
                       'W_nt': lin(hidden, in_feat), 'b': vec(in_feat)}
                      for _ in range(R)],
        # edge_mask_i Linear layers exist in __init__ but are never used in forward.
        'edge_mlp': {'W1a': lin(hidden, in_feat), 'W1b': lin(hidden, in_feat),
                     'W1c': lin(hidden, in_feat), 'b1': vec(in_feat),
                     'W2': lin(in_feat, 1), 'b2': vec(1)},
        'linear': {'W': lin(hidden * R, out_feat), 'b': vec(out_feat)},
        'hetro': hetro,
    }


def make_graphs(key, N, R, E_main, E_tree, layers_tree):
    graphs = []
    for _ in range(R):
        key, k1 = jax.random.split(key)
        main = jax.random.randint(k1, (2, E_main), 0, N, dtype=jnp.int32)
        tree = []
        for _ in range(layers_tree):
            key, k2 = jax.random.split(key)
            tree.append(jax.random.randint(k2, (2, E_tree), 0, N, dtype=jnp.int32))
        graphs.append({'main': main, 'tree': tree})
    return graphs


# --------------------------------- main ---------------------------------------

if __name__ == "__main__":
    N, in_feat, hidden, out_feat = 16, 8, 32, 4
    R, num_layers, layers_tree, hetero_layers = 3, 2, 2, 2
    E_main, E_tree = 24, 20

    key = jax.random.PRNGKey(0)
    kx, kp, kg = jax.random.split(key, 3)

    x = jax.random.normal(kx, (N, in_feat), jnp.float32)
    params = init_params(kp, in_feat, hidden, out_feat, R,
                         num_layers, layers_tree, hetero_layers)
    graphs = make_graphs(kg, N, R, E_main, E_tree, layers_tree)

    fwd = jax.jit(functools.partial(model_forward, hidden=hidden, tree_weight=1.0))
    logp, x_temp = fwd(x, graphs, params)
    jax.block_until_ready((logp, x_temp))

    assert logp.shape == (N, out_feat)
    assert x_temp.shape == (N, hidden * R)
    assert bool(jnp.all(jnp.isfinite(logp)))
    assert bool(jnp.all(jnp.isfinite(x_temp)))
    print("KERNEL_OK")
</pallas_src>

<mosaic_0001>
module attributes {stable_mosaic.version = 11 : i64} {
  func.func @_fused_mm_kernel(%arg0: i32, %arg1: i32, %arg2: i32, %arg3: memref<16x128xbf16, #tpu.memory_space<vmem>>, %arg4: memref<128x128xbf16, #tpu.memory_space<vmem>>, %arg5: memref<16x128xf32, #tpu.memory_space<vmem>>, %arg6: memref<16x128xf32, #tpu.memory_space<vmem>>) attributes {dimension_semantics = [#tpu.dimension_semantics<parallel>, #tpu.dimension_semantics<parallel>, #tpu.dimension_semantics<arbitrary>], iteration_bounds = array<i64: 1, 1, 1>, scalar_prefetch = 0 : i64, scratch_operands = 1 : i64, tpu.core_type = #tpu.core_type<tc>, window_params = [{transform_indices = @transform_0, window_bounds = array<i64: 16, 128>}, {transform_indices = @transform_1, window_bounds = array<i64: 128, 128>}, {transform_indices = @transform_2, window_bounds = array<i64: 16, 128>}]} {
    %c0_i32 = arith.constant 0 : i32
    %0 = arith.cmpi eq, %arg2, %c0_i32 : i32
    %1 = arith.extui %0 : i1 to i32
    %c0_i32_0 = arith.constant 0 : i32
    %2 = arith.cmpi ne, %1, %c0_i32_0 : i32
    scf.if %2 {
      %cst_10 = arith.constant 0.000000e+00 : f32
      %12 = vector.broadcast %cst_10 : f32 to vector<16x128xf32>
      %c0_11 = arith.constant 0 : index
      %c0_12 = arith.constant 0 : index
      %13 = vector.load %arg6[%c0_11, %c0_12] : memref<16x128xf32, #tpu.memory_space<vmem>>, vector<16x128xf32>
      tpu.vector_store %arg6[%c0_11, %c0_12], %12 {strides = array<i32>} : memref<16x128xf32, #tpu.memory_space<vmem>>, vector<16x128xf32>,
    } else {
    }
    %c0 = arith.constant 0 : index
    %c0_1 = arith.constant 0 : index
    %3 = vector.load %arg3[%c0, %c0_1] : memref<16x128xbf16, #tpu.memory_space<vmem>>, vector<16x128xbf16>
    %c0_2 = arith.constant 0 : index
    %c0_3 = arith.constant 0 : index
    %4 = vector.load %arg4[%c0_2, %c0_3] : memref<128x128xbf16, #tpu.memory_space<vmem>>, vector<128x128xbf16>
    %cst = arith.constant dense<0.000000e+00> : vector<16x128xf32>
    %5 = tpu.matmul %3, %4, %cst {dimension_numbers = #tpu.dot_dimension_numbers<[1], [0], [0], [1], [0, 0, 1, 1], [], []>} : vector<16x128xbf16>, vector<128x128xbf16>, vector<16x128xf32> -> vector<16x128xf32>
    %c0_4 = arith.constant 0 : index
    %c0_5 = arith.constant 0 : index
    %6 = vector.load %arg6[%c0_4, %c0_5] : memref<16x128xf32, #tpu.memory_space<vmem>>, vector<16x128xf32>
    %7 = arith.addf %6, %5 : vector<16x128xf32>
    %c0_6 = arith.constant 0 : index
    %c0_7 = arith.constant 0 : index
    %8 = vector.load %arg6[%c0_6, %c0_7] : memref<16x128xf32, #tpu.memory_space<vmem>>, vector<16x128xf32>
    tpu.vector_store %arg6[%c0_6, %c0_7], %7 {strides = array<i32>} : memref<16x128xf32, #tpu.memory_space<vmem>>, vector<16x128xf32>,
    %c0_i32_8 = arith.constant 0 : i32
    %9 = arith.cmpi eq, %arg2, %c0_i32_8 : i32
    %10 = arith.extui %9 : i1 to i32
    %c0_i32_9 = arith.constant 0 : i32
    %11 = arith.cmpi ne, %10, %c0_i32_9 : i32
    scf.if %11 {
      %c0_10 = arith.constant 0 : index
      %c0_11 = arith.constant 0 : index
      %12 = vector.load %arg6[%c0_10, %c0_11] : memref<16x128xf32, #tpu.memory_space<vmem>>, vector<16x128xf32>
      %c0_12 = arith.constant 0 : index
      %c0_13 = arith.constant 0 : index
      %13 = vector.load %arg5[%c0_12, %c0_13] : memref<16x128xf32, #tpu.memory_space<vmem>>, vector<16x128xf32>
      tpu.vector_store %arg5[%c0_12, %c0_13], %12 {strides = array<i32>} : memref<16x128xf32, #tpu.memory_space<vmem>>, vector<16x128xf32>,
    } else {
    }
    return
  }
  func.func @transform_0(%arg0: i32, %arg1: i32, %arg2: i32) -> (i32, i32) {
    %c0_i32 = arith.constant 0 : i32
    return %arg0, %arg2 : i32, i32
  }
  func.func @transform_1(%arg0: i32, %arg1: i32, %arg2: i32) -> (i32, i32) {
    %c0_i32 = arith.constant 0 : i32
    return %arg2, %arg1 : i32, i32
  }
  func.func @transform_2(%arg0: i32, %arg1: i32, %arg2: i32) -> (i32, i32) {
    %c0_i32 = arith.constant 0 : i32
    return %arg0, %arg1 : i32, i32
  }
}

module attributes {stable_mosaic.version = 11 : i64} {
  func.func @_fused_mm_kernel(%arg0: i32, %arg1: i32, %arg2: i32, %arg3: memref<16x128xf32, #tpu.memory_space<vmem>>, %arg4: memref<128x128xf32, #tpu.memory_space<vmem>>, %arg5: memref<16x128xf32, #tpu.memory_space<vmem>>, %arg6: memref<128x128xf32, #tpu.memory_space<vmem>>, %arg7: memref<1x128xf32, #tpu.memory_space<vmem>>, %arg8: memref<16x128xf32, #tpu.memory_space<vmem>>, %arg9: memref<16x128xf32, #tpu.memory_space<vmem>>) attributes {dimension_semantics = [#tpu.dimension_semantics<parallel>, #tpu.dimension_semantics<parallel>, #tpu.dimension_semantics<arbitrary>], iteration_bounds = array<i64: 1, 1, 1>, scalar_prefetch = 0 : i64, scratch_operands = 1 : i64, tpu.core_type = #tpu.core_type<tc>, window_params = [{transform_indices = @transform_0, window_bounds = array<i64: 16, 128>}, {transform_indices = @transform_1, window_bounds = array<i64: 128, 128>}, {transform_indices = @transform_2, window_bounds = array<i64: 16, 128>}, {transform_indices = @transform_3, window_bounds = array<i64: 128, 128>}, {transform_indices = @transform_4, window_bounds = array<i64: 1, 128>}, {transform_indices = @transform_5, window_bounds = array<i64: 16, 128>}]} {
    %c0_i32 = arith.constant 0 : i32
    %0 = arith.cmpi eq, %arg2, %c0_i32 : i32
    %1 = arith.extui %0 : i1 to i32
    %c0_i32_0 = arith.constant 0 : i32
    %2 = arith.cmpi ne, %1, %c0_i32_0 : i32
    scf.if %2 {
      %cst_15 = arith.constant 0.000000e+00 : f32
      %16 = vector.broadcast %cst_15 : f32 to vector<16x128xf32>
      %c0_16 = arith.constant 0 : index
      %c0_17 = arith.constant 0 : index
      %17 = vector.load %arg9[%c0_16, %c0_17] : memref<16x128xf32, #tpu.memory_space<vmem>>, vector<16x128xf32>
      tpu.vector_store %arg9[%c0_16, %c0_17], %16 {strides = array<i32>} : memref<16x128xf32, #tpu.memory_space<vmem>>, vector<16x128xf32>,
    } else {
    }
    %c0 = arith.constant 0 : index
    %c0_1 = arith.constant 0 : index
    %3 = vector.load %arg3[%c0, %c0_1] : memref<16x128xf32, #tpu.memory_space<vmem>>, vector<16x128xf32>
    %c0_2 = arith.constant 0 : index
    %c0_3 = arith.constant 0 : index
    %4 = vector.load %arg4[%c0_2, %c0_3] : memref<128x128xf32, #tpu.memory_space<vmem>>, vector<128x128xf32>
    %cst = arith.constant dense<0.000000e+00> : vector<16x128xf32>
    %5 = tpu.matmul %3, %4, %cst {dimension_numbers = #tpu.dot_dimension_numbers<[1], [0], [0], [1], [0, 0, 1, 1], [], []>} : vector<16x128xf32>, vector<128x128xf32>, vector<16x128xf32> -> vector<16x128xf32>
    %c0_4 = arith.constant 0 : index
    %c0_5 = arith.constant 0 : index
    %6 = vector.load %arg5[%c0_4, %c0_5] : memref<16x128xf32, #tpu.memory_space<vmem>>, vector<16x128xf32>
    %c0_6 = arith.constant 0 : index
    %c0_7 = arith.constant 0 : index
    %7 = vector.load %arg6[%c0_6, %c0_7] : memref<128x128xf32, #tpu.memory_space<vmem>>, vector<128x128xf32>
    %cst_8 = arith.constant dense<0.000000e+00> : vector<16x128xf32>
    %8 = tpu.matmul %6, %7, %cst_8 {dimension_numbers = #tpu.dot_dimension_numbers<[1], [0], [0], [1], [0, 0, 1, 1], [], []>} : vector<16x128xf32>, vector<128x128xf32>, vector<16x128xf32> -> vector<16x128xf32>
    %9 = arith.addf %5, %8 : vector<16x128xf32>
    %c0_9 = arith.constant 0 : index
    %c0_10 = arith.constant 0 : index
    %10 = vector.load %arg9[%c0_9, %c0_10] : memref<16x128xf32, #tpu.memory_space<vmem>>, vector<16x128xf32>
    %11 = arith.addf %10, %9 : vector<16x128xf32>
    %c0_11 = arith.constant 0 : index
    %c0_12 = arith.constant 0 : index
    %12 = vector.load %arg9[%c0_11, %c0_12] : memref<16x128xf32, #tpu.memory_space<vmem>>, vector<16x128xf32>
    tpu.vector_store %arg9[%c0_11, %c0_12], %11 {strides = array<i32>} : memref<16x128xf32, #tpu.memory_space<vmem>>, vector<16x128xf32>,
    %c0_i32_13 = arith.constant 0 : i32
    %13 = arith.cmpi eq, %arg2, %c0_i32_13 : i32
    %14 = arith.extui %13 : i1 to i32
    %c0_i32_14 = arith.constant 0 : i32
    %15 = arith.cmpi ne, %14, %c0_i32_14 : i32
    scf.if %15 {
      %c0_15 = arith.constant 0 : index
      %c0_16 = arith.constant 0 : index
      %16 = vector.load %arg9[%c0_15, %c0_16] : memref<16x128xf32, #tpu.memory_space<vmem>>, vector<16x128xf32>
      %c0_17 = arith.constant 0 : index
      %c0_18 = arith.constant 0 : index
      %17 = vector.load %arg7[%c0_17, %c0_18] : memref<1x128xf32, #tpu.memory_space<vmem>>, vector<1x128xf32>
      %18 = vector.broadcast %17 : vector<1x128xf32> to vector<16x128xf32>
      %19 = arith.addf %16, %18 : vector<16x128xf32>
      %c0_19 = arith.constant 0 : index
      %c0_20 = arith.constant 0 : index
      %20 = vector.load %arg8[%c0_19, %c0_20] : memref<16x128xf32, #tpu.memory_space<vmem>>, vector<16x128xf32>
      tpu.vector_store %arg8[%c0_19, %c0_20], %19 {strides = array<i32>} : memref<16x128xf32, #tpu.memory_space<vmem>>, vector<16x128xf32>,
    } else {
    }
    return
  }
  func.func @transform_0(%arg0: i32, %arg1: i32, %arg2: i32) -> (i32, i32) {
    %c0_i32 = arith.constant 0 : i32
    return %arg0, %arg2 : i32, i32
  }
  func.func @transform_1(%arg0: i32, %arg1: i32, %arg2: i32) -> (i32, i32) {
    %c0_i32 = arith.constant 0 : i32
    return %arg2, %arg1 : i32, i32
  }
  func.func @transform_2(%arg0: i32, %arg1: i32, %arg2: i32) -> (i32, i32) {
    %c0_i32 = arith.constant 0 : i32
    return %arg0, %arg2 : i32, i32
  }
  func.func @transform_3(%arg0: i32, %arg1: i32, %arg2: i32) -> (i32, i32) {
    %c0_i32 = arith.constant 0 : i32
    return %arg2, %arg1 : i32, i32
  }
  func.func @transform_4(%arg0: i32, %arg1: i32, %arg2: i32) -> (i32, i32) {
    %c0_i32 = arith.constant 0 : i32
    %c0_i32_0 = arith.constant 0 : i32
    return %c0_i32, %arg1 : i32, i32
  }
  func.func @transform_5(%arg0: i32, %arg1: i32, %arg2: i32) -> (i32, i32) {
    %c0_i32 = arith.constant 0 : i32
    return %arg0, %arg1 : i32, i32
  }
}

module attributes {stable_mosaic.version = 11 : i64} {
  func.func @_fused_mm_kernel(%arg0: i32, %arg1: i32, %arg2: i32, %arg3: memref<16x128xf32, #tpu.memory_space<vmem>>, %arg4: memref<128x128xf32, #tpu.memory_space<vmem>>, %arg5: memref<16x128xf32, #tpu.memory_space<vmem>>, %arg6: memref<128x128xf32, #tpu.memory_space<vmem>>, %arg7: memref<1x128xf32, #tpu.memory_space<vmem>>, %arg8: memref<16x128xf32, #tpu.memory_space<vmem>>, %arg9: memref<16x128xf32, #tpu.memory_space<vmem>>) attributes {dimension_semantics = [#tpu.dimension_semantics<parallel>, #tpu.dimension_semantics<parallel>, #tpu.dimension_semantics<arbitrary>], iteration_bounds = array<i64: 1, 1, 1>, scalar_prefetch = 0 : i64, scratch_operands = 1 : i64, tpu.core_type = #tpu.core_type<tc>, window_params = [{transform_indices = @transform_0, window_bounds = array<i64: 16, 128>}, {transform_indices = @transform_1, window_bounds = array<i64: 128, 128>}, {transform_indices = @transform_2, window_bounds = array<i64: 16, 128>}, {transform_indices = @transform_3, window_bounds = array<i64: 128, 128>}, {transform_indices = @transform_4, window_bounds = array<i64: 1, 128>}, {transform_indices = @transform_5, window_bounds = array<i64: 16, 128>}]} {
    %c0_i32 = arith.constant 0 : i32
    %0 = arith.cmpi eq, %arg2, %c0_i32 : i32
    %1 = arith.extui %0 : i1 to i32
    %c0_i32_0 = arith.constant 0 : i32
    %2 = arith.cmpi ne, %1, %c0_i32_0 : i32
    scf.if %2 {
      %cst_15 = arith.constant 0.000000e+00 : f32
      %16 = vector.broadcast %cst_15 : f32 to vector<16x128xf32>
      %c0_16 = arith.constant 0 : index
      %c0_17 = arith.constant 0 : index
      %17 = vector.load %arg9[%c0_16, %c0_17] : memref<16x128xf32, #tpu.memory_space<vmem>>, vector<16x128xf32>
      tpu.vector_store %arg9[%c0_16, %c0_17], %16 {strides = array<i32>} : memref<16x128xf32, #tpu.memory_space<vmem>>, vector<16x128xf32>,
    } else {
    }
    %c0 = arith.constant 0 : index
    %c0_1 = arith.constant 0 : index
    %3 = vector.load %arg3[%c0, %c0_1] : memref<16x128xf32, #tpu.memory_space<vmem>>, vector<16x128xf32>
    %c0_2 = arith.constant 0 : index
    %c0_3 = arith.constant 0 : index
    %4 = vector.load %arg4[%c0_2, %c0_3] : memref<128x128xf32, #tpu.memory_space<vmem>>, vector<128x128xf32>
    %cst = arith.constant dense<0.000000e+00> : vector<16x128xf32>
    %5 = tpu.matmul %3, %4, %cst {dimension_numbers = #tpu.dot_dimension_numbers<[1], [0], [0], [1], [0, 0, 1, 1], [], []>} : vector<16x128xf32>, vector<128x128xf32>, vector<16x128xf32> -> vector<16x128xf32>
    %c0_4 = arith.constant 0 : index
    %c0_5 = arith.constant 0 : index
    %6 = vector.load %arg5[%c0_4, %c0_5] : memref<16x128xf32, #tpu.memory_space<vmem>>, vector<16x128xf32>
    %c0_6 = arith.constant 0 : index
    %c0_7 = arith.constant 0 : index
    %7 = vector.load %arg6[%c0_6, %c0_7] : memref<128x128xf32, #tpu.memory_space<vmem>>, vector<128x128xf32>
    %cst_8 = arith.constant dense<0.000000e+00> : vector<16x128xf32>
    %8 = tpu.matmul %6, %7, %cst_8 {dimension_numbers = #tpu.dot_dimension_numbers<[1], [0], [0], [1], [0, 0, 1, 1], [], []>} : vector<16x128xf32>, vector<128x128xf32>, vector<16x128xf32> -> vector<16x128xf32>
    %9 = arith.addf %5, %8 : vector<16x128xf32>
    %c0_9 = arith.constant 0 : index
    %c0_10 = arith.constant 0 : index
    %10 = vector.load %arg9[%c0_9, %c0_10] : memref<16x128xf32, #tpu.memory_space<vmem>>, vector<16x128xf32>
    %11 = arith.addf %10, %9 : vector<16x128xf32>
    %c0_11 = arith.constant 0 : index
    %c0_12 = arith.constant 0 : index
    %12 = vector.load %arg9[%c0_11, %c0_12] : memref<16x128xf32, #tpu.memory_space<vmem>>, vector<16x128xf32>
    tpu.vector_store %arg9[%c0_11, %c0_12], %11 {strides = array<i32>} : memref<16x128xf32, #tpu.memory_space<vmem>>, vector<16x128xf32>,
    %c0_i32_13 = arith.constant 0 : i32
    %13 = arith.cmpi eq, %arg2, %c0_i32_13 : i32
    %14 = arith.extui %13 : i1 to i32
    %c0_i32_14 = arith.constant 0 : i32
    %15 = arith.cmpi ne, %14, %c0_i32_14 : i32
    scf.if %15 {
      %c0_15 = arith.constant 0 : index
      %c0_16 = arith.constant 0 : index
      %16 = vector.load %arg9[%c0_15, %c0_16] : memref<16x128xf32, #tpu.memory_space<vmem>>, vector<16x128xf32>
      %c0_17 = arith.constant 0 : index
      %c0_18 = arith.constant 0 : index
      %17 = vector.load %arg7[%c0_17, %c0_18] : memref<1x128xf32, #tpu.memory_space<vmem>>, vector<1x128xf32>
      %18 = vector.broadcast %17 : vector<1x128xf32> to vector<16x128xf32>
      %19 = arith.addf %16, %18 : vector<16x128xf32>
      %cst_19 = arith.constant 0.000000e+00 : f32
      %20 = vector.broadcast %cst_19 : f32 to vector<16x128xf32>
      %21 = arith.maximumf %19, %20 : vector<16x128xf32>
      %c0_20 = arith.constant 0 : index
      %c0_21 = arith.constant 0 : index
      %22 = vector.load %arg8[%c0_20, %c0_21] : memref<16x128xf32, #tpu.memory_space<vmem>>, vector<16x128xf32>
      tpu.vector_store %arg8[%c0_20, %c0_21], %21 {strides = array<i32>} : memref<16x128xf32, #tpu.memory_space<vmem>>, vector<16x128xf32>,
    } else {
    }
    return
  }
  func.func @transform_0(%arg0: i32, %arg1: i32, %arg2: i32) -> (i32, i32) {
    %c0_i32 = arith.constant 0 : i32
    return %arg0, %arg2 : i32, i32
  }
  func.func @transform_1(%arg0: i32, %arg1: i32, %arg2: i32) -> (i32, i32) {
    %c0_i32 = arith.constant 0 : i32
    return %arg2, %arg1 : i32, i32
  }
  func.func @transform_2(%arg0: i32, %arg1: i32, %arg2: i32) -> (i32, i32) {
    %c0_i32 = arith.constant 0 : i32
    return %arg0, %arg2 : i32, i32
  }
  func.func @transform_3(%arg0: i32, %arg1: i32, %arg2: i32) -> (i32, i32) {
    %c0_i32 = arith.constant 0 : i32
    return %arg2, %arg1 : i32, i32
  }
  func.func @transform_4(%arg0: i32, %arg1: i32, %arg2: i32) -> (i32, i32) {
    %c0_i32 = arith.constant 0 : i32
    %c0_i32_0 = arith.constant 0 : i32
    return %c0_i32, %arg1 : i32, i32
  }
  func.func @transform_5(%arg0: i32, %arg1: i32, %arg2: i32) -> (i32, i32) {
    %c0_i32 = arith.constant 0 : i32
    return %arg0, %arg1 : i32, i32
  }
}

module attributes {stable_mosaic.version = 11 : i64} {
  func.func @_gate_tree_kernel(%arg0: i32, %arg1: memref<2x16x128xf32, #tpu.memory_space<vmem>>, %arg2: memref<2x128xf32, #tpu.memory_space<vmem>>, %arg3: memref<1x2xf32, #tpu.memory_space<vmem>>, %arg4: memref<16x128xf32, #tpu.memory_space<vmem>>, %arg5: memref<16x128xf32, #tpu.memory_space<vmem>>) attributes {dimension_semantics = [#tpu.dimension_semantics<parallel>], iteration_bounds = array<i64: 1>, scalar_prefetch = 0 : i64, scratch_operands = 0 : i64, tpu.core_type = #tpu.core_type<tc>, window_params = [{transform_indices = @transform_0, window_bounds = array<i64: 2, 16, 128>}, {pipeline_mode = #tpu.pipeline_mode<synchronous>, transform_indices = @transform_1, window_bounds = array<i64: 2, 128>}, {pipeline_mode = #tpu.pipeline_mode<synchronous>, transform_indices = @transform_2, window_bounds = array<i64: 1, 2>}, {transform_indices = @transform_3, window_bounds = array<i64: 16, 128>}, {transform_indices = @transform_4, window_bounds = array<i64: 16, 128>}]} {
    %c0 = arith.constant 0 : index
    %c0_0 = arith.constant 0 : index
    %0 = vector.load %arg2[%c0, %c0_0] : memref<2x128xf32, #tpu.memory_space<vmem>>, vector<1x128xf32>
    %c0_1 = arith.constant 0 : index
    %c0_2 = arith.constant 0 : index
    %c0_3 = arith.constant 0 : index
    %1 = vector.load %arg1[%c0_1, %c0_2, %c0_3] : memref<2x16x128xf32, #tpu.memory_space<vmem>>, vector<1x16x128xf32>
    %2 = vector.shape_cast %1 : vector<1x16x128xf32> to vector<16x128xf32>
    %3 = vector.broadcast %0 : vector<1x128xf32> to vector<16x128xf32>
    %4 = arith.mulf %2, %3 : vector<16x128xf32>
    %cst = arith.constant dense<0.000000e+00> : vector<16xf32>
    %5 = vector.multi_reduction <add>, %4, %cst [1] : vector<16x128xf32> to vector<16xf32>
    %6 = vector.shape_cast %5 : vector<16xf32> to vector<16x1xf32>
    %c0_4 = arith.constant 0 : index
    %c0_5 = arith.constant 0 : index
    %7 = vector.load %arg3[%c0_4, %c0_5] : memref<1x2xf32, #tpu.memory_space<vmem>>, vector<1x1xf32>
    %8 = vector.broadcast %7 : vector<1x1xf32> to vector<16x1xf32>
    %9 = arith.addf %6, %8 : vector<16x1xf32>
    %c1 = arith.constant 1 : index
    %c0_6 = arith.constant 0 : index
    %10 = vector.load %arg2[%c1, %c0_6] : memref<2x128xf32, #tpu.memory_space<vmem>>, vector<1x128xf32>
    %c1_7 = arith.constant 1 : index
    %c0_8 = arith.constant 0 : index
    %c0_9 = arith.constant 0 : index
    %11 = vector.load %arg1[%c1_7, %c0_8, %c0_9] : memref<2x16x128xf32, #tpu.memory_space<vmem>>, vector<1x16x128xf32>
    %12 = vector.shape_cast %11 : vector<1x16x128xf32> to vector<16x128xf32>
    %13 = vector.broadcast %10 : vector<1x128xf32> to vector<16x128xf32>
    %14 = arith.mulf %12, %13 : vector<16x128xf32>
    %cst_10 = arith.constant dense<0.000000e+00> : vector<16xf32>
    %15 = vector.multi_reduction <add>, %14, %cst_10 [1] : vector<16x128xf32> to vector<16xf32>
    %16 = vector.shape_cast %15 : vector<16xf32> to vector<16x1xf32>
    %c0_11 = arith.constant 0 : index
    %c1_12 = arith.constant 1 : index
    %17 = vector.load %arg3[%c0_11, %c1_12] : memref<1x2xf32, #tpu.memory_space<vmem>>, vector<1x1xf32>
    %18 = vector.broadcast %17 : vector<1x1xf32> to vector<16x1xf32>
    %19 = arith.addf %16, %18 : vector<16x1xf32>
    %20 = arith.maximumf %9, %19 : vector<16x1xf32>
    %21 = arith.subf %9, %20 : vector<16x1xf32>
    %22 = math.exp %21 : vector<16x1xf32>
    %23 = arith.subf %19, %20 : vector<16x1xf32>
    %24 = math.exp %23 : vector<16x1xf32>
    %25 = arith.addf %22, %24 : vector<16x1xf32>
    %c0_13 = arith.constant 0 : index
    %c0_14 = arith.constant 0 : index
    %c0_15 = arith.constant 0 : index
    %26 = vector.load %arg1[%c0_13, %c0_14, %c0_15] : memref<2x16x128xf32, #tpu.memory_space<vmem>>, vector<1x16x128xf32>
    %27 = vector.shape_cast %26 : vector<1x16x128xf32> to vector<16x128xf32>
    %28 = vector.broadcast %22 : vector<16x1xf32> to vector<16x128xf32>
    %29 = arith.mulf %28, %27 : vector<16x128xf32>
    %c1_16 = arith.constant 1 : index
    %c0_17 = arith.constant 0 : index
    %c0_18 = arith.constant 0 : index
    %30 = vector.load %arg1[%c1_16, %c0_17, %c0_18] : memref<2x16x128xf32, #tpu.memory_space<vmem>>, vector<1x16x128xf32>
    %31 = vector.shape_cast %30 : vector<1x16x128xf32> to vector<16x128xf32>
    %32 = vector.broadcast %24 : vector<16x1xf32> to vector<16x128xf32>
    %33 = arith.mulf %32, %31 : vector<16x128xf32>
    %34 = arith.addf %29, %33 : vector<16x128xf32>
    %35 = tpu.reciprocal %25 {approx = true} : vector<16x1xf32> -> vector<16x1xf32>
    %36 = vector.broadcast %35 : vector<16x1xf32> to vector<16x128xf32>
    %37 = arith.mulf %34, %36 : vector<16x128xf32>
    %c0_19 = arith.constant 0 : index
    %c0_20 = arith.constant 0 : index
    %38 = vector.load %arg4[%c0_19, %c0_20] : memref<16x128xf32, #tpu.memory_space<vmem>>, vector<16x128xf32>
    %cst_21 = arith.constant 1.000000e+00 : f32
    %39 = vector.broadcast %cst_21 : f32 to vector<16x128xf32>
    %40 = arith.mulf %39, %37 : vector<16x128xf32>
    %41 = arith.addf %38, %40 : vector<16x128xf32>
    %c0_22 = arith.constant 0 : index
    %c0_23 = arith.constant 0 : index
    %42 = vector.load %arg5[%c0_22, %c0_23] : memref<16x128xf32, #tpu.memory_space<vmem>>, vector<16x128xf32>
    tpu.vector_store %arg5[%c0_22, %c0_23], %41 {strides = array<i32>} : memref<16x128xf32, #tpu.memory_space<vmem>>, vector<16x128xf32>,
    return
  }
  func.func @transform_0(%arg0: i32) -> (i32, i32, i32) {
    %c0_i32 = arith.constant 0 : i32
    %c0_i32_0 = arith.constant 0 : i32
    %c0_i32_1 = arith.constant 0 : i32
    return %c0_i32, %arg0, %c0_i32_0 : i32, i32, i32
  }
  func.func @transform_1(%arg0: i32) -> (i32, i32) {
    %c0_i32 = arith.constant 0 : i32
    %c0_i32_0 = arith.constant 0 : i32
    %c0_i32_1 = arith.constant 0 : i32
    return %c0_i32, %c0_i32_0 : i32, i32
  }
  func.func @transform_2(%arg0: i32) -> (i32, i32) {
    %c0_i32 = arith.constant 0 : i32
    %c0_i32_0 = arith.constant 0 : i32
    %c0_i32_1 = arith.constant 0 : i32
    return %c0_i32, %c0_i32_0 : i32, i32
  }
  func.func @transform_3(%arg0: i32) -> (i32, i32) {
    %c0_i32 = arith.constant 0 : i32
    %c0_i32_0 = arith.constant 0 : i32
    return %arg0, %c0_i32 : i32, i32
  }
  func.func @transform_4(%arg0: i32) -> (i32, i32) {
    %c0_i32 = arith.constant 0 : i32
    %c0_i32_0 = arith.constant 0 : i32
    return %arg0, %c0_i32 : i32, i32
  }
}

module attributes {stable_mosaic.version = 11 : i64} {
  func.func @_fused_mm_kernel(%arg0: i32, %arg1: i32, %arg2: i32, %arg3: memref<16x128xf32, #tpu.memory_space<vmem>>, %arg4: memref<128x128xf32, #tpu.memory_space<vmem>>, %arg5: memref<16x128xf32, #tpu.memory_space<vmem>>, %arg6: memref<128x128xf32, #tpu.memory_space<vmem>>, %arg7: memref<1x128xf32, #tpu.memory_space<vmem>>, %arg8: memref<16x128xf32, #tpu.memory_space<vmem>>, %arg9: memref<16x128xf32, #tpu.memory_space<vmem>>, %arg10: memref<16x128xf32, #tpu.memory_space<vmem>>) attributes {dimension_semantics = [#tpu.dimension_semantics<parallel>, #tpu.dimension_semantics<parallel>, #tpu.dimension_semantics<arbitrary>], iteration_bounds = array<i64: 1, 1, 1>, scalar_prefetch = 0 : i64, scratch_operands = 1 : i64, tpu.core_type = #tpu.core_type<tc>, window_params = [{transform_indices = @transform_0, window_bounds = array<i64: 16, 128>}, {transform_indices = @transform_1, window_bounds = array<i64: 128, 128>}, {transform_indices = @transform_2, window_bounds = array<i64: 16, 128>}, {transform_indices = @transform_3, window_bounds = array<i64: 128, 128>}, {transform_indices = @transform_4, window_bounds = array<i64: 1, 128>}, {transform_indices = @transform_5, window_bounds = array<i64: 16, 128>}, {transform_indices = @transform_6, window_bounds = array<i64: 16, 128>}]} {
    %c0_i32 = arith.constant 0 : i32
    %0 = arith.cmpi eq, %arg2, %c0_i32 : i32
    %1 = arith.extui %0 : i1 to i32
    %c0_i32_0 = arith.constant 0 : i32
    %2 = arith.cmpi ne, %1, %c0_i32_0 : i32
    scf.if %2 {
      %cst_15 = arith.constant 0.000000e+00 : f32
      %16 = vector.broadcast %cst_15 : f32 to vector<16x128xf32>
      %c0_16 = arith.constant 0 : index
      %c0_17 = arith.constant 0 : index
      %17 = vector.load %arg10[%c0_16, %c0_17] : memref<16x128xf32, #tpu.memory_space<vmem>>, vector<16x128xf32>
      tpu.vector_store %arg10[%c0_16, %c0_17], %16 {strides = array<i32>} : memref<16x128xf32, #tpu.memory_space<vmem>>, vector<16x128xf32>,
    } else {
    }
    %c0 = arith.constant 0 : index
    %c0_1 = arith.constant 0 : index
    %3 = vector.load %arg3[%c0, %c0_1] : memref<16x128xf32, #tpu.memory_space<vmem>>, vector<16x128xf32>
    %c0_2 = arith.constant 0 : index
    %c0_3 = arith.constant 0 : index
    %4 = vector.load %arg4[%c0_2, %c0_3] : memref<128x128xf32, #tpu.memory_space<vmem>>, vector<128x128xf32>
    %cst = arith.constant dense<0.000000e+00> : vector<16x128xf32>
    %5 = tpu.matmul %3, %4, %cst {dimension_numbers = #tpu.dot_dimension_numbers<[1], [0], [0], [1], [0, 0, 1, 1], [], []>} : vector<16x128xf32>, vector<128x128xf32>, vector<16x128xf32> -> vector<16x128xf32>
    %c0_4 = arith.constant 0 : index
    %c0_5 = arith.constant 0 : index
    %6 = vector.load %arg5[%c0_4, %c0_5] : memref<16x128xf32, #tpu.memory_space<vmem>>, vector<16x128xf32>
    %c0_6 = arith.constant 0 : index
    %c0_7 = arith.constant 0 : index
    %7 = vector.load %arg6[%c0_6, %c0_7] : memref<128x128xf32, #tpu.memory_space<vmem>>, vector<128x128xf32>
    %cst_8 = arith.constant dense<0.000000e+00> : vector<16x128xf32>
    %8 = tpu.matmul %6, %7, %cst_8 {dimension_numbers = #tpu.dot_dimension_numbers<[1], [0], [0], [1], [0, 0, 1, 1], [], []>} : vector<16x128xf32>, vector<128x128xf32>, vector<16x128xf32> -> vector<16x128xf32>
    %9 = arith.addf %5, %8 : vector<16x128xf32>
    %c0_9 = arith.constant 0 : index
    %c0_10 = arith.constant 0 : index
    %10 = vector.load %arg10[%c0_9, %c0_10] : memref<16x128xf32, #tpu.memory_space<vmem>>, vector<16x128xf32>
    %11 = arith.addf %10, %9 : vector<16x128xf32>
    %c0_11 = arith.constant 0 : index
    %c0_12 = arith.constant 0 : index
    %12 = vector.load %arg10[%c0_11, %c0_12] : memref<16x128xf32, #tpu.memory_space<vmem>>, vector<16x128xf32>
    tpu.vector_store %arg10[%c0_11, %c0_12], %11 {strides = array<i32>} : memref<16x128xf32, #tpu.memory_space<vmem>>, vector<16x128xf32>,
    %c0_i32_13 = arith.constant 0 : i32
    %13 = arith.cmpi eq, %arg2, %c0_i32_13 : i32
    %14 = arith.extui %13 : i1 to i32
    %c0_i32_14 = arith.constant 0 : i32
    %15 = arith.cmpi ne, %14, %c0_i32_14 : i32
    scf.if %15 {
      %c0_15 = arith.constant 0 : index
      %c0_16 = arith.constant 0 : index
      %16 = vector.load %arg10[%c0_15, %c0_16] : memref<16x128xf32, #tpu.memory_space<vmem>>, vector<16x128xf32>
      %c0_17 = arith.constant 0 : index
      %c0_18 = arith.constant 0 : index
      %17 = vector.load %arg7[%c0_17, %c0_18] : memref<1x128xf32, #tpu.memory_space<vmem>>, vector<1x128xf32>
      %18 = vector.broadcast %17 : vector<1x128xf32> to vector<16x128xf32>
      %19 = arith.addf %16, %18 : vector<16x128xf32>
      %c0_19 = arith.constant 0 : index
      %c0_20 = arith.constant 0 : index
      %20 = vector.load %arg8[%c0_19, %c0_20] : memref<16x128xf32, #tpu.memory_space<vmem>>, vector<16x128xf32>
      %21 = arith.mulf %19, %20 : vector<16x128xf32>
      %c0_21 = arith.constant 0 : index
      %c0_22 = arith.constant 0 : index
      %22 = vector.load %arg9[%c0_21, %c0_22] : memref<16x128xf32, #tpu.memory_space<vmem>>, vector<16x128xf32>
      tpu.vector_store %arg9[%c0_21, %c0_22], %21 {strides = array<i32>} : memref<16x128xf32, #tpu.memory_space<vmem>>, vector<16x128xf32>,
    } else {
    }
    return
  }
  func.func @transform_0(%arg0: i32, %arg1: i32, %arg2: i32) -> (i32, i32) {
    %c0_i32 = arith.constant 0 : i32
    return %arg0, %arg2 : i32, i32
  }
  func.func @transform_1(%arg0: i32, %arg1: i32, %arg2: i32) -> (i32, i32) {
    %c0_i32 = arith.constant 0 : i32
    return %arg2, %arg1 : i32, i32
  }
  func.func @transform_2(%arg0: i32, %arg1: i32, %arg2: i32) -> (i32, i32) {
    %c0_i32 = arith.constant 0 : i32
    return %arg0, %arg2 : i32, i32
  }
  func.func @transform_3(%arg0: i32, %arg1: i32, %arg2: i32) -> (i32, i32) {
    %c0_i32 = arith.constant 0 : i32
    return %arg2, %arg1 : i32, i32
  }
  func.func @transform_4(%arg0: i32, %arg1: i32, %arg2: i32) -> (i32, i32) {
    %c0_i32 = arith.constant 0 : i32
    %c0_i32_0 = arith.constant 0 : i32
    return %c0_i32, %arg1 : i32, i32
  }
  func.func @transform_5(%arg0: i32, %arg1: i32, %arg2: i32) -> (i32, i32) {
    %c0_i32 = arith.constant 0 : i32
    return %arg0, %arg1 : i32, i32
  }
  func.func @transform_6(%arg0: i32, %arg1: i32, %arg2: i32) -> (i32, i32) {
    %c0_i32 = arith.constant 0 : i32
    return %arg0, %arg1 : i32, i32
  }
}

module attributes {stable_mosaic.version = 11 : i64} {
  func.func @_fused_mm_kernel(%arg0: i32, %arg1: i32, %arg2: i32, %arg3: memref<16x128xf32, #tpu.memory_space<vmem>>, %arg4: memref<128x128xf32, #tpu.memory_space<vmem>>, %arg5: memref<16x128xf32, #tpu.memory_space<vmem>>, %arg6: memref<16x128xf32, #tpu.memory_space<vmem>>) attributes {dimension_semantics = [#tpu.dimension_semantics<parallel>, #tpu.dimension_semantics<parallel>, #tpu.dimension_semantics<arbitrary>], iteration_bounds = array<i64: 1, 1, 1>, scalar_prefetch = 0 : i64, scratch_operands = 1 : i64, tpu.core_type = #tpu.core_type<tc>, window_params = [{transform_indices = @transform_0, window_bounds = array<i64: 16, 128>}, {transform_indices = @transform_1, window_bounds = array<i64: 128, 128>}, {transform_indices = @transform_2, window_bounds = array<i64: 16, 128>}]} {
    %c0_i32 = arith.constant 0 : i32
    %0 = arith.cmpi eq, %arg2, %c0_i32 : i32
    %1 = arith.extui %0 : i1 to i32
    %c0_i32_0 = arith.constant 0 : i32
    %2 = arith.cmpi ne, %1, %c0_i32_0 : i32
    scf.if %2 {
      %cst_10 = arith.constant 0.000000e+00 : f32
      %12 = vector.broadcast %cst_10 : f32 to vector<16x128xf32>
      %c0_11 = arith.constant 0 : index
      %c0_12 = arith.constant 0 : index
      %13 = vector.load %arg6[%c0_11, %c0_12] : memref<16x128xf32, #tpu.memory_space<vmem>>, vector<16x128xf32>
      tpu.vector_store %arg6[%c0_11, %c0_12], %12 {strides = array<i32>} : memref<16x128xf32, #tpu.memory_space<vmem>>, vector<16x128xf32>,
    } else {
    }
    %c0 = arith.constant 0 : index
    %c0_1 = arith.constant 0 : index
    %3 = vector.load %arg3[%c0, %c0_1] : memref<16x128xf32, #tpu.memory_space<vmem>>, vector<16x128xf32>
    %c0_2 = arith.constant 0 : index
    %c0_3 = arith.constant 0 : index
    %4 = vector.load %arg4[%c0_2, %c0_3] : memref<128x128xf32, #tpu.memory_space<vmem>>, vector<128x128xf32>
    %cst = arith.constant dense<0.000000e+00> : vector<16x128xf32>
    %5 = tpu.matmul %3, %4, %cst {dimension_numbers = #tpu.dot_dimension_numbers<[1], [0], [0], [1], [0, 0, 1, 1], [], []>} : vector<16x128xf32>, vector<128x128xf32>, vector<16x128xf32> -> vector<16x128xf32>
    %c0_4 = arith.constant 0 : index
    %c0_5 = arith.constant 0 : index
    %6 = vector.load %arg6[%c0_4, %c0_5] : memref<16x128xf32, #tpu.memory_space<vmem>>, vector<16x128xf32>
    %7 = arith.addf %6, %5 : vector<16x128xf32>
    %c0_6 = arith.constant 0 : index
    %c0_7 = arith.constant 0 : index
    %8 = vector.load %arg6[%c0_6, %c0_7] : memref<16x128xf32, #tpu.memory_space<vmem>>, vector<16x128xf32>
    tpu.vector_store %arg6[%c0_6, %c0_7], %7 {strides = array<i32>} : memref<16x128xf32, #tpu.memory_space<vmem>>, vector<16x128xf32>,
    %c0_i32_8 = arith.constant 0 : i32
    %9 = arith.cmpi eq, %arg2, %c0_i32_8 : i32
    %10 = arith.extui %9 : i1 to i32
    %c0_i32_9 = arith.constant 0 : i32
    %11 = arith.cmpi ne, %10, %c0_i32_9 : i32
    scf.if %11 {
      %c0_10 = arith.constant 0 : index
      %c0_11 = arith.constant 0 : index
      %12 = vector.load %arg6[%c0_10, %c0_11] : memref<16x128xf32, #tpu.memory_space<vmem>>, vector<16x128xf32>
      %c0_12 = arith.constant 0 : index
      %c0_13 = arith.constant 0 : index
      %13 = vector.load %arg5[%c0_12, %c0_13] : memref<16x128xf32, #tpu.memory_space<vmem>>, vector<16x128xf32>
      tpu.vector_store %arg5[%c0_12, %c0_13], %12 {strides = array<i32>} : memref<16x128xf32, #tpu.memory_space<vmem>>, vector<16x128xf32>,
    } else {
    }
    return
  }
  func.func @transform_0(%arg0: i32, %arg1: i32, %arg2: i32) -> (i32, i32) {
    %c0_i32 = arith.constant 0 : i32
    return %arg0, %arg2 : i32, i32
  }
  func.func @transform_1(%arg0: i32, %arg1: i32, %arg2: i32) -> (i32, i32) {
    %c0_i32 = arith.constant 0 : i32
    return %arg2, %arg1 : i32, i32
  }
  func.func @transform_2(%arg0: i32, %arg1: i32, %arg2: i32) -> (i32, i32) {
    %c0_i32 = arith.constant 0 : i32
    return %arg0, %arg1 : i32, i32
  }
}

module attributes {stable_mosaic.version = 11 : i64} {
  func.func @_fused_mm_kernel(%arg0: i32, %arg1: i32, %arg2: i32, %arg3: memref<24x128xf32, #tpu.memory_space<vmem>>, %arg4: memref<128x128xf32, #tpu.memory_space<vmem>>, %arg5: memref<24x128xf32, #tpu.memory_space<vmem>>, %arg6: memref<128x128xf32, #tpu.memory_space<vmem>>, %arg7: memref<1x128xf32, #tpu.memory_space<vmem>>, %arg8: memref<24x128xf32, #tpu.memory_space<vmem>>, %arg9: memref<24x128xf32, #tpu.memory_space<vmem>>) attributes {dimension_semantics = [#tpu.dimension_semantics<parallel>, #tpu.dimension_semantics<parallel>, #tpu.dimension_semantics<arbitrary>], iteration_bounds = array<i64: 1, 1, 1>, scalar_prefetch = 0 : i64, scratch_operands = 1 : i64, tpu.core_type = #tpu.core_type<tc>, window_params = [{transform_indices = @transform_0, window_bounds = array<i64: 24, 128>}, {transform_indices = @transform_1, window_bounds = array<i64: 128, 128>}, {transform_indices = @transform_2, window_bounds = array<i64: 24, 128>}, {transform_indices = @transform_3, window_bounds = array<i64: 128, 128>}, {transform_indices = @transform_4, window_bounds = array<i64: 1, 128>}, {transform_indices = @transform_5, window_bounds = array<i64: 24, 128>}]} {
    %c0_i32 = arith.constant 0 : i32
    %0 = arith.cmpi eq, %arg2, %c0_i32 : i32
    %1 = arith.extui %0 : i1 to i32
    %c0_i32_0 = arith.constant 0 : i32
    %2 = arith.cmpi ne, %1, %c0_i32_0 : i32
    scf.if %2 {
      %cst_15 = arith.constant 0.000000e+00 : f32
      %16 = vector.broadcast %cst_15 : f32 to vector<24x128xf32>
      %c0_16 = arith.constant 0 : index
      %c0_17 = arith.constant 0 : index
      %17 = vector.load %arg9[%c0_16, %c0_17] : memref<24x128xf32, #tpu.memory_space<vmem>>, vector<24x128xf32>
      tpu.vector_store %arg9[%c0_16, %c0_17], %16 {strides = array<i32>} : memref<24x128xf32, #tpu.memory_space<vmem>>, vector<24x128xf32>,
    } else {
    }
    %c0 = arith.constant 0 : index
    %c0_1 = arith.constant 0 : index
    %3 = vector.load %arg3[%c0, %c0_1] : memref<24x128xf32, #tpu.memory_space<vmem>>, vector<24x128xf32>
    %c0_2 = arith.constant 0 : index
    %c0_3 = arith.constant 0 : index
    %4 = vector.load %arg4[%c0_2, %c0_3] : memref<128x128xf32, #tpu.memory_space<vmem>>, vector<128x128xf32>
    %cst = arith.constant dense<0.000000e+00> : vector<24x128xf32>
    %5 = tpu.matmul %3, %4, %cst {dimension_numbers = #tpu.dot_dimension_numbers<[1], [0], [0], [1], [0, 0, 1, 1], [], []>} : vector<24x128xf32>, vector<128x128xf32>, vector<24x128xf32> -> vector<24x128xf32>
    %c0_4 = arith.constant 0 : index
    %c0_5 = arith.constant 0 : index
    %6 = vector.load %arg5[%c0_4, %c0_5] : memref<24x128xf32, #tpu.memory_space<vmem>>, vector<24x128xf32>
    %c0_6 = arith.constant 0 : index
    %c0_7 = arith.constant 0 : index
    %7 = vector.load %arg6[%c0_6, %c0_7] : memref<128x128xf32, #tpu.memory_space<vmem>>, vector<128x128xf32>
    %cst_8 = arith.constant dense<0.000000e+00> : vector<24x128xf32>
    %8 = tpu.matmul %6, %7, %cst_8 {dimension_numbers = #tpu.dot_dimension_numbers<[1], [0], [0], [1], [0, 0, 1, 1], [], []>} : vector<24x128xf32>, vector<128x128xf32>, vector<24x128xf32> -> vector<24x128xf32>
    %9 = arith.addf %5, %8 : vector<24x128xf32>
    %c0_9 = arith.constant 0 : index
    %c0_10 = arith.constant 0 : index
    %10 = vector.load %arg9[%c0_9, %c0_10] : memref<24x128xf32, #tpu.memory_space<vmem>>, vector<24x128xf32>
    %11 = arith.addf %10, %9 : vector<24x128xf32>
    %c0_11 = arith.constant 0 : index
    %c0_12 = arith.constant 0 : index
    %12 = vector.load %arg9[%c0_11, %c0_12] : memref<24x128xf32, #tpu.memory_space<vmem>>, vector<24x128xf32>
    tpu.vector_store %arg9[%c0_11, %c0_12], %11 {strides = array<i32>} : memref<24x128xf32, #tpu.memory_space<vmem>>, vector<24x128xf32>,
    %c0_i32_13 = arith.constant 0 : i32
    %13 = arith.cmpi eq, %arg2, %c0_i32_13 : i32
    %14 = arith.extui %13 : i1 to i32
    %c0_i32_14 = arith.constant 0 : i32
    %15 = arith.cmpi ne, %14, %c0_i32_14 : i32
    scf.if %15 {
      %c0_15 = arith.constant 0 : index
      %c0_16 = arith.constant 0 : index
      %16 = vector.load %arg9[%c0_15, %c0_16] : memref<24x128xf32, #tpu.memory_space<vmem>>, vector<24x128xf32>
      %c0_17 = arith.constant 0 : index
      %c0_18 = arith.constant 0 : index
      %17 = vector.load %arg7[%c0_17, %c0_18] : memref<1x128xf32, #tpu.memory_space<vmem>>, vector<1x128xf32>
      %18 = vector.broadcast %17 : vector<1x128xf32> to vector<24x128xf32>
      %19 = arith.addf %16, %18 : vector<24x128xf32>
      %cst_19 = arith.constant 0.000000e+00 : f32
      %20 = vector.broadcast %cst_19 : f32 to vector<24x128xf32>
      %21 = arith.maximumf %19, %20 : vector<24x128xf32>
      %c0_20 = arith.constant 0 : index
      %c0_21 = arith.constant 0 : index
      %22 = vector.load %arg8[%c0_20, %c0_21] : memref<24x128xf32, #tpu.memory_space<vmem>>, vector<24x128xf32>
      tpu.vector_store %arg8[%c0_20, %c0_21], %21 {strides = array<i32>} : memref<24x128xf32, #tpu.memory_space<vmem>>, vector<24x128xf32>,
    } else {
    }
    return
  }
  func.func @transform_0(%arg0: i32, %arg1: i32, %arg2: i32) -> (i32, i32) {
    %c0_i32 = arith.constant 0 : i32
    return %arg0, %arg2 : i32, i32
  }
  func.func @transform_1(%arg0: i32, %arg1: i32, %arg2: i32) -> (i32, i32) {
    %c0_i32 = arith.constant 0 : i32
    return %arg2, %arg1 : i32, i32
  }
  func.func @transform_2(%arg0: i32, %arg1: i32, %arg2: i32) -> (i32, i32) {
    %c0_i32 = arith.constant 0 : i32
    return %arg0, %arg2 : i32, i32
  }
  func.func @transform_3(%arg0: i32, %arg1: i32, %arg2: i32) -> (i32, i32) {
    %c0_i32 = arith.constant 0 : i32
    return %arg2, %arg1 : i32, i32
  }
  func.func @transform_4(%arg0: i32, %arg1: i32, %arg2: i32) -> (i32, i32) {
    %c0_i32 = arith.constant 0 : i32
    %c0_i32_0 = arith.constant 0 : i32
    return %c0_i32, %arg1 : i32, i32
  }
  func.func @transform_5(%arg0: i32, %arg1: i32, %arg2: i32) -> (i32, i32) {
    %c0_i32 = arith.constant 0 : i32
    return %arg0, %arg1 : i32, i32
  }
}

module attributes {stable_mosaic.version = 11 : i64} {
  func.func @_edge_mask_kernel(%arg0: i32, %arg1: memref<24x128xf32, #tpu.memory_space<vmem>>, %arg2: memref<1x128xf32, #tpu.memory_space<vmem>>, %arg3: memref<1x1xf32, #tpu.memory_space<vmem>>, %arg4: memref<24x128xf32, #tpu.memory_space<vmem>>) attributes {dimension_semantics = [#tpu.dimension_semantics<arbitrary>], iteration_bounds = array<i64: 1>, scalar_prefetch = 0 : i64, scratch_operands = 0 : i64, tpu.core_type = #tpu.core_type<tc>, window_params = [{pipeline_mode = #tpu.pipeline_mode<synchronous>, transform_indices = @transform_0, window_bounds = array<i64: 24, 128>}, {pipeline_mode = #tpu.pipeline_mode<synchronous>, transform_indices = @transform_1, window_bounds = array<i64: 1, 128>}, {pipeline_mode = #tpu.pipeline_mode<synchronous>, transform_indices = @transform_2, window_bounds = array<i64: 1, 1>}, {pipeline_mode = #tpu.pipeline_mode<synchronous>, transform_indices = @transform_3, window_bounds = array<i64: 24, 128>}]} {
    %c0 = arith.constant 0 : index
    %c0_0 = arith.constant 0 : index
    %0 = vector.load %arg1[%c0, %c0_0] : memref<24x128xf32, #tpu.memory_space<vmem>>, vector<24x128xf32>
    %c0_1 = arith.constant 0 : index
    %c0_2 = arith.constant 0 : index
    %1 = vector.load %arg2[%c0_1, %c0_2] : memref<1x128xf32, #tpu.memory_space<vmem>>, vector<1x128xf32>
    %2 = vector.broadcast %1 : vector<1x128xf32> to vector<24x128xf32>
    %3 = arith.mulf %0, %2 : vector<24x128xf32>
    %cst = arith.constant dense<0.000000e+00> : vector<24xf32>
    %4 = vector.multi_reduction <add>, %3, %cst [1] : vector<24x128xf32> to vector<24xf32>
    %5 = vector.shape_cast %4 : vector<24xf32> to vector<24x1xf32>
    %c0_3 = arith.constant 0 : index
    %c0_4 = arith.constant 0 : index
    %6 = vector.load %arg3[%c0_3, %c0_4] : memref<1x1xf32, #tpu.memory_space<vmem>>, vector<1x1xf32>
    %7 = vector.broadcast %6 : vector<1x1xf32> to vector<24x1xf32>
    %8 = arith.addf %5, %7 : vector<24x1xf32>
    %9 = tpu.iota {dimensions = array<i32: 0>} : vector<24x1xi32>
    %c24_i32 = arith.constant 24 : i32
    %10 = vector.broadcast %c24_i32 : i32 to vector<24x1xi32>
    %11 = arith.cmpi slt, %9, %10 : vector<24x1xi32>
    %cst_5 = arith.constant 0x7F800000 : f32
    %12 = vector.broadcast %cst_5 : f32 to vector<24x1xf32>
    %13 = arith.select %11, %8, %12 : vector<24x1xi1>, vector<24x1xf32>
    %14 = vector.shape_cast %13 : vector<24x1xf32> to vector<1x24x1xf32>
    %cst_6 = arith.constant dense<0x7F800000> : vector<1xf32>
    %15 = vector.multi_reduction <minimumf>, %14, %cst_6 [1, 2] : vector<1x24x1xf32> to vector<1xf32>
    %16 = vector.shape_cast %15 : vector<1xf32> to vector<1x1x1xf32>
    %17 = vector.extract %16[0, 0, 0] : f32 from vector<1x1x1xf32>
    %cst_7 = arith.constant 0xFF800000 : f32
    %18 = vector.broadcast %cst_7 : f32 to vector<24x1xf32>
    %19 = arith.select %11, %8, %18 : vector<24x1xi1>, vector<24x1xf32>
    %20 = vector.shape_cast %19 : vector<24x1xf32> to vector<1x24x1xf32>
    %cst_8 = arith.constant dense<0xFF800000> : vector<1xf32>
    %21 = vector.multi_reduction <maximumf>, %20, %cst_8 [1, 2] : vector<1x24x1xf32> to vector<1xf32>
    %22 = vector.shape_cast %21 : vector<1xf32> to vector<1x1x1xf32>
    %23 = vector.extract %22[0, 0, 0] : f32 from vector<1x1x1xf32>
    %24 = arith.subf %23, %17 : f32
    %cst_9 = arith.constant 0.000000e+00 : f32
    %25 = arith.cmpf oeq, %24, %cst_9 : f32
    %cst_10 = arith.constant 1.000000e+00 : f32
    %26 = arith.select %25, %cst_10, %24 : f32
    %27 = vector.broadcast %17 : f32 to vector<24x1xf32>
    %28 = arith.subf %8, %27 : vector<24x1xf32>
    %29 = vector.broadcast %26 : f32 to vector<24x1xf32>
    %30 = arith.divf %28, %29 : vector<24x1xf32>
    %cst_11 = arith.constant 0.000000e+00 : f32
    %31 = vector.broadcast %cst_11 : f32 to vector<24x1xf32>
    %32 = arith.select %11, %30, %31 : vector<24x1xi1>, vector<24x1xf32>
    %33 = vector.shape_cast %32 : vector<24x1xf32> to vector<24x1xf32>
    %34 = vector.broadcast %33 : vector<24x1xf32> to vector<24x128xf32>
    %c0_12 = arith.constant 0 : index
    %c0_13 = arith.constant 0 : index
    %35 = vector.load %arg4[%c0_12, %c0_13] : memref<24x128xf32, #tpu.memory_space<vmem>>, vector<24x128xf32>
    tpu.vector_store %arg4[%c0_12, %c0_13], %34 {strides = array<i32>} : memref<24x128xf32, #tpu.memory_space<vmem>>, vector<24x128xf32>,
    return
  }
  func.func @transform_0(%arg0: i32) -> (i32, i32) {
    %c0_i32 = arith.constant 0 : i32
    %c0_i32_0 = arith.constant 0 : i32
    %c0_i32_1 = arith.constant 0 : i32
    return %c0_i32, %c0_i32_0 : i32, i32
  }
  func.func @transform_1(%arg0: i32) -> (i32, i32) {
    %c0_i32 = arith.constant 0 : i32
    %c0_i32_0 = arith.constant 0 : i32
    %c0_i32_1 = arith.constant 0 : i32
    return %c0_i32, %c0_i32_0 : i32, i32
  }
  func.func @transform_2(%arg0: i32) -> (i32, i32) {
    %c0_i32 = arith.constant 0 : i32
    %c0_i32_0 = arith.constant 0 : i32
    %c0_i32_1 = arith.constant 0 : i32
    return %c0_i32, %c0_i32_0 : i32, i32
  }
  func.func @transform_3(%arg0: i32) -> (i32, i32) {
    %c0_i32 = arith.constant 0 : i32
    %c0_i32_0 = arith.constant 0 : i32
    %c0_i32_1 = arith.constant 0 : i32
    return %c0_i32, %c0_i32_0 : i32, i32
  }
}

module attributes {stable_mosaic.version = 11 : i64} {
  func.func @_fused_mm_kernel(%arg0: i32, %arg1: i32, %arg2: i32, %arg3: memref<16x128xbf16, #tpu.memory_space<vmem>>, %arg4: memref<128x128xbf16, #tpu.memory_space<vmem>>, %arg5: memref<1x128xf32, #tpu.memory_space<vmem>>, %arg6: memref<16x128xf32, #tpu.memory_space<vmem>>, %arg7: memref<16x128xf32, #tpu.memory_space<vmem>>) attributes {dimension_semantics = [#tpu.dimension_semantics<parallel>, #tpu.dimension_semantics<parallel>, #tpu.dimension_semantics<arbitrary>], iteration_bounds = array<i64: 1, 1, 1>, scalar_prefetch = 0 : i64, scratch_operands = 1 : i64, tpu.core_type = #tpu.core_type<tc>, window_params = [{transform_indices = @transform_0, window_bounds = array<i64: 16, 128>}, {transform_indices = @transform_1, window_bounds = array<i64: 128, 128>}, {transform_indices = @transform_2, window_bounds = array<i64: 1, 128>}, {transform_indices = @transform_3, window_bounds = array<i64: 16, 128>}]} {
    %c0_i32 = arith.constant 0 : i32
    %0 = arith.cmpi eq, %arg2, %c0_i32 : i32
    %1 = arith.extui %0 : i1 to i32
    %c0_i32_0 = arith.constant 0 : i32
    %2 = arith.cmpi ne, %1, %c0_i32_0 : i32
    scf.if %2 {
      %cst_10 = arith.constant 0.000000e+00 : f32
      %12 = vector.broadcast %cst_10 : f32 to vector<16x128xf32>
      %c0_11 = arith.constant 0 : index
      %c0_12 = arith.constant 0 : index
      %13 = vector.load %arg7[%c0_11, %c0_12] : memref<16x128xf32, #tpu.memory_space<vmem>>, vector<16x128xf32>
      tpu.vector_store %arg7[%c0_11, %c0_12], %12 {strides = array<i32>} : memref<16x128xf32, #tpu.memory_space<vmem>>, vector<16x128xf32>,
    } else {
    }
    %c0 = arith.constant 0 : index
    %c0_1 = arith.constant 0 : index
    %3 = vector.load %arg3[%c0, %c0_1] : memref<16x128xbf16, #tpu.memory_space<vmem>>, vector<16x128xbf16>
    %c0_2 = arith.constant 0 : index
    %c0_3 = arith.constant 0 : index
    %4 = vector.load %arg4[%c0_2, %c0_3] : memref<128x128xbf16, #tpu.memory_space<vmem>>, vector<128x128xbf16>
    %cst = arith.constant dense<0.000000e+00> : vector<16x128xf32>
    %5 = tpu.matmul %3, %4, %cst {dimension_numbers = #tpu.dot_dimension_numbers<[1], [0], [0], [1], [0, 0, 1, 1], [], []>} : vector<16x128xbf16>, vector<128x128xbf16>, vector<16x128xf32> -> vector<16x128xf32>
    %c0_4 = arith.constant 0 : index
    %c0_5 = arith.constant 0 : index
    %6 = vector.load %arg7[%c0_4, %c0_5] : memref<16x128xf32, #tpu.memory_space<vmem>>, vector<16x128xf32>
    %7 = arith.addf %6, %5 : vector<16x128xf32>
    %c0_6 = arith.constant 0 : index
    %c0_7 = arith.constant 0 : index
    %8 = vector.load %arg7[%c0_6, %c0_7] : memref<16x128xf32, #tpu.memory_space<vmem>>, vector<16x128xf32>
    tpu.vector_store %arg7[%c0_6, %c0_7], %7 {strides = array<i32>} : memref<16x128xf32, #tpu.memory_space<vmem>>, vector<16x128xf32>,
    %c0_i32_8 = arith.constant 0 : i32
    %9 = arith.cmpi eq, %arg2, %c0_i32_8 : i32
    %10 = arith.extui %9 : i1 to i32
    %c0_i32_9 = arith.constant 0 : i32
    %11 = arith.cmpi ne, %10, %c0_i32_9 : i32
    scf.if %11 {
      %c0_10 = arith.constant 0 : index
      %c0_11 = arith.constant 0 : index
      %12 = vector.load %arg7[%c0_10, %c0_11] : memref<16x128xf32, #tpu.memory_space<vmem>>, vector<16x128xf32>
      %c0_12 = arith.constant 0 : index
      %c0_13 = arith.constant 0 : index
      %13 = vector.load %arg5[%c0_12, %c0_13] : memref<1x128xf32, #tpu.memory_space<vmem>>, vector<1x128xf32>
      %14 = vector.broadcast %13 : vector<1x128xf32> to vector<16x128xf32>
      %15 = arith.addf %12, %14 : vector<16x128xf32>
      %cst_14 = arith.constant 0.000000e+00 : f32
      %16 = vector.broadcast %cst_14 : f32 to vector<16x128xf32>
      %17 = arith.maximumf %15, %16 : vector<16x128xf32>
      %c0_15 = arith.constant 0 : index
      %c0_16 = arith.constant 0 : index
      %18 = vector.load %arg6[%c0_15, %c0_16] : memref<16x128xf32, #tpu.memory_space<vmem>>, vector<16x128xf32>
      tpu.vector_store %arg6[%c0_15, %c0_16], %17 {strides = array<i32>} : memref<16x128xf32, #tpu.memory_space<vmem>>, vector<16x128xf32>,
    } else {
    }
    return
  }
  func.func @transform_0(%arg0: i32, %arg1: i32, %arg2: i32) -> (i32, i32) {
    %c0_i32 = arith.constant 0 : i32
    return %arg0, %arg2 : i32, i32
  }
  func.func @transform_1(%arg0: i32, %arg1: i32, %arg2: i32) -> (i32, i32) {
    %c0_i32 = arith.constant 0 : i32
    return %arg2, %arg1 : i32, i32
  }
  func.func @transform_2(%arg0: i32, %arg1: i32, %arg2: i32) -> (i32, i32) {
    %c0_i32 = arith.constant 0 : i32
    %c0_i32_0 = arith.constant 0 : i32
    return %c0_i32, %arg1 : i32, i32
  }
  func.func @transform_3(%arg0: i32, %arg1: i32, %arg2: i32) -> (i32, i32) {
    %c0_i32 = arith.constant 0 : i32
    return %arg0, %arg1 : i32, i32
  }
}

module attributes {stable_mosaic.version = 11 : i64} {
  func.func @_fused_mm_kernel(%arg0: i32, %arg1: i32, %arg2: i32, %arg3: memref<16x128xbf16, #tpu.memory_space<vmem>>, %arg4: memref<128x128xbf16, #tpu.memory_space<vmem>>, %arg5: memref<1x128xf32, #tpu.memory_space<vmem>>, %arg6: memref<16x128xf32, #tpu.memory_space<vmem>>, %arg7: memref<16x128xf32, #tpu.memory_space<vmem>>) attributes {dimension_semantics = [#tpu.dimension_semantics<parallel>, #tpu.dimension_semantics<parallel>, #tpu.dimension_semantics<arbitrary>], iteration_bounds = array<i64: 1, 1, 1>, scalar_prefetch = 0 : i64, scratch_operands = 1 : i64, tpu.core_type = #tpu.core_type<tc>, window_params = [{transform_indices = @transform_0, window_bounds = array<i64: 16, 128>}, {transform_indices = @transform_1, window_bounds = array<i64: 128, 128>}, {transform_indices = @transform_2, window_bounds = array<i64: 1, 128>}, {transform_indices = @transform_3, window_bounds = array<i64: 16, 128>}]} {
    %c0_i32 = arith.constant 0 : i32
    %0 = arith.cmpi eq, %arg2, %c0_i32 : i32
    %1 = arith.extui %0 : i1 to i32
    %c0_i32_0 = arith.constant 0 : i32
    %2 = arith.cmpi ne, %1, %c0_i32_0 : i32
    scf.if %2 {
      %cst_10 = arith.constant 0.000000e+00 : f32
      %12 = vector.broadcast %cst_10 : f32 to vector<16x128xf32>
      %c0_11 = arith.constant 0 : index
      %c0_12 = arith.constant 0 : index
      %13 = vector.load %arg7[%c0_11, %c0_12] : memref<16x128xf32, #tpu.memory_space<vmem>>, vector<16x128xf32>
      tpu.vector_store %arg7[%c0_11, %c0_12], %12 {strides = array<i32>} : memref<16x128xf32, #tpu.memory_space<vmem>>, vector<16x128xf32>,
    } else {
    }
    %c0 = arith.constant 0 : index
    %c0_1 = arith.constant 0 : index
    %3 = vector.load %arg3[%c0, %c0_1] : memref<16x128xbf16, #tpu.memory_space<vmem>>, vector<16x128xbf16>
    %c0_2 = arith.constant 0 : index
    %c0_3 = arith.constant 0 : index
    %4 = vector.load %arg4[%c0_2, %c0_3] : memref<128x128xbf16, #tpu.memory_space<vmem>>, vector<128x128xbf16>
    %cst = arith.constant dense<0.000000e+00> : vector<16x128xf32>
    %5 = tpu.matmul %3, %4, %cst {dimension_numbers = #tpu.dot_dimension_numbers<[1], [0], [0], [1], [0, 0, 1, 1], [], []>} : vector<16x128xbf16>, vector<128x128xbf16>, vector<16x128xf32> -> vector<16x128xf32>
    %c0_4 = arith.constant 0 : index
    %c0_5 = arith.constant 0 : index
    %6 = vector.load %arg7[%c0_4, %c0_5] : memref<16x128xf32, #tpu.memory_space<vmem>>, vector<16x128xf32>
    %7 = arith.addf %6, %5 : vector<16x128xf32>
    %c0_6 = arith.constant 0 : index
    %c0_7 = arith.constant 0 : index
    %8 = vector.load %arg7[%c0_6, %c0_7] : memref<16x128xf32, #tpu.memory_space<vmem>>, vector<16x128xf32>
    tpu.vector_store %arg7[%c0_6, %c0_7], %7 {strides = array<i32>} : memref<16x128xf32, #tpu.memory_space<vmem>>, vector<16x128xf32>,
    %c0_i32_8 = arith.constant 0 : i32
    %9 = arith.cmpi eq, %arg2, %c0_i32_8 : i32
    %10 = arith.extui %9 : i1 to i32
    %c0_i32_9 = arith.constant 0 : i32
    %11 = arith.cmpi ne, %10, %c0_i32_9 : i32
    scf.if %11 {
      %c0_10 = arith.constant 0 : index
      %c0_11 = arith.constant 0 : index
      %12 = vector.load %arg7[%c0_10, %c0_11] : memref<16x128xf32, #tpu.memory_space<vmem>>, vector<16x128xf32>
      %c0_12 = arith.constant 0 : index
      %c0_13 = arith.constant 0 : index
      %13 = vector.load %arg5[%c0_12, %c0_13] : memref<1x128xf32, #tpu.memory_space<vmem>>, vector<1x128xf32>
      %14 = vector.broadcast %13 : vector<1x128xf32> to vector<16x128xf32>
      %15 = arith.addf %12, %14 : vector<16x128xf32>
      %c0_14 = arith.constant 0 : index
      %c0_15 = arith.constant 0 : index
      %16 = vector.load %arg6[%c0_14, %c0_15] : memref<16x128xf32, #tpu.memory_space<vmem>>, vector<16x128xf32>
      tpu.vector_store %arg6[%c0_14, %c0_15], %15 {strides = array<i32>} : memref<16x128xf32, #tpu.memory_space<vmem>>, vector<16x128xf32>,
    } else {
    }
    return
  }
  func.func @transform_0(%arg0: i32, %arg1: i32, %arg2: i32) -> (i32, i32) {
    %c0_i32 = arith.constant 0 : i32
    return %arg0, %arg2 : i32, i32
  }
  func.func @transform_1(%arg0: i32, %arg1: i32, %arg2: i32) -> (i32, i32) {
    %c0_i32 = arith.constant 0 : i32
    return %arg2, %arg1 : i32, i32
  }
  func.func @transform_2(%arg0: i32, %arg1: i32, %arg2: i32) -> (i32, i32) {
    %c0_i32 = arith.constant 0 : i32
    %c0_i32_0 = arith.constant 0 : i32
    return %c0_i32, %arg1 : i32, i32
  }
  func.func @transform_3(%arg0: i32, %arg1: i32, %arg2: i32) -> (i32, i32) {
    %c0_i32 = arith.constant 0 : i32
    return %arg0, %arg1 : i32, i32
  }
}

module attributes {stable_mosaic.version = 11 : i64} {
  func.func @_head_kernel(%arg0: i32, %arg1: i32, %arg2: memref<16x128xf32, #tpu.memory_space<vmem>>, %arg3: memref<128x128xf32, #tpu.memory_space<vmem>>, %arg4: memref<1x128xf32, #tpu.memory_space<vmem>>, %arg5: memref<16x128xf32, #tpu.memory_space<vmem>>, %arg6: memref<16x128xf32, #tpu.memory_space<vmem>>) attributes {dimension_semantics = [#tpu.dimension_semantics<parallel>, #tpu.dimension_semantics<arbitrary>], iteration_bounds = array<i64: 1, 1>, scalar_prefetch = 0 : i64, scratch_operands = 1 : i64, tpu.core_type = #tpu.core_type<tc>, window_params = [{transform_indices = @transform_0, window_bounds = array<i64: 16, 128>}, {transform_indices = @transform_1, window_bounds = array<i64: 128, 128>}, {pipeline_mode = #tpu.pipeline_mode<synchronous>, transform_indices = @transform_2, window_bounds = array<i64: 1, 128>}, {transform_indices = @transform_3, window_bounds = array<i64: 16, 128>}]} {
    %c0_i32 = arith.constant 0 : i32
    %0 = arith.cmpi eq, %arg1, %c0_i32 : i32
    %1 = arith.extui %0 : i1 to i32
    %c0_i32_0 = arith.constant 0 : i32
    %2 = arith.cmpi ne, %1, %c0_i32_0 : i32
    scf.if %2 {
      %cst_10 = arith.constant 0.000000e+00 : f32
      %12 = vector.broadcast %cst_10 : f32 to vector<16x128xf32>
      %c0_11 = arith.constant 0 : index
      %c0_12 = arith.constant 0 : index
      %13 = vector.load %arg6[%c0_11, %c0_12] : memref<16x128xf32, #tpu.memory_space<vmem>>, vector<16x128xf32>
      tpu.vector_store %arg6[%c0_11, %c0_12], %12 {strides = array<i32>} : memref<16x128xf32, #tpu.memory_space<vmem>>, vector<16x128xf32>,
    } else {
    }
    %c0 = arith.constant 0 : index
    %c0_1 = arith.constant 0 : index
    %3 = vector.load %arg6[%c0, %c0_1] : memref<16x128xf32, #tpu.memory_space<vmem>>, vector<16x128xf32>
    %c0_2 = arith.constant 0 : index
    %c0_3 = arith.constant 0 : index
    %4 = vector.load %arg2[%c0_2, %c0_3] : memref<16x128xf32, #tpu.memory_space<vmem>>, vector<16x128xf32>
    %c0_4 = arith.constant 0 : index
    %c0_5 = arith.constant 0 : index
    %5 = vector.load %arg3[%c0_4, %c0_5] : memref<128x128xf32, #tpu.memory_space<vmem>>, vector<128x128xf32>
    %cst = arith.constant dense<0.000000e+00> : vector<16x128xf32>
    %6 = tpu.matmul %4, %5, %cst {dimension_numbers = #tpu.dot_dimension_numbers<[1], [0], [0], [1], [0, 0, 1, 1], [], []>} : vector<16x128xf32>, vector<128x128xf32>, vector<16x128xf32> -> vector<16x128xf32>
    %7 = arith.addf %3, %6 : vector<16x128xf32>
    %c0_6 = arith.constant 0 : index
    %c0_7 = arith.constant 0 : index
    %8 = vector.load %arg6[%c0_6, %c0_7] : memref<16x128xf32, #tpu.memory_space<vmem>>, vector<16x128xf32>
    tpu.vector_store %arg6[%c0_6, %c0_7], %7 {strides = array<i32>} : memref<16x128xf32, #tpu.memory_space<vmem>>, vector<16x128xf32>,
    %c0_i32_8 = arith.constant 0 : i32
    %9 = arith.cmpi eq, %arg1, %c0_i32_8 : i32
    %10 = arith.extui %9 : i1 to i32
    %c0_i32_9 = arith.constant 0 : i32
    %11 = arith.cmpi ne, %10, %c0_i32_9 : i32
    scf.if %11 {
      %c0_10 = arith.constant 0 : index
      %c0_11 = arith.constant 0 : index
      %12 = vector.load %arg6[%c0_10, %c0_11] : memref<16x128xf32, #tpu.memory_space<vmem>>, vector<16x128xf32>
      %c0_12 = arith.constant 0 : index
      %c0_13 = arith.constant 0 : index
      %13 = vector.load %arg4[%c0_12, %c0_13] : memref<1x128xf32, #tpu.memory_space<vmem>>, vector<1x128xf32>
      %14 = vector.broadcast %13 : vector<1x128xf32> to vector<16x128xf32>
      %15 = arith.addf %12, %14 : vector<16x128xf32>
      %cst_14 = arith.constant -1.000000e+10 : f32
      %cst_15 = arith.constant 1.000000e+10 : f32
      %16 = vector.broadcast %cst_14 : f32 to vector<16x128xf32>
      %17 = arith.maximumf %16, %15 : vector<16x128xf32>
      %18 = vector.broadcast %cst_15 : f32 to vector<16x128xf32>
      %19 = arith.minimumf %18, %17 : vector<16x128xf32>
      %20 = tpu.iota {dimensions = array<i32: 1>} : vector<16x128xi32>
      %c4_i32 = arith.constant 4 : i32
      %21 = vector.broadcast %c4_i32 : i32 to vector<16x128xi32>
      %22 = arith.cmpi slt, %20, %21 : vector<16x128xi32>
      %cst_16 = arith.constant 0xFF800000 : f32
      %23 = vector.broadcast %cst_16 : f32 to vector<16x128xf32>
      %24 = arith.select %22, %19, %23 : vector<16x128xi1>, vector<16x128xf32>
      %cst_17 = arith.constant dense<0xFF800000> : vector<16xf32>
      %25 = vector.multi_reduction <maximumf>, %24, %cst_17 [1] : vector<16x128xf32> to vector<16xf32>
      %26 = vector.shape_cast %25 : vector<16xf32> to vector<16x1xf32>
      %27 = vector.broadcast %26 : vector<16x1xf32> to vector<16x128xf32>
      %28 = arith.subf %19, %27 : vector<16x128xf32>
      %29 = math.exp %28 : vector<16x128xf32>
      %cst_18 = arith.constant 0.000000e+00 : f32
      %30 = vector.broadcast %cst_18 : f32 to vector<16x128xf32>
      %31 = arith.select %22, %29, %30 : vector<16x128xi1>, vector<16x128xf32>
      %cst_19 = arith.constant dense<0.000000e+00> : vector<16xf32>
      %32 = vector.multi_reduction <add>, %31, %cst_19 [1] : vector<16x128xf32> to vector<16xf32>
      %33 = vector.shape_cast %32 : vector<16xf32> to vector<16x1xf32>
      %34 = math.log %33 : vector<16x1xf32>
      %35 = vector.broadcast %26 : vector<16x1xf32> to vector<16x128xf32>
      %36 = arith.subf %19, %35 : vector<16x128xf32>
      %37 = vector.broadcast %34 : vector<16x1xf32> to vector<16x128xf32>
      %38 = arith.subf %36, %37 : vector<16x128xf32>
      %cst_20 = arith.constant 0.000000e+00 : f32
      %39 = vector.broadcast %cst_20 : f32 to vector<16x128xf32>
      %40 = arith.select %22, %38, %39 : vector<16x128xi1>, vector<16x128xf32>
      %c0_21 = arith.constant 0 : index
      %c0_22 = arith.constant 0 : index
      %41 = vector.load %arg5[%c0_21, %c0_22] : memref<16x128xf32, #tpu.memory_space<vmem>>, vector<16x128xf32>
      tpu.vector_store %arg5[%c0_21, %c0_22], %40 {strides = array<i32>} : memref<16x128xf32, #tpu.memory_space<vmem>>, vector<16x128xf32>,
    } else {
    }
    return
  }
  func.func @transform_0(%arg0: i32, %arg1: i32) -> (i32, i32) {
    %c0_i32 = arith.constant 0 : i32
    return %arg0, %arg1 : i32, i32
  }
  func.func @transform_1(%arg0: i32, %arg1: i32) -> (i32, i32) {
    %c0_i32 = arith.constant 0 : i32
    %c0_i32_0 = arith.constant 0 : i32
    return %arg1, %c0_i32 : i32, i32
  }
  func.func @transform_2(%arg0: i32, %arg1: i32) -> (i32, i32) {
    %c0_i32 = arith.constant 0 : i32
    %c0_i32_0 = arith.constant 0 : i32
    %c0_i32_1 = arith.constant 0 : i32
    return %c0_i32, %c0_i32_0 : i32, i32
  }
  func.func @transform_3(%arg0: i32, %arg1: i32) -> (i32, i32) {
    %c0_i32 = arith.constant 0 : i32
    %c0_i32_0 = arith.constant 0 : i32
    return %arg0, %c0_i32 : i32, i32
  }
}

</mosaic_0001>

<llo_original>
// kernel: model_forward.53
$region0: #{model_forward.53}
  #allocation0 [shape = 'u32[]', space=smem, size = 0x4, offset = 0x4, fixed_abs, tag = 'smem constant byte address 0x4 - core index']
  #allocation1 [shape = 'u32[144,128]{1,0:T(1,128)}', space=vmem, size = 0x12000, scoped, tag = 'internal scratch']
  #allocation2 [shape = 'f32[16,128]{1,0:T(8,128)}', space=vmem, size = 0x2000, scoped, tag = 'scratch operand']
  %s0 = inlined_call_operand.vmem [shape: bf16[16,128], index: 0, kind: input, shape index: {}]
  %s1 = inlined_call_operand.vmem [shape: bf16[128,128], index: 1, kind: input, shape index: {}]
  %s2 = inlined_call_operand.vmem [shape: f32[16,128], index: 2, kind: output, shape index: {}]
  %s3 = sld [smem:[#allocation0]]
  $region26: #{model_forward.53} parent=0
    _
  %s5 = ssub.s32 1, %s3
  %s6 = scalar_select 0, %s5, %s3
  // Predicated region
  $region2: #{model_forward.53} parent=0 // pred_check
    _
  $region3: #{model_forward.53} parent=0 // pred_check_branch
    %8 = sbr.rel (0) target = $region5
  $region4: #{model_forward.53} parent=0 // pred_region
    _
  $region5: #{model_forward.53} parent=0 // pred_fallthru
    _
  // Predicated region
  $region6: #{model_forward.53} parent=0 // pred_check
    _
  $region7: #{model_forward.53} parent=0 // pred_check_branch
    %10 = sbr.rel (0) target = $region9
  $region8: #{model_forward.53} parent=0 // pred_region
    _
  $region9: #{model_forward.53} parent=0 // pred_fallthru
    _
  %p12 = scmp.eq.s32.totalorder 0, 0
  // Predicated region
  $region10: #{model_forward.53} parent=0 // pred_check
    %p13 = pneg %p12
  $region11: #{model_forward.53} parent=0 // pred_check_branch
    %15 = sbr.rel (%p13) target = $region13
  $region12: #{model_forward.53} parent=0 // pred_region
    %16 = vst [vmem:[#allocation2] sm:$0xff] 0.0
    %17 = vst [vmem:[#allocation2 + $0x8] sm:$0xff] 0.0
  $region13: #{model_forward.53} parent=0 // pred_fallthru
    _
  %v18 = vld [vmem:[%s0] sm:$0xf]
  %v19 = vld [vmem:[%s0 + $0x4] sm:$0xf]
  %v20 = vld [vmem:[%s1] sm:$0xf]
  %v21 = vld [vmem:[%s1 + $0x4] sm:$0xf]
  %v22 = vld [vmem:[%s1 + $0x8] sm:$0xf]
  %v23 = vld [vmem:[%s1 + $0xc] sm:$0xf]
  %v24 = vld [vmem:[%s1 + $0x10] sm:$0xf]
  %v25 = vld [vmem:[%s1 + $0x14] sm:$0xf]
  %v26 = vld [vmem:[%s1 + $0x18] sm:$0xf]
  %v27 = vld [vmem:[%s1 + $0x1c] sm:$0xf]
  %v28 = vld [vmem:[%s1 + $0x20] sm:$0xf]
  %v29 = vld [vmem:[%s1 + $0x24] sm:$0xf]
  %v30 = vld [vmem:[%s1 + $0x28] sm:$0xf]
  %v31 = vld [vmem:[%s1 + $0x2c] sm:$0xf]
  %v32 = vld [vmem:[%s1 + $0x30] sm:$0xf]
  %v33 = vld [vmem:[%s1 + $0x34] sm:$0xf]
  %v34 = vld [vmem:[%s1 + $0x38] sm:$0xf]
  %v35 = vld [vmem:[%s1 + $0x3c] sm:$0xf]
  %v38 = vunpack.c.l.b16 %v18
  %v39 = vunpack.c.l.b16 %v19
  %v40 = vpack.c.b16 %v39, %v38
  %v58 = vunpack.c.l.b16 %v20
  %v59 = vunpack.c.l.b16 %v21
  %v60 = vunpack.c.l.b16 %v22
  %v61 = vunpack.c.l.b16 %v23
  %v62 = vunpack.c.l.b16 %v24
  %v63 = vunpack.c.l.b16 %v25
  %v64 = vunpack.c.l.b16 %v26
  %v65 = vunpack.c.l.b16 %v27
  %v66 = vunpack.c.l.b16 %v28
  %v67 = vunpack.c.l.b16 %v29
  %v68 = vunpack.c.l.b16 %v30
  %v69 = vunpack.c.l.b16 %v31
  %v70 = vunpack.c.l.b16 %v32
  %v71 = vunpack.c.l.b16 %v33
  %v72 = vunpack.c.l.b16 %v34
  %v73 = vunpack.c.l.b16 %v35
  %v74 = vpack.c.b16 %v59, %v58
  %v75 = vpack.c.b16 %v61, %v60
  %v76 = vpack.c.b16 %v63, %v62
  %v77 = vpack.c.b16 %v65, %v64
  %v78 = vpack.c.b16 %v67, %v66
  %v79 = vpack.c.b16 %v69, %v68
  %v80 = vpack.c.b16 %v71, %v70
  %v81 = vpack.c.b16 %v73, %v72
  %90 = vmatprep.subr.bf16.mxu0 0
  %91 = vmatpush1.bf16.msra.mxu0 %v74
  %92 = vmatprep.subr.bf16.mxu0 0
  %93 = vmatpush1.bf16.msra.mxu0 %v75
  %94 = vmatprep.subr.bf16.mxu0 0
  %95 = vmatpush1.bf16.msra.mxu0 %v76
  %96 = vmatprep.subr.bf16.mxu0 0
  %97 = vmatpush1.bf16.msra.mxu0 %v77
  %98 = vmatprep.subr.bf16.mxu0 0
  %99 = vmatpush1.bf16.msra.mxu0 %v78
  %100 = vmatprep.subr.bf16.mxu0 0
  %101 = vmatpush1.bf16.msra.mxu0 %v79
  %102 = vmatprep.subr.bf16.mxu0 0
  %103 = vmatpush1.bf16.msra.mxu0 %v80
  %104 = vmatprep.subr.bf16.mxu0 0
  %105 = vmatpush1.bf16.msra.mxu0 %v81
  %106 = vmatprep.subr.bf16.mxu0 0
  %107 = vmatpush1.bf16.msra.mxu0 0
  %108 = vmatprep.subr.bf16.mxu0 0
  %109 = vmatpush1.bf16.msra.mxu0 0
  %110 = vmatprep.subr.bf16.mxu0 0
  %111 = vmatpush1.bf16.msra.mxu0 0
  %112 = vmatprep.subr.bf16.mxu0 0
  %113 = vmatpush1.bf16.msra.mxu0 0
  %114 = vmatprep.subr.bf16.mxu0 0
  %115 = vmatpush1.bf16.msra.mxu0 0
  %116 = vmatprep.subr.bf16.mxu0 0
  %117 = vmatpush1.bf16.msra.mxu0 0
  %118 = vmatprep.subr.bf16.mxu0 0
  %119 = vmatpush1.bf16.msra.mxu0 0
  %120 = vmatprep.subr.bf16.mxu0 0
  %121 = vmatpush1.bf16.msra.mxu0 0
  %122 = vmatprep.mubr.bf16.mxu0 0
  %123 = vmatmul.mubr.bf16.gmra.mrb[0].mxu0 %v40
  %v124 = vpop.f32.mrb[0].mxu0
  %v125 = vadd.f32 0.0, %v124
  %v126 = vpop.f32.mrb[0].mxu0
  %v127 = vpop.f32.mrb[0].mxu0
  %v128 = vadd.f32 0.0, %v127
  %v129 = vpop.f32.mrb[0].mxu0
  %130 = vdwg.mxu0
  %v131 = vld [vmem:[#allocation2] sm:$0xff]
  %v132 = vld [vmem:[#allocation2 + $0x8] sm:$0xff]
  %v133 = vadd.f32 %v131, %v125
  %v134 = vadd.f32 %v132, %v128
  %135 = vst [vmem:[#allocation2] sm:$0xff] %v133
  %136 = vst [vmem:[#allocation2 + $0x8] sm:$0xff] %v134
  // Predicated region
  $region14: #{model_forward.53} parent=0 // pred_check
    %p137 = pneg %p12
  $region15: #{model_forward.53} parent=0 // pred_check_branch
    %139 = sbr.rel (%p137) target = $region17
  $region16: #{model_forward.53} parent=0 // pred_region
    %v140 = vld [vmem:[#allocation2] sm:$0xff]
    %v141 = vld [vmem:[#allocation2 + $0x8] sm:$0xff]
    %142 = vst [vmem:[%s2] sm:$0xff] %v140
    %143 = vst [vmem:[%s2 + $0x8] sm:$0xff] %v141
  $region17: #{model_forward.53} parent=0 // pred_fallthru
    _
  // Predicated region
  $region18: #{model_forward.53} parent=0 // pred_check
    _
  $region19: #{model_forward.53} parent=0 // pred_check_branch
    %145 = sbr.rel (0) target = $region21
  $region20: #{model_forward.53} parent=0 // pred_region
    _
  $region21: #{model_forward.53} parent=0 // pred_fallthru
    _
  // Predicated region
  $region22: #{model_forward.53} parent=0 // pred_check
    _
  $region23: #{model_forward.53} parent=0 // pred_check_branch
    %147 = sbr.rel (0) target = $region25
  $region24: #{model_forward.53} parent=0 // pred_region
    _
  $region25: #{model_forward.53} parent=0 // pred_fallthru
    _

// kernel: model_forward.52
$region0: #{model_forward.52}
  #allocation0 [shape = 'u32[]', space=smem, size = 0x4, offset = 0x4, fixed_abs, tag = 'smem constant byte address 0x4 - core index']
  #allocation1 [shape = 'u32[144,128]{1,0:T(1,128)}', space=vmem, size = 0x12000, scoped, tag = 'internal scratch']
  #allocation2 [shape = 'f32[16,128]{1,0:T(8,128)}', space=vmem, size = 0x2000, scoped, tag = 'scratch operand']
  %s0 = inlined_call_operand.vmem [shape: f32[16,128], index: 0, kind: input, shape index: {}]
  %s1 = inlined_call_operand.vmem [shape: f32[128,128], index: 1, kind: input, shape index: {}]
  %s2 = inlined_call_operand.vmem [shape: f32[16,128], index: 2, kind: input, shape index: {}]
  %s3 = inlined_call_operand.vmem [shape: f32[128,128], index: 3, kind: input, shape index: {}]
  %s4 = inlined_call_operand.vmem [shape: f32[1,128], index: 4, kind: input, shape index: {}]
  %s5 = inlined_call_operand.vmem [shape: f32[16,128], index: 5, kind: output, shape index: {}]
  %s6 = sld [smem:[#allocation0]]
  $region38: #{model_forward.52} parent=0
    _
  %s8 = ssub.s32 1, %s6
  %s9 = scalar_select 0, %s8, %s6
  // Predicated region
  $region2: #{model_forward.52} parent=0 // pred_check
    _
  $region3: #{model_forward.52} parent=0 // pred_check_branch
    %11 = sbr.rel (0) target = $region5
  $region4: #{model_forward.52} parent=0 // pred_region
    _
  $region5: #{model_forward.52} parent=0 // pred_fallthru
    _
  // Predicated region
  $region6: #{model_forward.52} parent=0 // pred_check
    _
  $region7: #{model_forward.52} parent=0 // pred_check_branch
    %13 = sbr.rel (0) target = $region9
  $region8: #{model_forward.52} parent=0 // pred_region
    _
  $region9: #{model_forward.52} parent=0 // pred_fallthru
    _
  // Predicated region
  $region10: #{model_forward.52} parent=0 // pred_check
    _
  $region11: #{model_forward.52} parent=0 // pred_check_branch
    %15 = sbr.rel (0) target = $region13
  $region12: #{model_forward.52} parent=0 // pred_region
    _
  $region13: #{model_forward.52} parent=0 // pred_fallthru
    _
  // Predicated region
  $region14: #{model_forward.52} parent=0 // pred_check
    _
  $region15: #{model_forward.52} parent=0 // pred_check_branch
    %17 = sbr.rel (0) target = $region17
  $region16: #{model_forward.52} parent=0 // pred_region
    _
  $region17: #{model_forward.52} parent=0 // pred_fallthru
    _
  // Predicated region
  $region18: #{model_forward.52} parent=0 // pred_check
    _
  $region19: #{model_forward.52} parent=0 // pred_check_branch
    %19 = sbr.rel (0) target = $region21
  $region20: #{model_forward.52} parent=0 // pred_region
    _
  $region21: #{model_forward.52} parent=0 // pred_fallthru
    _
  %p20 = scmp.eq.s32.totalorder 0, 0
  // Predicated region
  $region22: #{model_forward.52} parent=0 // pred_check
    %p21 = pneg %p20
  $region23: #{model_forward.52} parent=0 // pred_check_branch
    %23 = sbr.rel (%p21) target = $region25
  $region24: #{model_forward.52} parent=0 // pred_region
    %24 = vst [vmem:[#allocation2] sm:$0xff] 0.0
    %25 = vst [vmem:[#allocation2 + $0x8] sm:$0xff] 0.0
  $region25: #{model_forward.52} parent=0 // pred_fallthru
    _
  %v26 = vld [vmem:[%s0] sm:$0xff]
  %v27 = vld [vmem:[%s0 + $0x8] sm:$0xff]
  %v28 = vld [vmem:[%s1] sm:$0xff]
  %v29 = vld [vmem:[%s1 + $0x8] sm:$0xff]
  %v30 = vld [vmem:[%s1 + $0x10] sm:$0xff]
  %v31 = vld [vmem:[%s1 + $0x18] sm:$0xff]
  %v32 = vld [vmem:[%s1 + $0x20] sm:$0xff]
  %v33 = vld [vmem:[%s1 + $0x28] sm:$0xff]
  %v34 = vld [vmem:[%s1 + $0x30] sm:$0xff]
  %v35 = vld [vmem:[%s1 + $0x38] sm:$0xff]
  %v36 = vld [vmem:[%s1 + $0x40] sm:$0xff]
  %v37 = vld [vmem:[%s1 + $0x48] sm:$0xff]
  %v38 = vld [vmem:[%s1 + $0x50] sm:$0xff]
  %v39 = vld [vmem:[%s1 + $0x58] sm:$0xff]
  %v40 = vld [vmem:[%s1 + $0x60] sm:$0xff]
  %v41 = vld [vmem:[%s1 + $0x68] sm:$0xff]
  %v42 = vld [vmem:[%s1 + $0x70] sm:$0xff]
  %v43 = vld [vmem:[%s1 + $0x78] sm:$0xff]
  %v44 = vld [vmem:[%s2] sm:$0xff]
  %v45 = vld [vmem:[%s2 + $0x8] sm:$0xff]
  %v46 = vld [vmem:[%s3] sm:$0xff]
  %v47 = vld [vmem:[%s3 + $0x8] sm:$0xff]
  %v48 = vld [vmem:[%s3 + $0x10] sm:$0xff]
  %v49 = vld [vmem:[%s3 + $0x18] sm:$0xff]
  %v50 = vld [vmem:[%s3 + $0x20] sm:$0xff]
  %v51 = vld [vmem:[%s3 + $0x28] sm:$0xff]
  %v52 = vld [vmem:[%s3 + $0x30] sm:$0xff]
  %v53 = vld [vmem:[%s3 + $0x38] sm:$0xff]
  %v54 = vld [vmem:[%s3 + $0x40] sm:$0xff]
  %v55 = vld [vmem:[%s3 + $0x48] sm:$0xff]
  %v56 = vld [vmem:[%s3 + $0x50] sm:$0xff]
  %v57 = vld [vmem:[%s3 + $0x58] sm:$0xff]
  %v58 = vld [vmem:[%s3 + $0x60] sm:$0xff]
  %v59 = vld [vmem:[%s3 + $0x68] sm:$0xff]
  %v60 = vld [vmem:[%s3 + $0x70] sm:$0xff]
  %v61 = vld [vmem:[%s3 + $0x78] sm:$0xff]
  %62 = vmatprep.subr.mxu0 0.0
  %63 = vmatpush1.msra.mxu0 %v46
  %64 = vmatprep.subr.mxu0 0.0
  %65 = vmatpush1.msra.mxu0 %v47
  %66 = vmatprep.subr.mxu0 0.0
  %67 = vmatpush1.msra.mxu0 %v48
  %68 = vmatprep.subr.mxu0 0.0
  %69 = vmatpush1.msra.mxu0 %v49
  %70 = vmatprep.subr.mxu0 0.0
  %71 = vmatpush1.msra.mxu0 %v50
  %72 = vmatprep.subr.mxu0 0.0
  %73 = vmatpush1.msra.mxu0 %v51
  %74 = vmatprep.subr.mxu0 0.0
  %75 = vmatpush1.msra.mxu0 %v52
  %76 = vmatprep.subr.mxu0 0.0
  %77 = vmatpush1.msra.mxu0 %v53
  %78 = vmatprep.subr.mxu0 0.0
  %79 = vmatpush1.msra.mxu0 %v54
  %80 = vmatprep.subr.mxu0 0.0
  %81 = vmatpush1.msra.mxu0 %v55
  %82 = vmatprep.subr.mxu0 0.0
  %83 = vmatpush1.msra.mxu0 %v56
  %84 = vmatprep.subr.mxu0 0.0
  %85 = vmatpush1.msra.mxu0 %v57
  %86 = vmatprep.subr.mxu0 0.0
  %87 = vmatpush1.msra.mxu0 %v58
  %88 = vmatprep.subr.mxu0 0.0
  %89 = vmatpush1.msra.mxu0 %v59
  %90 = vmatprep.subr.mxu0 0.0
  %91 = vmatpush1.msra.mxu0 %v60
  %92 = vmatprep.subr.mxu0 0.0
  %93 = vmatpush1.msra.mxu0 %v61
  %94 = vmatprep.subr.mxu0 0.0
  %95 = vmatpush1.msra.mxu0 0.0
  %96 = vmatprep.subr.mxu0 0.0
  %97 = vmatpush1.msra.mxu0 0.0
  %98 = vmatprep.subr.mxu0 0.0
  %99 = vmatpush1.msra.mxu0 0.0
  %100 = vmatprep.subr.mxu0 0.0
  %101 = vmatpush1.msra.mxu0 0.0
  %102 = vmatprep.subr.mxu0 0.0
  %103 = vmatpush1.msra.mxu0 0.0
  %104 = vmatprep.subr.mxu0 0.0
  %105 = vmatpush1.msra.mxu0 0.0
  %106 = vmatprep.subr.mxu0 0.0
  %107 = vmatpush1.msra.mxu0 0.0
  %108 = vmatprep.subr.mxu0 0.0
  %109 = vmatpush1.msra.mxu0 0.0
  %110 = vmatprep.subr.mxu0 0.0
  %111 = vmatpush1.msra.mxu0 0.0
  %112 = vmatprep.subr.mxu0 0.0
  %113 = vmatpush1.msra.mxu0 0.0
  %114 = vmatprep.subr.mxu0 0.0
  %115 = vmatpush1.msra.mxu0 0.0
  %116 = vmatprep.subr.mxu0 0.0
  %117 = vmatpush1.msra.mxu0 0.0
  %118 = vmatprep.subr.mxu0 0.0
  %119 = vmatpush1.msra.mxu0 0.0
  %120 = vmatprep.subr.mxu0 0.0
  %121 = vmatpush1.msra.mxu0 0.0
  %122 = vmatprep.subr.mxu0 0.0
  %123 = vmatpush1.msra.mxu0 0.0
  %124 = vmatprep.subr.mxu0 0.0
  %125 = vmatpush1.msra.mxu0 0.0
  %126 = vmatprep.mubr.f32.mxu0 0.0
  %127 = vmatmul.mubr.f32.gmra.mrb[0].mxu0 %v44
  %v128 = vpop.f32.mrb[0].mxu0
  %v129 = vadd.f32 0.0, %v128
  %v130 = vpop.f32.mrb[0].mxu0
  %131 = vmatprep.mubr.f32.mxu0 0.0
  %132 = vmatmul.mubr.f32.gmra.mrb[0].mxu0 %v45
  %v133 = vpop.f32.mrb[0].mxu0
  %v134 = vadd.f32 0.0, %v133
  %v135 = vpop.f32.mrb[0].mxu0
  %136 = vdwg.mxu0
  %137 = vmatprep.subr.mxu0 0.0
  %138 = vmatpush1.msra.mxu0 %v28
  %139 = vmatprep.subr.mxu0 0.0
  %140 = vmatpush1.msra.mxu0 %v29
  %141 = vmatprep.subr.mxu0 0.0
  %142 = vmatpush1.msra.mxu0 %v30
  %143 = vmatprep.subr.mxu0 0.0
  %144 = vmatpush1.msra.mxu0 %v31
  %145 = vmatprep.subr.mxu0 0.0
  %146 = vmatpush1.msra.mxu0 %v32
  %147 = vmatprep.subr.mxu0 0.0
  %148 = vmatpush1.msra.mxu0 %v33
  %149 = vmatprep.subr.mxu0 0.0
  %150 = vmatpush1.msra.mxu0 %v34
  %151 = vmatprep.subr.mxu0 0.0
  %152 = vmatpush1.msra.mxu0 %v35
  %153 = vmatprep.subr.mxu0 0.0
  %154 = vmatpush1.msra.mxu0 %v36
  %155 = vmatprep.subr.mxu0 0.0
  %156 = vmatpush1.msra.mxu0 %v37
  %157 = vmatprep.subr.mxu0 0.0
  %158 = vmatpush1.msra.mxu0 %v38
  %159 = vmatprep.subr.mxu0 0.0
  %160 = vmatpush1.msra.mxu0 %v39
  %161 = vmatprep.subr.mxu0 0.0
  %162 = vmatpush1.msra.mxu0 %v40
  %163 = vmatprep.subr.mxu0 0.0
  %164 = vmatpush1.msra.mxu0 %v41
  %165 = vmatprep.subr.mxu0 0.0
  %166 = vmatpush1.msra.mxu0 %v42
  %167 = vmatprep.subr.mxu0 0.0
  %168 = vmatpush1.msra.mxu0 %v43
  %169 = vmatprep.subr.mxu0 0.0
  %170 = vmatpush1.msra.mxu0 0.0
  %171 = vmatprep.subr.mxu0 0.0
  %172 = vmatpush1.msra.mxu0 0.0
  %173 = vmatprep.subr.mxu0 0.0
  %174 = vmatpush1.msra.mxu0 0.0
  %175 = vmatprep.subr.mxu0 0.0
  %176 = vmatpush1.msra.mxu0 0.0
  %177 = vmatprep.subr.mxu0 0.0
  %178 = vmatpush1.msra.mxu0 0.0
  %179 = vmatprep.subr.mxu0 0.0
  %180 = vmatpush1.msra.mxu0 0.0
  %181 = vmatprep.subr.mxu0 0.0
  %182 = vmatpush1.msra.mxu0 0.0
  %183 = vmatprep.subr.mxu0 0.0
  %184 = vmatpush1.msra.mxu0 0.0
  %185 = vmatprep.subr.mxu0 0.0
  %186 = vmatpush1.msra.mxu0 0.0
  %187 = vmatprep.subr.mxu0 0.0
  %188 = vmatpush1.msra.mxu0 0.0
  %189 = vmatprep.subr.mxu0 0.0
  %190 = vmatpush1.msra.mxu0 0.0
  %191 = vmatprep.subr.mxu0 0.0
  %192 = vmatpush1.msra.mxu0 0.0
  %193 = vmatprep.subr.mxu0 0.0
  %194 = vmatpush1.msra.mxu0 0.0
  %195 = vmatprep.subr.mxu0 0.0
  %196 = vmatpush1.msra.mxu0 0.0
  %197 = vmatprep.subr.mxu0 0.0
  %198 = vmatpush1.msra.mxu0 0.0
  %199 = vmatprep.subr.mxu0 0.0
  %200 = vmatpush1.msra.mxu0 0.0
  %201 = vmatprep.mubr.f32.mxu0 0.0
  %202 = vmatmul.mubr.f32.gmra.mrb[0].mxu0 %v26
  %v203 = vpop.f32.mrb[0].mxu0
  %v204 = vadd.f32 %v129, %v203
  %v205 = vpop.f32.mrb[0].mxu0
  %206 = vmatprep.mubr.f32.mxu0 0.0
  %207 = vmatmul.mubr.f32.gmra.mrb[0].mxu0 %v27
  %v208 = vpop.f32.mrb[0].mxu0
  %v209 = vadd.f32 %v134, %v208
  %v210 = vpop.f32.mrb[0].mxu0
  %211 = vdwg.mxu0
  %v212 = vld [vmem:[#allocation2] sm:$0xff]
  %v213 = vld [vmem:[#allocation2 + $0x8] sm:$0xff]
  %v214 = vadd.f32 %v212, %v204
  %v215 = vadd.f32 %v213, %v209
  %216 = vst [vmem:[#allocation2] sm:$0xff] %v214
  %217 = vst [vmem:[#allocation2 + $0x8] sm:$0xff] %v215
  // Predicated region
  $region26: #{model_forward.52} parent=0 // pred_check
    %p218 = pneg %p20
  $region27: #{model_forward.52} parent=0 // pred_check_branch
    %220 = sbr.rel (%p218) target = $region29
  $region28: #{model_forward.52} parent=0 // pred_region
    %v221 = vld [vmem:[#allocation2] sm:$0xff]
    %v222 = vld [vmem:[#allocation2 + $0x8] sm:$0xff]
    %v223 = vld [vmem:[%s4] sm:$0x1]
    %v225 = vlaneseq
    %v226 = vshrl.u32 %v225, 7
    %v227 = vsub.s32 0, %v226
    %v228 = vrot.slane %v223, %v227
    %v230 = vadd.f32 %v221, %v228
    %v231 = vadd.f32 %v222, %v228
    %232 = vst [vmem:[%s5] sm:$0xff] %v230
    %233 = vst [vmem:[%s5 + $0x8] sm:$0xff] %v231
  $region29: #{model_forward.52} parent=0 // pred_fallthru
    _
  // Predicated region
  $region30: #{model_forward.52} parent=0 // pred_check
    _
  $region31: #{model_forward.52} parent=0 // pred_check_branch
    %235 = sbr.rel (0) target = $region33
  $region32: #{model_forward.52} parent=0 // pred_region
    _
  $region33: #{model_forward.52} parent=0 // pred_fallthru
    _
  // Predicated region
  $region34: #{model_forward.52} parent=0 // pred_check
    _
  $region35: #{model_forward.52} parent=0 // pred_check_branch
    %237 = sbr.rel (0) target = $region37
  $region36: #{model_forward.52} parent=0 // pred_region
    _
  $region37: #{model_forward.52} parent=0 // pred_fallthru
    _

// kernel: model_forward.50
$region0: #{model_forward.50}
  #allocation0 [shape = 'u32[]', space=smem, size = 0x4, offset = 0x4, fixed_abs, tag = 'smem constant byte address 0x4 - core index']
  #allocation1 [shape = 'u32[144,128]{1,0:T(1,128)}', space=vmem, size = 0x12000, scoped, tag = 'internal scratch']
  #allocation2 [shape = 'f32[16,128]{1,0:T(8,128)}', space=vmem, size = 0x2000, scoped, tag = 'scratch operand']
  %s0 = inlined_call_operand.vmem [shape: f32[16,128], index: 0, kind: input, shape index: {}]
  %s1 = inlined_call_operand.vmem [shape: f32[128,128], index: 1, kind: input, shape index: {}]
  %s2 = inlined_call_operand.vmem [shape: f32[16,128], index: 2, kind: input, shape index: {}]
  %s3 = inlined_call_operand.vmem [shape: f32[128,128], index: 3, kind: input, shape index: {}]
  %s4 = inlined_call_operand.vmem [shape: f32[1,128], index: 4, kind: input, shape index: {}]
  %s5 = inlined_call_operand.vmem [shape: f32[16,128], index: 5, kind: output, shape index: {}]
  %s6 = sld [smem:[#allocation0]]
  $region38: #{model_forward.50} parent=0
    _
  %s8 = ssub.s32 1, %s6
  %s9 = scalar_select 0, %s8, %s6
  // Predicated region
  $region2: #{model_forward.50} parent=0 // pred_check
    _
  $region3: #{model_forward.50} parent=0 // pred_check_branch
    %11 = sbr.rel (0) target = $region5
  $region4: #{model_forward.50} parent=0 // pred_region
    _
  $region5: #{model_forward.50} parent=0 // pred_fallthru
    _
  // Predicated region
  $region6: #{model_forward.50} parent=0 // pred_check
    _
  $region7: #{model_forward.50} parent=0 // pred_check_branch
    %13 = sbr.rel (0) target = $region9
  $region8: #{model_forward.50} parent=0 // pred_region
    _
  $region9: #{model_forward.50} parent=0 // pred_fallthru
    _
  // Predicated region
  $region10: #{model_forward.50} parent=0 // pred_check
    _
  $region11: #{model_forward.50} parent=0 // pred_check_branch
    %15 = sbr.rel (0) target = $region13
  $region12: #{model_forward.50} parent=0 // pred_region
    _
  $region13: #{model_forward.50} parent=0 // pred_fallthru
    _
  // Predicated region
  $region14: #{model_forward.50} parent=0 // pred_check
    _
  $region15: #{model_forward.50} parent=0 // pred_check_branch
    %17 = sbr.rel (0) target = $region17
  $region16: #{model_forward.50} parent=0 // pred_region
    _
  $region17: #{model_forward.50} parent=0 // pred_fallthru
    _
  // Predicated region
  $region18: #{model_forward.50} parent=0 // pred_check
    _
  $region19: #{model_forward.50} parent=0 // pred_check_branch
    %19 = sbr.rel (0) target = $region21
  $region20: #{model_forward.50} parent=0 // pred_region
    _
  $region21: #{model_forward.50} parent=0 // pred_fallthru
    _
  %p20 = scmp.eq.s32.totalorder 0, 0
  // Predicated region
  $region22: #{model_forward.50} parent=0 // pred_check
    %p21 = pneg %p20
  $region23: #{model_forward.50} parent=0 // pred_check_branch
    %23 = sbr.rel (%p21) target = $region25
  $region24: #{model_forward.50} parent=0 // pred_region
    %24 = vst [vmem:[#allocation2] sm:$0xff] 0.0
    %25 = vst [vmem:[#allocation2 + $0x8] sm:$0xff] 0.0
  $region25: #{model_forward.50} parent=0 // pred_fallthru
    _
  %v26 = vld [vmem:[%s0] sm:$0xff]
  %v27 = vld [vmem:[%s0 + $0x8] sm:$0xff]
  %v28 = vld [vmem:[%s1] sm:$0xff]
  %v29 = vld [vmem:[%s1 + $0x8] sm:$0xff]
  %v30 = vld [vmem:[%s1 + $0x10] sm:$0xff]
  %v31 = vld [vmem:[%s1 + $0x18] sm:$0xff]
  %v32 = vld [vmem:[%s1 + $0x20] sm:$0xff]
  %v33 = vld [vmem:[%s1 + $0x28] sm:$0xff]
  %v34 = vld [vmem:[%s1 + $0x30] sm:$0xff]
  %v35 = vld [vmem:[%s1 + $0x38] sm:$0xff]
  %v36 = vld [vmem:[%s1 + $0x40] sm:$0xff]
  %v37 = vld [vmem:[%s1 + $0x48] sm:$0xff]
  %v38 = vld [vmem:[%s1 + $0x50] sm:$0xff]
  %v39 = vld [vmem:[%s1 + $0x58] sm:$0xff]
  %v40 = vld [vmem:[%s1 + $0x60] sm:$0xff]
  %v41 = vld [vmem:[%s1 + $0x68] sm:$0xff]
  %v42 = vld [vmem:[%s1 + $0x70] sm:$0xff]
  %v43 = vld [vmem:[%s1 + $0x78] sm:$0xff]
  %v44 = vld [vmem:[%s2] sm:$0xff]
  %v45 = vld [vmem:[%s2 + $0x8] sm:$0xff]
  %v46 = vld [vmem:[%s3] sm:$0xff]
  %v47 = vld [vmem:[%s3 + $0x8] sm:$0xff]
  %v48 = vld [vmem:[%s3 + $0x10] sm:$0xff]
  %v49 = vld [vmem:[%s3 + $0x18] sm:$0xff]
  %v50 = vld [vmem:[%s3 + $0x20] sm:$0xff]
  %v51 = vld [vmem:[%s3 + $0x28] sm:$0xff]
  %v52 = vld [vmem:[%s3 + $0x30] sm:$0xff]
  %v53 = vld [vmem:[%s3 + $0x38] sm:$0xff]
  %v54 = vld [vmem:[%s3 + $0x40] sm:$0xff]
  %v55 = vld [vmem:[%s3 + $0x48] sm:$0xff]
  %v56 = vld [vmem:[%s3 + $0x50] sm:$0xff]
  %v57 = vld [vmem:[%s3 + $0x58] sm:$0xff]
  %v58 = vld [vmem:[%s3 + $0x60] sm:$0xff]
  %v59 = vld [vmem:[%s3 + $0x68] sm:$0xff]
  %v60 = vld [vmem:[%s3 + $0x70] sm:$0xff]
  %v61 = vld [vmem:[%s3 + $0x78] sm:$0xff]
  %62 = vmatprep.subr.mxu0 0.0
  %63 = vmatpush1.msra.mxu0 %v46
  %64 = vmatprep.subr.mxu0 0.0
  %65 = vmatpush1.msra.mxu0 %v47
  %66 = vmatprep.subr.mxu0 0.0
  %67 = vmatpush1.msra.mxu0 %v48
  %68 = vmatprep.subr.mxu0 0.0
  %69 = vmatpush1.msra.mxu0 %v49
  %70 = vmatprep.subr.mxu0 0.0
  %71 = vmatpush1.msra.mxu0 %v50
  %72 = vmatprep.subr.mxu0 0.0
  %73 = vmatpush1.msra.mxu0 %v51
  %74 = vmatprep.subr.mxu0 0.0
  %75 = vmatpush1.msra.mxu0 %v52
  %76 = vmatprep.subr.mxu0 0.0
  %77 = vmatpush1.msra.mxu0 %v53
  %78 = vmatprep.subr.mxu0 0.0
  %79 = vmatpush1.msra.mxu0 %v54
  %80 = vmatprep.subr.mxu0 0.0
  %81 = vmatpush1.msra.mxu0 %v55
  %82 = vmatprep.subr.mxu0 0.0
  %83 = vmatpush1.msra.mxu0 %v56
  %84 = vmatprep.subr.mxu0 0.0
  %85 = vmatpush1.msra.mxu0 %v57
  %86 = vmatprep.subr.mxu0 0.0
  %87 = vmatpush1.msra.mxu0 %v58
  %88 = vmatprep.subr.mxu0 0.0
  %89 = vmatpush1.msra.mxu0 %v59
  %90 = vmatprep.subr.mxu0 0.0
  %91 = vmatpush1.msra.mxu0 %v60
  %92 = vmatprep.subr.mxu0 0.0
  %93 = vmatpush1.msra.mxu0 %v61
  %94 = vmatprep.subr.mxu0 0.0
  %95 = vmatpush1.msra.mxu0 0.0
  %96 = vmatprep.subr.mxu0 0.0
  %97 = vmatpush1.msra.mxu0 0.0
  %98 = vmatprep.subr.mxu0 0.0
  %99 = vmatpush1.msra.mxu0 0.0
  %100 = vmatprep.subr.mxu0 0.0
  %101 = vmatpush1.msra.mxu0 0.0
  %102 = vmatprep.subr.mxu0 0.0
  %103 = vmatpush1.msra.mxu0 0.0
  %104 = vmatprep.subr.mxu0 0.0
  %105 = vmatpush1.msra.mxu0 0.0
  %106 = vmatprep.subr.mxu0 0.0
  %107 = vmatpush1.msra.mxu0 0.0
  %108 = vmatprep.subr.mxu0 0.0
  %109 = vmatpush1.msra.mxu0 0.0
  %110 = vmatprep.subr.mxu0 0.0
  %111 = vmatpush1.msra.mxu0 0.0
  %112 = vmatprep.subr.mxu0 0.0
  %113 = vmatpush1.msra.mxu0 0.0
  %114 = vmatprep.subr.mxu0 0.0
  %115 = vmatpush1.msra.mxu0 0.0
  %116 = vmatprep.subr.mxu0 0.0
  %117 = vmatpush1.msra.mxu0 0.0
  %118 = vmatprep.subr.mxu0 0.0
  %119 = vmatpush1.msra.mxu0 0.0
  %120 = vmatprep.subr.mxu0 0.0
  %121 = vmatpush1.msra.mxu0 0.0
  %122 = vmatprep.subr.mxu0 0.0
  %123 = vmatpush1.msra.mxu0 0.0
  %124 = vmatprep.subr.mxu0 0.0
  %125 = vmatpush1.msra.mxu0 0.0
  %126 = vmatprep.mubr.f32.mxu0 0.0
  %127 = vmatmul.mubr.f32.gmra.mrb[0].mxu0 %v44
  %v128 = vpop.f32.mrb[0].mxu0
  %v129 = vadd.f32 0.0, %v128
  %v130 = vpop.f32.mrb[0].mxu0
  %131 = vmatprep.mubr.f32.mxu0 0.0
  %132 = vmatmul.mubr.f32.gmra.mrb[0].mxu0 %v45
  %v133 = vpop.f32.mrb[0].mxu0
  %v134 = vadd.f32 0.0, %v133
  %v135 = vpop.f32.mrb[0].mxu0
  %136 = vdwg.mxu0
  %137 = vmatprep.subr.mxu0 0.0
  %138 = vmatpush1.msra.mxu0 %v28
  %139 = vmatprep.subr.mxu0 0.0
  %140 = vmatpush1.msra.mxu0 %v29
  %141 = vmatprep.subr.mxu0 0.0
  %142 = vmatpush1.msra.mxu0 %v30
  %143 = vmatprep.subr.mxu0 0.0
  %144 = vmatpush1.msra.mxu0 %v31
  %145 = vmatprep.subr.mxu0 0.0
  %146 = vmatpush1.msra.mxu0 %v32
  %147 = vmatprep.subr.mxu0 0.0
  %148 = vmatpush1.msra.mxu0 %v33
  %149 = vmatprep.subr.mxu0 0.0
  %150 = vmatpush1.msra.mxu0 %v34
  %151 = vmatprep.subr.mxu0 0.0
  %152 = vmatpush1.msra.mxu0 %v35
  %153 = vmatprep.subr.mxu0 0.0
  %154 = vmatpush1.msra.mxu0 %v36
  %155 = vmatprep.subr.mxu0 0.0
  %156 = vmatpush1.msra.mxu0 %v37
  %157 = vmatprep.subr.mxu0 0.0
  %158 = vmatpush1.msra.mxu0 %v38
  %159 = vmatprep.subr.mxu0 0.0
  %160 = vmatpush1.msra.mxu0 %v39
  %161 = vmatprep.subr.mxu0 0.0
  %162 = vmatpush1.msra.mxu0 %v40
  %163 = vmatprep.subr.mxu0 0.0
  %164 = vmatpush1.msra.mxu0 %v41
  %165 = vmatprep.subr.mxu0 0.0
  %166 = vmatpush1.msra.mxu0 %v42
  %167 = vmatprep.subr.mxu0 0.0
  %168 = vmatpush1.msra.mxu0 %v43
  %169 = vmatprep.subr.mxu0 0.0
  %170 = vmatpush1.msra.mxu0 0.0
  %171 = vmatprep.subr.mxu0 0.0
  %172 = vmatpush1.msra.mxu0 0.0
  %173 = vmatprep.subr.mxu0 0.0
  %174 = vmatpush1.msra.mxu0 0.0
  %175 = vmatprep.subr.mxu0 0.0
  %176 = vmatpush1.msra.mxu0 0.0
  %177 = vmatprep.subr.mxu0 0.0
  %178 = vmatpush1.msra.mxu0 0.0
  %179 = vmatprep.subr.mxu0 0.0
  %180 = vmatpush1.msra.mxu0 0.0
  %181 = vmatprep.subr.mxu0 0.0
  %182 = vmatpush1.msra.mxu0 0.0
  %183 = vmatprep.subr.mxu0 0.0
  %184 = vmatpush1.msra.mxu0 0.0
  %185 = vmatprep.subr.mxu0 0.0
  %186 = vmatpush1.msra.mxu0 0.0
  %187 = vmatprep.subr.mxu0 0.0
  %188 = vmatpush1.msra.mxu0 0.0
  %189 = vmatprep.subr.mxu0 0.0
  %190 = vmatpush1.msra.mxu0 0.0
  %191 = vmatprep.subr.mxu0 0.0
  %192 = vmatpush1.msra.mxu0 0.0
  %193 = vmatprep.subr.mxu0 0.0
  %194 = vmatpush1.msra.mxu0 0.0
  %195 = vmatprep.subr.mxu0 0.0
  %196 = vmatpush1.msra.mxu0 0.0
  %197 = vmatprep.subr.mxu0 0.0
  %198 = vmatpush1.msra.mxu0 0.0
  %199 = vmatprep.subr.mxu0 0.0
  %200 = vmatpush1.msra.mxu0 0.0
  %201 = vmatprep.mubr.f32.mxu0 0.0
  %202 = vmatmul.mubr.f32.gmra.mrb[0].mxu0 %v26
  %v203 = vpop.f32.mrb[0].mxu0
  %v204 = vadd.f32 %v129, %v203
  %v205 = vpop.f32.mrb[0].mxu0
  %206 = vmatprep.mubr.f32.mxu0 0.0
  %207 = vmatmul.mubr.f32.gmra.mrb[0].mxu0 %v27
  %v208 = vpop.f32.mrb[0].mxu0
  %v209 = vadd.f32 %v134, %v208
  %v210 = vpop.f32.mrb[0].mxu0
  %211 = vdwg.mxu0
  %v212 = vld [vmem:[#allocation2] sm:$0xff]
  %v213 = vld [vmem:[#allocation2 + $0x8] sm:$0xff]
  %v214 = vadd.f32 %v212, %v204
  %v215 = vadd.f32 %v213, %v209
  %216 = vst [vmem:[#allocation2] sm:$0xff] %v214
  %217 = vst [vmem:[#allocation2 + $0x8] sm:$0xff] %v215
  // Predicated region
  $region26: #{model_forward.50} parent=0 // pred_check
    %p218 = pneg %p20
  $region27: #{model_forward.50} parent=0 // pred_check_branch
    %220 = sbr.rel (%p218) target = $region29
  $region28: #{model_forward.50} parent=0 // pred_region
    %v221 = vld [vmem:[#allocation2] sm:$0xff]
    %v222 = vld [vmem:[#allocation2 + $0x8] sm:$0xff]
    %v223 = vld [vmem:[%s4] sm:$0x1]
    %v225 = vlaneseq
    %v226 = vshrl.u32 %v225, 7
    %v227 = vsub.s32 0, %v226
    %v228 = vrot.slane %v223, %v227
    %v230 = vadd.f32 %v221, %v228
    %v231 = vadd.f32 %v222, %v228
    %v232 = vmax.f32 %v230, 0.0
    %v233 = vmax.f32 %v231, 0.0
    %234 = vst [vmem:[%s5] sm:$0xff] %v232
    %235 = vst [vmem:[%s5 + $0x8] sm:$0xff] %v233
  $region29: #{model_forward.50} parent=0 // pred_fallthru
    _
  // Predicated region
  $region30: #{model_forward.50} parent=0 // pred_check
    _
  $region31: #{model_forward.50} parent=0 // pred_check_branch
    %237 = sbr.rel (0) target = $region33
  $region32: #{model_forward.50} parent=0 // pred_region
    _
  $region33: #{model_forward.50} parent=0 // pred_fallthru
    _
  // Predicated region
  $region34: #{model_forward.50} parent=0 // pred_check
    _
  $region35: #{model_forward.50} parent=0 // pred_check_branch
    %239 = sbr.rel (0) target = $region37
  $region36: #{model_forward.50} parent=0 // pred_region
    _
  $region37: #{model_forward.50} parent=0 // pred_fallthru
    _

// kernel: model_forward.57
$region0: #{model_forward.57}
  #allocation0 [shape = 'u32[]', space=smem, size = 0x4, offset = 0x4, fixed_abs, tag = 'smem constant byte address 0x4 - core index']
  #allocation1 [shape = 'u32[144,128]{1,0:T(1,128)}', space=vmem, size = 0x12000, scoped, tag = 'internal scratch']
  %s0 = inlined_call_operand.vmem [shape: f32[2,16,128], index: 0, kind: input, shape index: {}]
  %s1 = inlined_call_operand.vmem [shape: f32[2,128], index: 1, kind: input, shape index: {}]
  %s2 = inlined_call_operand.vmem [shape: f32[1,2], index: 2, kind: input, shape index: {}]
  %s3 = inlined_call_operand.vmem [shape: f32[16,128], index: 3, kind: input, shape index: {}]
  %s4 = inlined_call_operand.vmem [shape: f32[16,128], index: 4, kind: output, shape index: {}]
  %s5 = sld [smem:[#allocation0]]
  $region26: #{model_forward.57} parent=0
    _
  %s7 = ssub.s32 1, %s5
  %s8 = scalar_select 0, %s7, %s5
  // Predicated region
  $region2: #{model_forward.57} parent=0 // pred_check
    _
  $region3: #{model_forward.57} parent=0 // pred_check_branch
    %10 = sbr.rel (0) target = $region5
  $region4: #{model_forward.57} parent=0 // pred_region
    _
  $region5: #{model_forward.57} parent=0 // pred_fallthru
    _
  // Predicated region
  $region6: #{model_forward.57} parent=0 // pred_check
    _
  $region7: #{model_forward.57} parent=0 // pred_check_branch
    %12 = sbr.rel (0) target = $region9
  $region8: #{model_forward.57} parent=0 // pred_region
    _
  $region9: #{model_forward.57} parent=0 // pred_fallthru
    _
  // Predicated region
  $region10: #{model_forward.57} parent=0 // pred_check
    _
  $region11: #{model_forward.57} parent=0 // pred_check_branch
    %14 = sbr.rel (0) target = $region13
  $region12: #{model_forward.57} parent=0 // pred_region
    _
  $region13: #{model_forward.57} parent=0 // pred_fallthru
    _
  // Predicated region
  $region14: #{model_forward.57} parent=0 // pred_check
    _
  $region15: #{model_forward.57} parent=0 // pred_check_branch
    %16 = sbr.rel (0) target = $region17
  $region16: #{model_forward.57} parent=0 // pred_region
    _
  $region17: #{model_forward.57} parent=0 // pred_fallthru
    _
  %v17 = vld [vmem:[%s1] sm:$0x1]
  %v18 = vld [vmem:[%s0] sm:$0xff]
  %v19 = vld [vmem:[%s0 + $0x8] sm:$0xff]
  %v20 = vlaneseq
  %v21 = vshrl.u32 %v20, 7
  %v22 = vsub.s32 0, %v21
  %v23 = vrot.slane %v17, %v22
  %v24 = vmul.f32 %v18, %v23
  %v25 = vmul.f32 %v19, %v23
  %26 = vadd.xlane.f32.xlu0 %v24
  %v27 = vpop.xlane.xlu0 %26
  %28 = vadd.xlane.f32.xlu0 %v25
  %v29 = vpop.xlane.xlu0 %28
  %v30 = vld [vmem:[%s2] sm:$0x1]
  %v32 = vlaneseq
  %v33 = vshrl.u32 %v32, 7
  %v34 = vsub.s32 0, %v33
  %v35 = vrot.slane %v30, %v34
  %v37 = vadd.f32 %v27, %v35
  %v38 = vadd.f32 %v29, %v35
  %v39 = vld [vmem:[%s1 + $0x1] sm:$0x1]
  %s40 = scalar_lea.vmem %s0, 16
  %v41 = vld [vmem:[%s40] sm:$0xff]
  %v42 = vld [vmem:[%s40 + $0x8] sm:$0xff]
  %v43 = vlaneseq
  %v44 = vshrl.u32 %v43, 7
  %v45 = vsub.s32 0, %v44
  %v46 = vrot.slane %v39, %v45
  %v47 = vmul.f32 %v41, %v46
  %v48 = vmul.f32 %v42, %v46
  %49 = vadd.xlane.f32.xlu0 %v47
  %v50 = vpop.xlane.xlu0 %49
  %51 = vadd.xlane.f32.xlu0 %v48
  %v52 = vpop.xlane.xlu0 %51
  %v53 = vadd.f32 %v50, %v35
  %v54 = vadd.f32 %v52, %v35
  %57 = vrot.lane.b32.xlu0 %v53, 127
  %v58 = vpop.permute.xlu0 %57
  %59 = vrot.lane.b32.xlu0 %v54, 127
  %v60 = vpop.permute.xlu0 %59
  %v63 = vmax.f32 %v37, %v58
  %v64 = vmax.f32 %v38, %v60
  %v65 = vsub.f32 %v37, %v63
  %v66 = vsub.f32 %v38, %v64
  %v67 = vmul.f32 %v65, 1.442695
  %v68 = vpow.pop %v67
  %v69 = vmul.f32 %v66, 1.442695
  %v70 = vpow.pop %v69
  %73 = vrot.lane.b32.xlu0 %v63, 1
  %v74 = vpop.permute.xlu0 %73
  %75 = vrot.lane.b32.xlu0 %v64, 1
  %v76 = vpop.permute.xlu0 %75
  %v79 = vsub.f32 %v53, %v74
  %v80 = vsub.f32 %v54, %v76
  %v81 = vmul.f32 %v79, 1.442695
  %v82 = vpow.pop %v81
  %v83 = vmul.f32 %v80, 1.442695
  %v84 = vpow.pop %v83
  %87 = vrot.lane.b32.xlu0 %v82, 127
  %v88 = vpop.permute.xlu0 %87
  %89 = vrot.lane.b32.xlu0 %v84, 127
  %v90 = vpop.permute.xlu0 %89
  %v93 = vadd.f32 %v68, %v88
  %v94 = vadd.f32 %v70, %v90
  %96 = vset.pattern.permute.xlu0 0
  %97 = vperm.xlu0 %96, %v68
  %v98 = vpop.permute.xlu0 %97
  %101 = vset.pattern.permute.xlu0 0
  %102 = vperm.xlu0 %101, %v70
  %v103 = vpop.permute.xlu0 %102
  %v105 = vmul.f32 %v98, %v18
  %v106 = vmul.f32 %v103, %v19
  %107 = vset.pattern.permute.xlu0 1
  %108 = vperm.xlu0 %107, %v82
  %v109 = vpop.permute.xlu0 %108
  %111 = vset.pattern.permute.xlu0 1
  %112 = vperm.xlu0 %111, %v84
  %v113 = vpop.permute.xlu0 %112
  %v115 = vmul.f32 %v109, %v41
  %v116 = vmul.f32 %v113, %v42
  %v117 = vadd.f32 %v105, %v115
  %v118 = vadd.f32 %v106, %v116
  %v119 = vrcp.pop %v93
  %v120 = vrcp.pop %v94
  %122 = vset.pattern.permute.xlu0 0
  %123 = vperm.xlu0 %122, %v119
  %v124 = vpop.permute.xlu0 %123
  %127 = vset.pattern.permute.xlu0 0
  %128 = vperm.xlu0 %127, %v120
  %v129 = vpop.permute.xlu0 %128
  %v131 = vmul.f32 %v117, %v124
  %v132 = vmul.f32 %v118, %v129
  %v133 = vld [vmem:[%s3] sm:$0xff]
  %v134 = vld [vmem:[%s3 + $0x8] sm:$0xff]
  %v135 = vadd.f32 %v133, %v131
  %v136 = vadd.f32 %v134, %v132
  %137 = vst [vmem:[%s4] sm:$0xff] %v135
  %138 = vst [vmem:[%s4 + $0x8] sm:$0xff] %v136
  // Predicated region
  $region18: #{model_forward.57} parent=0 // pred_check
    _
  $region19: #{model_forward.57} parent=0 // pred_check_branch
    %140 = sbr.rel (0) target = $region21
  $region20: #{model_forward.57} parent=0 // pred_region
    _
  $region21: #{model_forward.57} parent=0 // pred_fallthru
    _
  // Predicated region
  $region22: #{model_forward.57} parent=0 // pred_check
    _
  $region23: #{model_forward.57} parent=0 // pred_check_branch
    %142 = sbr.rel (0) target = $region25
  $region24: #{model_forward.57} parent=0 // pred_region
    _
  $region25: #{model_forward.57} parent=0 // pred_fallthru
    _

// kernel: model_forward.60
$region0: #{model_forward.60}
  #allocation0 [shape = 'u32[]', space=smem, size = 0x4, offset = 0x4, fixed_abs, tag = 'smem constant byte address 0x4 - core index']
  #allocation1 [shape = 'u32[144,128]{1,0:T(1,128)}', space=vmem, size = 0x12000, scoped, tag = 'internal scratch']
  #allocation2 [shape = 'f32[16,128]{1,0:T(8,128)}', space=vmem, size = 0x2000, scoped, tag = 'scratch operand']
  %s0 = inlined_call_operand.vmem [shape: f32[16,128], index: 0, kind: input, shape index: {}]
  %s1 = inlined_call_operand.vmem [shape: f32[128,128], index: 1, kind: input, shape index: {}]
  %s2 = inlined_call_operand.vmem [shape: f32[16,128], index: 2, kind: input, shape index: {}, may-alias: {2,5}]
  %s3 = inlined_call_operand.vmem [shape: f32[128,128], index: 3, kind: input, shape index: {}]
  %s4 = inlined_call_operand.vmem [shape: f32[1,128], index: 4, kind: input, shape index: {}]
  %s5 = inlined_call_operand.vmem [shape: f32[16,128], index: 5, kind: input, shape index: {}, may-alias: {2,5}]
  %s6 = inlined_call_operand.vmem [shape: f32[16,128], index: 6, kind: output, shape index: {}]
  %s7 = sld [smem:[#allocation0]]
  $region42: #{model_forward.60} parent=0
    _
  %s9 = ssub.s32 1, %s7
  %s10 = scalar_select 0, %s9, %s7
  // Predicated region
  $region2: #{model_forward.60} parent=0 // pred_check
    _
  $region3: #{model_forward.60} parent=0 // pred_check_branch
    %12 = sbr.rel (0) target = $region5
  $region4: #{model_forward.60} parent=0 // pred_region
    _
  $region5: #{model_forward.60} parent=0 // pred_fallthru
    _
  // Predicated region
  $region6: #{model_forward.60} parent=0 // pred_check
    _
  $region7: #{model_forward.60} parent=0 // pred_check_branch
    %14 = sbr.rel (0) target = $region9
  $region8: #{model_forward.60} parent=0 // pred_region
    _
  $region9: #{model_forward.60} parent=0 // pred_fallthru
    _
  // Predicated region
  $region10: #{model_forward.60} parent=0 // pred_check
    _
  $region11: #{model_forward.60} parent=0 // pred_check_branch
    %16 = sbr.rel (0) target = $region13
  $region12: #{model_forward.60} parent=0 // pred_region
    _
  $region13: #{model_forward.60} parent=0 // pred_fallthru
    _
  // Predicated region
  $region14: #{model_forward.60} parent=0 // pred_check
    _
  $region15: #{model_forward.60} parent=0 // pred_check_branch
    %18 = sbr.rel (0) target = $region17
  $region16: #{model_forward.60} parent=0 // pred_region
    _
  $region17: #{model_forward.60} parent=0 // pred_fallthru
    _
  // Predicated region
  $region18: #{model_forward.60} parent=0 // pred_check
    _
  $region19: #{model_forward.60} parent=0 // pred_check_branch
    %20 = sbr.rel (0) target = $region21
  $region20: #{model_forward.60} parent=0 // pred_region
    _
  $region21: #{model_forward.60} parent=0 // pred_fallthru
    _
  // Predicated region
  $region22: #{model_forward.60} parent=0 // pred_check
    _
  $region23: #{model_forward.60} parent=0 // pred_check_branch
    %22 = sbr.rel (0) target = $region25
  $region24: #{model_forward.60} parent=0 // pred_region
    _
  $region25: #{model_forward.60} parent=0 // pred_fallthru
    _
  %p23 = scmp.eq.s32.totalorder 0, 0
  // Predicated region
  $region26: #{model_forward.60} parent=0 // pred_check
    %p24 = pneg %p23
  $region27: #{model_forward.60} parent=0 // pred_check_branch
    %26 = sbr.rel (%p24) target = $region29
  $region28: #{model_forward.60} parent=0 // pred_region
    %27 = vst [vmem:[#allocation2] sm:$0xff] 0.0
    %28 = vst [vmem:[#allocation2 + $0x8] sm:$0xff] 0.0
  $region29: #{model_forward.60} parent=0 // pred_fallthru
    _
  %v29 = vld [vmem:[%s0] sm:$0xff]
  %v30 = vld [vmem:[%s0 + $0x8] sm:$0xff]
  %v31 = vld [vmem:[%s1] sm:$0xff]
  %v32 = vld [vmem:[%s1 + $0x8] sm:$0xff]
  %v33 = vld [vmem:[%s1 + $0x10] sm:$0xff]
  %v34 = vld [vmem:[%s1 + $0x18] sm:$0xff]
  %v35 = vld [vmem:[%s1 + $0x20] sm:$0xff]
  %v36 = vld [vmem:[%s1 + $0x28] sm:$0xff]
  %v37 = vld [vmem:[%s1 + $0x30] sm:$0xff]
  %v38 = vld [vmem:[%s1 + $0x38] sm:$0xff]
  %v39 = vld [vmem:[%s1 + $0x40] sm:$0xff]
  %v40 = vld [vmem:[%s1 + $0x48] sm:$0xff]
  %v41 = vld [vmem:[%s1 + $0x50] sm:$0xff]
  %v42 = vld [vmem:[%s1 + $0x58] sm:$0xff]
  %v43 = vld [vmem:[%s1 + $0x60] sm:$0xff]
  %v44 = vld [vmem:[%s1 + $0x68] sm:$0xff]
  %v45 = vld [vmem:[%s1 + $0x70] sm:$0xff]
  %v46 = vld [vmem:[%s1 + $0x78] sm:$0xff]
  %v47 = vld [vmem:[%s2] sm:$0xff]
  %v48 = vld [vmem:[%s2 + $0x8] sm:$0xff]
  %v49 = vld [vmem:[%s3] sm:$0xff]
  %v50 = vld [vmem:[%s3 + $0x8] sm:$0xff]
  %v51 = vld [vmem:[%s3 + $0x10] sm:$0xff]
  %v52 = vld [vmem:[%s3 + $0x18] sm:$0xff]
  %v53 = vld [vmem:[%s3 + $0x20] sm:$0xff]
  %v54 = vld [vmem:[%s3 + $0x28] sm:$0xff]
  %v55 = vld [vmem:[%s3 + $0x30] sm:$0xff]
  %v56 = vld [vmem:[%s3 + $0x38] sm:$0xff]
  %v57 = vld [vmem:[%s3 + $0x40] sm:$0xff]
  %v58 = vld [vmem:[%s3 + $0x48] sm:$0xff]
  %v59 = vld [vmem:[%s3 + $0x50] sm:$0xff]
  %v60 = vld [vmem:[%s3 + $0x58] sm:$0xff]
  %v61 = vld [vmem:[%s3 + $0x60] sm:$0xff]
  %v62 = vld [vmem:[%s3 + $0x68] sm:$0xff]
  %v63 = vld [vmem:[%s3 + $0x70] sm:$0xff]
  %v64 = vld [vmem:[%s3 + $0x78] sm:$0xff]
  %65 = vmatprep.subr.mxu0 0.0
  %66 = vmatpush1.msra.mxu0 %v49
  %67 = vmatprep.subr.mxu0 0.0
  %68 = vmatpush1.msra.mxu0 %v50
  %69 = vmatprep.subr.mxu0 0.0
  %70 = vmatpush1.msra.mxu0 %v51
  %71 = vmatprep.subr.mxu0 0.0
  %72 = vmatpush1.msra.mxu0 %v52
  %73 = vmatprep.subr.mxu0 0.0
  %74 = vmatpush1.msra.mxu0 %v53
  %75 = vmatprep.subr.mxu0 0.0
  %76 = vmatpush1.msra.mxu0 %v54
  %77 = vmatprep.subr.mxu0 0.0
  %78 = vmatpush1.msra.mxu0 %v55
  %79 = vmatprep.subr.mxu0 0.0
  %80 = vmatpush1.msra.mxu0 %v56
  %81 = vmatprep.subr.mxu0 0.0
  %82 = vmatpush1.msra.mxu0 %v57
  %83 = vmatprep.subr.mxu0 0.0
  %84 = vmatpush1.msra.mxu0 %v58
  %85 = vmatprep.subr.mxu0 0.0
  %86 = vmatpush1.msra.mxu0 %v59
  %87 = vmatprep.subr.mxu0 0.0
  %88 = vmatpush1.msra.mxu0 %v60
  %89 = vmatprep.subr.mxu0 0.0
  %90 = vmatpush1.msra.mxu0 %v61
  %91 = vmatprep.subr.mxu0 0.0
  %92 = vmatpush1.msra.mxu0 %v62
  %93 = vmatprep.subr.mxu0 0.0
  %94 = vmatpush1.msra.mxu0 %v63
  %95 = vmatprep.subr.mxu0 0.0
  %96 = vmatpush1.msra.mxu0 %v64
  %97 = vmatprep.subr.mxu0 0.0
  %98 = vmatpush1.msra.mxu0 0.0
  %99 = vmatprep.subr.mxu0 0.0
  %100 = vmatpush1.msra.mxu0 0.0
  %101 = vmatprep.subr.mxu0 0.0
  %102 = vmatpush1.msra.mxu0 0.0
  %103 = vmatprep.subr.mxu0 0.0
  %104 = vmatpush1.msra.mxu0 0.0
  %105 = vmatprep.subr.mxu0 0.0
  %106 = vmatpush1.msra.mxu0 0.0
  %107 = vmatprep.subr.mxu0 0.0
  %108 = vmatpush1.msra.mxu0 0.0
  %109 = vmatprep.subr.mxu0 0.0
  %110 = vmatpush1.msra.mxu0 0.0
  %111 = vmatprep.subr.mxu0 0.0
  %112 = vmatpush1.msra.mxu0 0.0
  %113 = vmatprep.subr.mxu0 0.0
  %114 = vmatpush1.msra.mxu0 0.0
  %115 = vmatprep.subr.mxu0 0.0
  %116 = vmatpush1.msra.mxu0 0.0
  %117 = vmatprep.subr.mxu0 0.0
  %118 = vmatpush1.msra.mxu0 0.0
  %119 = vmatprep.subr.mxu0 0.0
  %120 = vmatpush1.msra.mxu0 0.0
  %121 = vmatprep.subr.mxu0 0.0
  %122 = vmatpush1.msra.mxu0 0.0
  %123 = vmatprep.subr.mxu0 0.0
  %124 = vmatpush1.msra.mxu0 0.0
  %125 = vmatprep.subr.mxu0 0.0
  %126 = vmatpush1.msra.mxu0 0.0
  %127 = vmatprep.subr.mxu0 0.0
  %128 = vmatpush1.msra.mxu0 0.0
  %129 = vmatprep.mubr.f32.mxu0 0.0
  %130 = vmatmul.mubr.f32.gmra.mrb[0].mxu0 %v47
  %v131 = vpop.f32.mrb[0].mxu0
  %v132 = vadd.f32 0.0, %v131
  %v133 = vpop.f32.mrb[0].mxu0
  %134 = vmatprep.mubr.f32.mxu0 0.0
  %135 = vmatmul.mubr.f32.gmra.mrb[0].mxu0 %v48
  %v136 = vpop.f32.mrb[0].mxu0
  %v137 = vadd.f32 0.0, %v136
  %v138 = vpop.f32.mrb[0].mxu0
  %139 = vdwg.mxu0
  %140 = vmatprep.subr.mxu0 0.0
  %141 = vmatpush1.msra.mxu0 %v31
  %142 = vmatprep.subr.mxu0 0.0
  %143 = vmatpush1.msra.mxu0 %v32
  %144 = vmatprep.subr.mxu0 0.0
  %145 = vmatpush1.msra.mxu0 %v33
  %146 = vmatprep.subr.mxu0 0.0
  %147 = vmatpush1.msra.mxu0 %v34
  %148 = vmatprep.subr.mxu0 0.0
  %149 = vmatpush1.msra.mxu0 %v35
  %150 = vmatprep.subr.mxu0 0.0
  %151 = vmatpush1.msra.mxu0 %v36
  %152 = vmatprep.subr.mxu0 0.0
  %153 = vmatpush1.msra.mxu0 %v37
  %154 = vmatprep.subr.mxu0 0.0
  %155 = vmatpush1.msra.mxu0 %v38
  %156 = vmatprep.subr.mxu0 0.0
  %157 = vmatpush1.msra.mxu0 %v39
  %158 = vmatprep.subr.mxu0 0.0
  %159 = vmatpush1.msra.mxu0 %v40
  %160 = vmatprep.subr.mxu0 0.0
  %161 = vmatpush1.msra.mxu0 %v41
  %162 = vmatprep.subr.mxu0 0.0
  %163 = vmatpush1.msra.mxu0 %v42
  %164 = vmatprep.subr.mxu0 0.0
  %165 = vmatpush1.msra.mxu0 %v43
  %166 = vmatprep.subr.mxu0 0.0
  %167 = vmatpush1.msra.mxu0 %v44
  %168 = vmatprep.subr.mxu0 0.0
  %169 = vmatpush1.msra.mxu0 %v45
  %170 = vmatprep.subr.mxu0 0.0
  %171 = vmatpush1.msra.mxu0 %v46
  %172 = vmatprep.subr.mxu0 0.0
  %173 = vmatpush1.msra.mxu0 0.0
  %174 = vmatprep.subr.mxu0 0.0
  %175 = vmatpush1.msra.mxu0 0.0
  %176 = vmatprep.subr.mxu0 0.0
  %177 = vmatpush1.msra.mxu0 0.0
  %178 = vmatprep.subr.mxu0 0.0
  %179 = vmatpush1.msra.mxu0 0.0
  %180 = vmatprep.subr.mxu0 0.0
  %181 = vmatpush1.msra.mxu0 0.0
  %182 = vmatprep.subr.mxu0 0.0
  %183 = vmatpush1.msra.mxu0 0.0
  %184 = vmatprep.subr.mxu0 0.0
  %185 = vmatpush1.msra.mxu0 0.0
  %186 = vmatprep.subr.mxu0 0.0
  %187 = vmatpush1.msra.mxu0 0.0
  %188 = vmatprep.subr.mxu0 0.0
  %189 = vmatpush1.msra.mxu0 0.0
  %190 = vmatprep.subr.mxu0 0.0
  %191 = vmatpush1.msra.mxu0 0.0
  %192 = vmatprep.subr.mxu0 0.0
  %193 = vmatpush1.msra.mxu0 0.0
  %194 = vmatprep.subr.mxu0 0.0
  %195 = vmatpush1.msra.mxu0 0.0
  %196 = vmatprep.subr.mxu0 0.0
  %197 = vmatpush1.msra.mxu0 0.0
  %198 = vmatprep.subr.mxu0 0.0
  %199 = vmatpush1.msra.mxu0 0.0
  %200 = vmatprep.subr.mxu0 0.0
  %201 = vmatpush1.msra.mxu0 0.0
  %202 = vmatprep.subr.mxu0 0.0
  %203 = vmatpush1.msra.mxu0 0.0
  %204 = vmatprep.mubr.f32.mxu0 0.0
  %205 = vmatmul.mubr.f32.gmra.mrb[0].mxu0 %v29
  %v206 = vpop.f32.mrb[0].mxu0
  %v207 = vadd.f32 %v132, %v206
  %v208 = vpop.f32.mrb[0].mxu0
  %209 = vmatprep.mubr.f32.mxu0 0.0
  %210 = vmatmul.mubr.f32.gmra.mrb[0].mxu0 %v30
  %v211 = vpop.f32.mrb[0].mxu0
  %v212 = vadd.f32 %v137, %v211
  %v213 = vpop.f32.mrb[0].mxu0
  %214 = vdwg.mxu0
  %v215 = vld [vmem:[#allocation2] sm:$0xff]
  %v216 = vld [vmem:[#allocation2 + $0x8] sm:$0xff]
  %v217 = vadd.f32 %v215, %v207
  %v218 = vadd.f32 %v216, %v212
  %219 = vst [vmem:[#allocation2] sm:$0xff] %v217
  %220 = vst [vmem:[#allocation2 + $0x8] sm:$0xff] %v218
  // Predicated region
  $region30: #{model_forward.60} parent=0 // pred_check
    %p221 = pneg %p23
  $region31: #{model_forward.60} parent=0 // pred_check_branch
    %223 = sbr.rel (%p221) target = $region33
  $region32: #{model_forward.60} parent=0 // pred_region
    %v224 = vld [vmem:[#allocation2] sm:$0xff]
    %v225 = vld [vmem:[#allocation2 + $0x8] sm:$0xff]
    %v226 = vld [vmem:[%s4] sm:$0x1]
    %v228 = vlaneseq
    %v229 = vshrl.u32 %v228, 7
    %v230 = vsub.s32 0, %v229
    %v231 = vrot.slane %v226, %v230
    %v233 = vadd.f32 %v224, %v231
    %v234 = vadd.f32 %v225, %v231
    %v235 = vld [vmem:[%s5] sm:$0xff]
    %v236 = vld [vmem:[%s5 + $0x8] sm:$0xff]
    %v237 = vmul.f32 %v233, %v235
    %v238 = vmul.f32 %v234, %v236
    %239 = vst [vmem:[%s6] sm:$0xff] %v237
    %240 = vst [vmem:[%s6 + $0x8] sm:$0xff] %v238
  $region33: #{model_forward.60} parent=0 // pred_fallthru
    _
  // Predicated region
  $region34: #{model_forward.60} parent=0 // pred_check
    _
  $region35: #{model_forward.60} parent=0 // pred_check_branch
    %242 = sbr.rel (0) target = $region37
  $region36: #{model_forward.60} parent=0 // pred_region
    _
  $region37: #{model_forward.60} parent=0 // pred_fallthru
    _
  // Predicated region
  $region38: #{model_forward.60} parent=0 // pred_check
    _
  $region39: #{model_forward.60} parent=0 // pred_check_branch
    %244 = sbr.rel (0) target = $region41
  $region40: #{model_forward.60} parent=0 // pred_region
    _
  $region41: #{model_forward.60} parent=0 // pred_fallthru
    _

// kernel: model_forward.85
$region0: #{model_forward.85}
  #allocation0 [shape = 'u32[]', space=smem, size = 0x4, offset = 0x4, fixed_abs, tag = 'smem constant byte address 0x4 - core index']
  #allocation1 [shape = 'u32[144,128]{1,0:T(1,128)}', space=vmem, size = 0x12000, scoped, tag = 'internal scratch']
  #allocation2 [shape = 'f32[16,128]{1,0:T(8,128)}', space=vmem, size = 0x2000, scoped, tag = 'scratch operand']
  %s0 = inlined_call_operand.vmem [shape: f32[16,128], index: 0, kind: input, shape index: {}]
  %s1 = inlined_call_operand.vmem [shape: f32[128,128], index: 1, kind: input, shape index: {}]
  %s2 = inlined_call_operand.vmem [shape: f32[16,128], index: 2, kind: output, shape index: {}]
  %s3 = sld [smem:[#allocation0]]
  $region26: #{model_forward.85} parent=0
    _
  %s5 = ssub.s32 1, %s3
  %s6 = scalar_select 0, %s5, %s3
  // Predicated region
  $region2: #{model_forward.85} parent=0 // pred_check
    _
  $region3: #{model_forward.85} parent=0 // pred_check_branch
    %8 = sbr.rel (0) target = $region5
  $region4: #{model_forward.85} parent=0 // pred_region
    _
  $region5: #{model_forward.85} parent=0 // pred_fallthru
    _
  // Predicated region
  $region6: #{model_forward.85} parent=0 // pred_check
    _
  $region7: #{model_forward.85} parent=0 // pred_check_branch
    %10 = sbr.rel (0) target = $region9
  $region8: #{model_forward.85} parent=0 // pred_region
    _
  $region9: #{model_forward.85} parent=0 // pred_fallthru
    _
  %p11 = scmp.eq.s32.totalorder 0, 0
  // Predicated region
  $region10: #{model_forward.85} parent=0 // pred_check
    %p12 = pneg %p11
  $region11: #{model_forward.85} parent=0 // pred_check_branch
    %14 = sbr.rel (%p12) target = $region13
  $region12: #{model_forward.85} parent=0 // pred_region
    %15 = vst [vmem:[#allocation2] sm:$0xff] 0.0
    %16 = vst [vmem:[#allocation2 + $0x8] sm:$0xff] 0.0
  $region13: #{model_forward.85} parent=0 // pred_fallthru
    _
  %v17 = vld [vmem:[%s0] sm:$0xff]
  %v18 = vld [vmem:[%s0 + $0x8] sm:$0xff]
  %v19 = vld [vmem:[%s1] sm:$0xff]
  %v20 = vld [vmem:[%s1 + $0x8] sm:$0xff]
  %v21 = vld [vmem:[%s1 + $0x10] sm:$0xff]
  %v22 = vld [vmem:[%s1 + $0x18] sm:$0xff]
  %v23 = vld [vmem:[%s1 + $0x20] sm:$0xff]
  %v24 = vld [vmem:[%s1 + $0x28] sm:$0xff]
  %v25 = vld [vmem:[%s1 + $0x30] sm:$0xff]
  %v26 = vld [vmem:[%s1 + $0x38] sm:$0xff]
  %v27 = vld [vmem:[%s1 + $0x40] sm:$0xff]
  %v28 = vld [vmem:[%s1 + $0x48] sm:$0xff]
  %v29 = vld [vmem:[%s1 + $0x50] sm:$0xff]
  %v30 = vld [vmem:[%s1 + $0x58] sm:$0xff]
  %v31 = vld [vmem:[%s1 + $0x60] sm:$0xff]
  %v32 = vld [vmem:[%s1 + $0x68] sm:$0xff]
  %v33 = vld [vmem:[%s1 + $0x70] sm:$0xff]
  %v34 = vld [vmem:[%s1 + $0x78] sm:$0xff]
  %35 = vmatprep.subr.mxu0 0.0
  %36 = vmatpush1.msra.mxu0 %v19
  %37 = vmatprep.subr.mxu0 0.0
  %38 = vmatpush1.msra.mxu0 %v20
  %39 = vmatprep.subr.mxu0 0.0
  %40 = vmatpush1.msra.mxu0 %v21
  %41 = vmatprep.subr.mxu0 0.0
  %42 = vmatpush1.msra.mxu0 %v22
  %43 = vmatprep.subr.mxu0 0.0
  %44 = vmatpush1.msra.mxu0 %v23
  %45 = vmatprep.subr.mxu0 0.0
  %46 = vmatpush1.msra.mxu0 %v24
  %47 = vmatprep.subr.mxu0 0.0
  %48 = vmatpush1.msra.mxu0 %v25
  %49 = vmatprep.subr.mxu0 0.0
  %50 = vmatpush1.msra.mxu0 %v26
  %51 = vmatprep.subr.mxu0 0.0
  %52 = vmatpush1.msra.mxu0 %v27
  %53 = vmatprep.subr.mxu0 0.0
  %54 = vmatpush1.msra.mxu0 %v28
  %55 = vmatprep.subr.mxu0 0.0
  %56 = vmatpush1.msra.mxu0 %v29
  %57 = vmatprep.subr.mxu0 0.0
  %58 = vmatpush1.msra.mxu0 %v30
  %59 = vmatprep.subr.mxu0 0.0
  %60 = vmatpush1.msra.mxu0 %v31
  %61 = vmatprep.subr.mxu0 0.0
  %62 = vmatpush1.msra.mxu0 %v32
  %63 = vmatprep.subr.mxu0 0.0
  %64 = vmatpush1.msra.mxu0 %v33
  %65 = vmatprep.subr.mxu0 0.0
  %66 = vmatpush1.msra.mxu0 %v34
  %67 = vmatprep.subr.mxu0 0.0
  %68 = vmatpush1.msra.mxu0 0.0
  %69 = vmatprep.subr.mxu0 0.0
  %70 = vmatpush1.msra.mxu0 0.0
  %71 = vmatprep.subr.mxu0 0.0
  %72 = vmatpush1.msra.mxu0 0.0
  %73 = vmatprep.subr.mxu0 0.0
  %74 = vmatpush1.msra.mxu0 0.0
  %75 = vmatprep.subr.mxu0 0.0
  %76 = vmatpush1.msra.mxu0 0.0
  %77 = vmatprep.subr.mxu0 0.0
  %78 = vmatpush1.msra.mxu0 0.0
  %79 = vmatprep.subr.mxu0 0.0
  %80 = vmatpush1.msra.mxu0 0.0
  %81 = vmatprep.subr.mxu0 0.0
  %82 = vmatpush1.msra.mxu0 0.0
  %83 = vmatprep.subr.mxu0 0.0
  %84 = vmatpush1.msra.mxu0 0.0
  %85 = vmatprep.subr.mxu0 0.0
  %86 = vmatpush1.msra.mxu0 0.0
  %87 = vmatprep.subr.mxu0 0.0
  %88 = vmatpush1.msra.mxu0 0.0
  %89 = vmatprep.subr.mxu0 0.0
  %90 = vmatpush1.msra.mxu0 0.0
  %91 = vmatprep.subr.mxu0 0.0
  %92 = vmatpush1.msra.mxu0 0.0
  %93 = vmatprep.subr.mxu0 0.0
  %94 = vmatpush1.msra.mxu0 0.0
  %95 = vmatprep.subr.mxu0 0.0
  %96 = vmatpush1.msra.mxu0 0.0
  %97 = vmatprep.subr.mxu0 0.0
  %98 = vmatpush1.msra.mxu0 0.0
  %99 = vmatprep.mubr.f32.mxu0 0.0
  %100 = vmatmul.mubr.f32.gmra.mrb[0].mxu0 %v17
  %v101 = vpop.f32.mrb[0].mxu0
  %v102 = vadd.f32 0.0, %v101
  %v103 = vpop.f32.mrb[0].mxu0
  %104 = vmatprep.mubr.f32.mxu0 0.0
  %105 = vmatmul.mubr.f32.gmra.mrb[0].mxu0 %v18
  %v106 = vpop.f32.mrb[0].mxu0
  %v107 = vadd.f32 0.0, %v106
  %v108 = vpop.f32.mrb[0].mxu0
  %109 = vdwg.mxu0
  %v110 = vld [vmem:[#allocation2] sm:$0xff]
  %v111 = vld [vmem:[#allocation2 + $0x8] sm:$0xff]
  %v112 = vadd.f32 %v110, %v102
  %v113 = vadd.f32 %v111, %v107
  %114 = vst [vmem:[#allocation2] sm:$0xff] %v112
  %115 = vst [vmem:[#allocation2 + $0x8] sm:$0xff] %v113
  // Predicated region
  $region14: #{model_forward.85} parent=0 // pred_check
    %p116 = pneg %p11
  $region15: #{model_forward.85} parent=0 // pred_check_branch
    %118 = sbr.rel (%p116) target = $region17
  $region16: #{model_forward.85} parent=0 // pred_region
    %v119 = vld [vmem:[#allocation2] sm:$0xff]
    %v120 = vld [vmem:[#allocation2 + $0x8] sm:$0xff]
    %121 = vst [vmem:[%s2] sm:$0xff] %v119
    %122 = vst [vmem:[%s2 + $0x8] sm:$0xff] %v120
  $region17: #{model_forward.85} parent=0 // pred_fallthru
    _
  // Predicated region
  $region18: #{model_forward.85} parent=0 // pred_check
    _
  $region19: #{model_forward.85} parent=0 // pred_check_branch
    %124 = sbr.rel (0) target = $region21
  $region20: #{model_forward.85} parent=0 // pred_region
    _
  $region21: #{model_forward.85} parent=0 // pred_fallthru
    _
  // Predicated region
  $region22: #{model_forward.85} parent=0 // pred_check
    _
  $region23: #{model_forward.85} parent=0 // pred_check_branch
    %126 = sbr.rel (0) target = $region25
  $region24: #{model_forward.85} parent=0 // pred_region
    _
  $region25: #{model_forward.85} parent=0 // pred_fallthru
    _

// kernel: model_forward.58
$region0: #{model_forward.58}
  #allocation0 [shape = 'u32[]', space=smem, size = 0x4, offset = 0x4, fixed_abs, tag = 'smem constant byte address 0x4 - core index']
  #allocation1 [shape = 'u32[144,128]{1,0:T(1,128)}', space=vmem, size = 0x12000, scoped, tag = 'internal scratch']
  #allocation2 [shape = 'f32[24,128]{1,0:T(8,128)}', space=vmem, size = 0x3000, scoped, tag = 'scratch operand']
  %s0 = inlined_call_operand.vmem [shape: f32[24,128], index: 0, kind: input, shape index: {}]
  %s1 = inlined_call_operand.vmem [shape: f32[128,128], index: 1, kind: input, shape index: {}]
  %s2 = inlined_call_operand.vmem [shape: f32[24,128], index: 2, kind: input, shape index: {}]
  %s3 = inlined_call_operand.vmem [shape: f32[128,128], index: 3, kind: input, shape index: {}]
  %s4 = inlined_call_operand.vmem [shape: f32[1,128], index: 4, kind: input, shape index: {}]
  %s5 = inlined_call_operand.vmem [shape: f32[24,128], index: 5, kind: output, shape index: {}]
  %s6 = sld [smem:[#allocation0]]
  $region38: #{model_forward.58} parent=0
    _
  %s8 = ssub.s32 1, %s6
  %s9 = scalar_select 0, %s8, %s6
  // Predicated region
  $region2: #{model_forward.58} parent=0 // pred_check
    _
  $region3: #{model_forward.58} parent=0 // pred_check_branch
    %11 = sbr.rel (0) target = $region5
  $region4: #{model_forward.58} parent=0 // pred_region
    _
  $region5: #{model_forward.58} parent=0 // pred_fallthru
    _
  // Predicated region
  $region6: #{model_forward.58} parent=0 // pred_check
    _
  $region7: #{model_forward.58} parent=0 // pred_check_branch
    %13 = sbr.rel (0) target = $region9
  $region8: #{model_forward.58} parent=0 // pred_region
    _
  $region9: #{model_forward.58} parent=0 // pred_fallthru
    _
  // Predicated region
  $region10: #{model_forward.58} parent=0 // pred_check
    _
  $region11: #{model_forward.58} parent=0 // pred_check_branch
    %15 = sbr.rel (0) target = $region13
  $region12: #{model_forward.58} parent=0 // pred_region
    _
  $region13: #{model_forward.58} parent=0 // pred_fallthru
    _
  // Predicated region
  $region14: #{model_forward.58} parent=0 // pred_check
    _
  $region15: #{model_forward.58} parent=0 // pred_check_branch
    %17 = sbr.rel (0) target = $region17
  $region16: #{model_forward.58} parent=0 // pred_region
    _
  $region17: #{model_forward.58} parent=0 // pred_fallthru
    _
  // Predicated region
  $region18: #{model_forward.58} parent=0 // pred_check
    _
  $region19: #{model_forward.58} parent=0 // pred_check_branch
    %19 = sbr.rel (0) target = $region21
  $region20: #{model_forward.58} parent=0 // pred_region
    _
  $region21: #{model_forward.58} parent=0 // pred_fallthru
    _
  %p20 = scmp.eq.s32.totalorder 0, 0
  // Predicated region
  $region22: #{model_forward.58} parent=0 // pred_check
    %p21 = pneg %p20
  $region23: #{model_forward.58} parent=0 // pred_check_branch
    %23 = sbr.rel (%p21) target = $region25
  $region24: #{model_forward.58} parent=0 // pred_region
    %24 = vst [vmem:[#allocation2] sm:$0xff] 0.0
    %25 = vst [vmem:[#allocation2 + $0x8] sm:$0xff] 0.0
    %26 = vst [vmem:[#allocation2 + $0x10] sm:$0xff] 0.0
  $region25: #{model_forward.58} parent=0 // pred_fallthru
    _
  %v27 = vld [vmem:[%s0] sm:$0xff]
  %v28 = vld [vmem:[%s0 + $0x8] sm:$0xff]
  %v29 = vld [vmem:[%s0 + $0x10] sm:$0xff]
  %v30 = vld [vmem:[%s1] sm:$0xff]
  %v31 = vld [vmem:[%s1 + $0x8] sm:$0xff]
  %v32 = vld [vmem:[%s1 + $0x10] sm:$0xff]
  %v33 = vld [vmem:[%s1 + $0x18] sm:$0xff]
  %v34 = vld [vmem:[%s1 + $0x20] sm:$0xff]
  %v35 = vld [vmem:[%s1 + $0x28] sm:$0xff]
  %v36 = vld [vmem:[%s1 + $0x30] sm:$0xff]
  %v37 = vld [vmem:[%s1 + $0x38] sm:$0xff]
  %v38 = vld [vmem:[%s1 + $0x40] sm:$0xff]
  %v39 = vld [vmem:[%s1 + $0x48] sm:$0xff]
  %v40 = vld [vmem:[%s1 + $0x50] sm:$0xff]
  %v41 = vld [vmem:[%s1 + $0x58] sm:$0xff]
  %v42 = vld [vmem:[%s1 + $0x60] sm:$0xff]
  %v43 = vld [vmem:[%s1 + $0x68] sm:$0xff]
  %v44 = vld [vmem:[%s1 + $0x70] sm:$0xff]
  %v45 = vld [vmem:[%s1 + $0x78] sm:$0xff]
  %v46 = vld [vmem:[%s2] sm:$0xff]
  %v47 = vld [vmem:[%s2 + $0x8] sm:$0xff]
  %v48 = vld [vmem:[%s2 + $0x10] sm:$0xff]
  %v49 = vld [vmem:[%s3] sm:$0xff]
  %v50 = vld [vmem:[%s3 + $0x8] sm:$0xff]
  %v51 = vld [vmem:[%s3 + $0x10] sm:$0xff]
  %v52 = vld [vmem:[%s3 + $0x18] sm:$0xff]
  %v53 = vld [vmem:[%s3 + $0x20] sm:$0xff]
  %v54 = vld [vmem:[%s3 + $0x28] sm:$0xff]
  %v55 = vld [vmem:[%s3 + $0x30] sm:$0xff]
  %v56 = vld [vmem:[%s3 + $0x38] sm:$0xff]
  %v57 = vld [vmem:[%s3 + $0x40] sm:$0xff]
  %v58 = vld [vmem:[%s3 + $0x48] sm:$0xff]
  %v59 = vld [vmem:[%s3 + $0x50] sm:$0xff]
  %v60 = vld [vmem:[%s3 + $0x58] sm:$0xff]
  %v61 = vld [vmem:[%s3 + $0x60] sm:$0xff]
  %v62 = vld [vmem:[%s3 + $0x68] sm:$0xff]
  %v63 = vld [vmem:[%s3 + $0x70] sm:$0xff]
  %v64 = vld [vmem:[%s3 + $0x78] sm:$0xff]
  %65 = vmatprep.subr.mxu0 0.0
  %66 = vmatpush1.msra.mxu0 %v49
  %67 = vmatprep.subr.mxu0 0.0
  %68 = vmatpush1.msra.mxu0 %v50
  %69 = vmatprep.subr.mxu0 0.0
  %70 = vmatpush1.msra.mxu0 %v51
  %71 = vmatprep.subr.mxu0 0.0
  %72 = vmatpush1.msra.mxu0 %v52
  %73 = vmatprep.subr.mxu0 0.0
  %74 = vmatpush1.msra.mxu0 %v53
  %75 = vmatprep.subr.mxu0 0.0
  %76 = vmatpush1.msra.mxu0 %v54
  %77 = vmatprep.subr.mxu0 0.0
  %78 = vmatpush1.msra.mxu0 %v55
  %79 = vmatprep.subr.mxu0 0.0
  %80 = vmatpush1.msra.mxu0 %v56
  %81 = vmatprep.subr.mxu0 0.0
  %82 = vmatpush1.msra.mxu0 %v57
  %83 = vmatprep.subr.mxu0 0.0
  %84 = vmatpush1.msra.mxu0 %v58
  %85 = vmatprep.subr.mxu0 0.0
  %86 = vmatpush1.msra.mxu0 %v59
  %87 = vmatprep.subr.mxu0 0.0
  %88 = vmatpush1.msra.mxu0 %v60
  %89 = vmatprep.subr.mxu0 0.0
  %90 = vmatpush1.msra.mxu0 %v61
  %91 = vmatprep.subr.mxu0 0.0
  %92 = vmatpush1.msra.mxu0 %v62
  %93 = vmatprep.subr.mxu0 0.0
  %94 = vmatpush1.msra.mxu0 %v63
  %95 = vmatprep.subr.mxu0 0.0
  %96 = vmatpush1.msra.mxu0 %v64
  %97 = vmatprep.subr.mxu0 0.0
  %98 = vmatpush1.msra.mxu0 0.0
  %99 = vmatprep.subr.mxu0 0.0
  %100 = vmatpush1.msra.mxu0 0.0
  %101 = vmatprep.subr.mxu0 0.0
  %102 = vmatpush1.msra.mxu0 0.0
  %103 = vmatprep.subr.mxu0 0.0
  %104 = vmatpush1.msra.mxu0 0.0
  %105 = vmatprep.subr.mxu0 0.0
  %106 = vmatpush1.msra.mxu0 0.0
  %107 = vmatprep.subr.mxu0 0.0
  %108 = vmatpush1.msra.mxu0 0.0
  %109 = vmatprep.subr.mxu0 0.0
  %110 = vmatpush1.msra.mxu0 0.0
  %111 = vmatprep.subr.mxu0 0.0
  %112 = vmatpush1.msra.mxu0 0.0
  %113 = vmatprep.subr.mxu0 0.0
  %114 = vmatpush1.msra.mxu0 0.0
  %115 = vmatprep.subr.mxu0 0.0
  %116 = vmatpush1.msra.mxu0 0.0
  %117 = vmatprep.subr.mxu0 0.0
  %118 = vmatpush1.msra.mxu0 0.0
  %119 = vmatprep.subr.mxu0 0.0
  %120 = vmatpush1.msra.mxu0 0.0
  %121 = vmatprep.subr.mxu0 0.0
  %122 = vmatpush1.msra.mxu0 0.0
  %123 = vmatprep.subr.mxu0 0.0
  %124 = vmatpush1.msra.mxu0 0.0
  %125 = vmatprep.subr.mxu0 0.0
  %126 = vmatpush1.msra.mxu0 0.0
  %127 = vmatprep.subr.mxu0 0.0
  %128 = vmatpush1.msra.mxu0 0.0
  %129 = vmatprep.mubr.f32.mxu0 0.0
  %130 = vmatmul.mubr.f32.gmra.mrb[0].mxu0 %v46
  %v131 = vpop.f32.mrb[0].mxu0
  %v132 = vadd.f32 0.0, %v131
  %v133 = vpop.f32.mrb[0].mxu0
  %134 = vmatprep.mubr.f32.mxu0 0.0
  %135 = vmatmul.mubr.f32.gmra.mrb[0].mxu0 %v47
  %v136 = vpop.f32.mrb[0].mxu0
  %v137 = vadd.f32 0.0, %v136
  %v138 = vpop.f32.mrb[0].mxu0
  %139 = vmatprep.mubr.f32.mxu0 0.0
  %140 = vmatmul.mubr.f32.gmra.mrb[0].mxu0 %v48
  %v141 = vpop.f32.mrb[0].mxu0
  %v142 = vadd.f32 0.0, %v141
  %v143 = vpop.f32.mrb[0].mxu0
  %144 = vdwg.mxu0
  %145 = vmatprep.subr.mxu0 0.0
  %146 = vmatpush1.msra.mxu0 %v30
  %147 = vmatprep.subr.mxu0 0.0
  %148 = vmatpush1.msra.mxu0 %v31
  %149 = vmatprep.subr.mxu0 0.0
  %150 = vmatpush1.msra.mxu0 %v32
  %151 = vmatprep.subr.mxu0 0.0
  %152 = vmatpush1.msra.mxu0 %v33
  %153 = vmatprep.subr.mxu0 0.0
  %154 = vmatpush1.msra.mxu0 %v34
  %155 = vmatprep.subr.mxu0 0.0
  %156 = vmatpush1.msra.mxu0 %v35
  %157 = vmatprep.subr.mxu0 0.0
  %158 = vmatpush1.msra.mxu0 %v36
  %159 = vmatprep.subr.mxu0 0.0
  %160 = vmatpush1.msra.mxu0 %v37
  %161 = vmatprep.subr.mxu0 0.0
  %162 = vmatpush1.msra.mxu0 %v38
  %163 = vmatprep.subr.mxu0 0.0
  %164 = vmatpush1.msra.mxu0 %v39
  %165 = vmatprep.subr.mxu0 0.0
  %166 = vmatpush1.msra.mxu0 %v40
  %167 = vmatprep.subr.mxu0 0.0
  %168 = vmatpush1.msra.mxu0 %v41
  %169 = vmatprep.subr.mxu0 0.0
  %170 = vmatpush1.msra.mxu0 %v42
  %171 = vmatprep.subr.mxu0 0.0
  %172 = vmatpush1.msra.mxu0 %v43
  %173 = vmatprep.subr.mxu0 0.0
  %174 = vmatpush1.msra.mxu0 %v44
  %175 = vmatprep.subr.mxu0 0.0
  %176 = vmatpush1.msra.mxu0 %v45
  %177 = vmatprep.subr.mxu0 0.0
  %178 = vmatpush1.msra.mxu0 0.0
  %179 = vmatprep.subr.mxu0 0.0
  %180 = vmatpush1.msra.mxu0 0.0
  %181 = vmatprep.subr.mxu0 0.0
  %182 = vmatpush1.msra.mxu0 0.0
  %183 = vmatprep.subr.mxu0 0.0
  %184 = vmatpush1.msra.mxu0 0.0
  %185 = vmatprep.subr.mxu0 0.0
  %186 = vmatpush1.msra.mxu0 0.0
  %187 = vmatprep.subr.mxu0 0.0
  %188 = vmatpush1.msra.mxu0 0.0
  %189 = vmatprep.subr.mxu0 0.0
  %190 = vmatpush1.msra.mxu0 0.0
  %191 = vmatprep.subr.mxu0 0.0
  %192 = vmatpush1.msra.mxu0 0.0
  %193 = vmatprep.subr.mxu0 0.0
  %194 = vmatpush1.msra.mxu0 0.0
  %195 = vmatprep.subr.mxu0 0.0
  %196 = vmatpush1.msra.mxu0 0.0
  %197 = vmatprep.subr.mxu0 0.0
  %198 = vmatpush1.msra.mxu0 0.0
  %199 = vmatprep.subr.mxu0 0.0
  %200 = vmatpush1.msra.mxu0 0.0
  %201 = vmatprep.subr.mxu0 0.0
  %202 = vmatpush1.msra.mxu0 0.0
  %203 = vmatprep.subr.mxu0 0.0
  %204 = vmatpush1.msra.mxu0 0.0
  %205 = vmatprep.subr.mxu0 0.0
  %206 = vmatpush1.msra.mxu0 0.0
  %207 = vmatprep.subr.mxu0 0.0
  %208 = vmatpush1.msra.mxu0 0.0
  %209 = vmatprep.mubr.f32.mxu0 0.0
  %210 = vmatmul.mubr.f32.gmra.mrb[0].mxu0 %v27
  %v211 = vpop.f32.mrb[0].mxu0
  %v212 = vadd.f32 %v132, %v211
  %v213 = vpop.f32.mrb[0].mxu0
  %214 = vmatprep.mubr.f32.mxu0 0.0
  %215 = vmatmul.mubr.f32.gmra.mrb[0].mxu0 %v28
  %v216 = vpop.f32.mrb[0].mxu0
  %v217 = vadd.f32 %v137, %v216
  %v218 = vpop.f32.mrb[0].mxu0
  %219 = vmatprep.mubr.f32.mxu0 0.0
  %220 = vmatmul.mubr.f32.gmra.mrb[0].mxu0 %v29
  %v221 = vpop.f32.mrb[0].mxu0
  %v222 = vadd.f32 %v142, %v221
  %v223 = vpop.f32.mrb[0].mxu0
  %224 = vdwg.mxu0
  %v225 = vld [vmem:[#allocation2] sm:$0xff]
  %v226 = vld [vmem:[#allocation2 + $0x8] sm:$0xff]
  %v227 = vld [vmem:[#allocation2 + $0x10] sm:$0xff]
  %v228 = vadd.f32 %v225, %v212
  %v229 = vadd.f32 %v226, %v217
  %v230 = vadd.f32 %v227, %v222
  %231 = vst [vmem:[#allocation2] sm:$0xff] %v228
  %232 = vst [vmem:[#allocation2 + $0x8] sm:$0xff] %v229
  %233 = vst [vmem:[#allocation2 + $0x10] sm:$0xff] %v230
  // Predicated region
  $region26: #{model_forward.58} parent=0 // pred_check
    %p234 = pneg %p20
  $region27: #{model_forward.58} parent=0 // pred_check_branch
    %236 = sbr.rel (%p234) target = $region29
  $region28: #{model_forward.58} parent=0 // pred_region
    %v237 = vld [vmem:[#allocation2] sm:$0xff]
    %v238 = vld [vmem:[#allocation2 + $0x8] sm:$0xff]
    %v239 = vld [vmem:[#allocation2 + $0x10] sm:$0xff]
    %v240 = vld [vmem:[%s4] sm:$0x1]
    %v242 = vlaneseq
    %v243 = vshrl.u32 %v242, 7
    %v244 = vsub.s32 0, %v243
    %v245 = vrot.slane %v240, %v244
    %v247 = vadd.f32 %v237, %v245
    %v248 = vadd.f32 %v238, %v245
    %v249 = vadd.f32 %v239, %v245
    %v250 = vmax.f32 %v247, 0.0
    %v251 = vmax.f32 %v248, 0.0
    %v252 = vmax.f32 %v249, 0.0
    %253 = vst [vmem:[%s5] sm:$0xff] %v250
    %254 = vst [vmem:[%s5 + $0x8] sm:$0xff] %v251
    %255 = vst [vmem:[%s5 + $0x10] sm:$0xff] %v252
  $region29: #{model_forward.58} parent=0 // pred_fallthru
    _
  // Predicated region
  $region30: #{model_forward.58} parent=0 // pred_check
    _
  $region31: #{model_forward.58} parent=0 // pred_check_branch
    %257 = sbr.rel (0) target = $region33
  $region32: #{model_forward.58} parent=0 // pred_region
    _
  $region33: #{model_forward.58} parent=0 // pred_fallthru
    _
  // Predicated region
  $region34: #{model_forward.58} parent=0 // pred_check
    _
  $region35: #{model_forward.58} parent=0 // pred_check_branch
    %259 = sbr.rel (0) target = $region37
  $region36: #{model_forward.58} parent=0 // pred_region
    _
  $region37: #{model_forward.58} parent=0 // pred_fallthru
    _

// kernel: model_forward.59
$region0: #{model_forward.59}
  #allocation0 [shape = 'u32[]', space=smem, size = 0x4, offset = 0x4, fixed_abs, tag = 'smem constant byte address 0x4 - core index']
  #allocation1 [shape = 'u32[144,128]{1,0:T(1,128)}', space=vmem, size = 0x12000, scoped, tag = 'internal scratch']
  #allocation2 [shape = 'f32[1,1]{1,0:T(1,128)S(1)}', space=vmem, size = 0x200, scoped, tag = 'scoped memory for model_forward.59']
  %s0 = inlined_call_operand.vmem [shape: f32[24,128], index: 0, kind: input, shape index: {}]
  %s1 = inlined_call_operand.vmem [shape: f32[1,128], index: 1, kind: input, shape index: {}]
  %s2 = inlined_call_operand.<no memory space> [shape: f32[1,1], index: 2, kind: input, shape index: {}]
  %s3 = inlined_call_operand.vmem [shape: f32[24,128], index: 3, kind: output, shape index: {}]
  %s4 = sld [smem:[#allocation0]]
  $region22: #{model_forward.59} parent=0
    _
  %s6 = ssub.s32 1, %s4
  %s7 = scalar_select 0, %s6, %s4
  %v8 = vstv %s2
  %9 = vst [vmem:[#allocation2] sm:$0x1] %v8
  // Predicated region
  $region2: #{model_forward.59} parent=0 // pred_check
    _
  $region3: #{model_forward.59} parent=0 // pred_check_branch
    %11 = sbr.rel (0) target = $region5
  $region4: #{model_forward.59} parent=0 // pred_region
    _
  $region5: #{model_forward.59} parent=0 // pred_fallthru
    _
  // Predicated region
  $region6: #{model_forward.59} parent=0 // pred_check
    _
  $region7: #{model_forward.59} parent=0 // pred_check_branch
    %13 = sbr.rel (0) target = $region9
  $region8: #{model_forward.59} parent=0 // pred_region
    _
  $region9: #{model_forward.59} parent=0 // pred_fallthru
    _
  // Predicated region
  $region10: #{model_forward.59} parent=0 // pred_check
    _
  $region11: #{model_forward.59} parent=0 // pred_check_branch
    %15 = sbr.rel (0) target = $region13
  $region12: #{model_forward.59} parent=0 // pred_region
    _
  $region13: #{model_forward.59} parent=0 // pred_fallthru
    _
  %v16 = vld [vmem:[%s0] sm:$0xff]
  %v17 = vld [vmem:[%s0 + $0x8] sm:$0xff]
  %v18 = vld [vmem:[%s0 + $0x10] sm:$0xff]
  %v19 = vld [vmem:[%s1] sm:$0x1]
  %v21 = vlaneseq
  %v22 = vshrl.u32 %v21, 7
  %v23 = vsub.s32 0, %v22
  %v24 = vrot.slane %v19, %v23
  %v26 = vmul.f32 %v16, %v24
  %v27 = vmul.f32 %v17, %v24
  %v28 = vmul.f32 %v18, %v24
  %29 = vadd.xlane.f32.xlu0 %v26
  %v30 = vpop.xlane.xlu0 %29
  %31 = vadd.xlane.f32.xlu0 %v27
  %v32 = vpop.xlane.xlu0 %31
  %33 = vadd.xlane.f32.xlu0 %v28
  %v34 = vpop.xlane.xlu0 %33
  %v35 = vld [vmem:[#allocation2] sm:$0x1]
  %v37 = vlaneseq
  %v38 = vshrl.u32 %v37, 7
  %v39 = vsub.s32 0, %v38
  %v40 = vrot.slane %v35, %v39
  %v42 = vadd.f32 %v30, %v40
  %v43 = vadd.f32 %v32, %v40
  %v44 = vadd.f32 %v34, %v40
  %v45 = vlaneseq
  %v46 = vshrl.u32 %v45, 7
  %v47 = vadd.s32 %v46, 8
  %v48 = vadd.s32 %v46, 16
  %vm49 = vcmp.lt.s32.totalorder %v46, 24
  %vm50 = vcmp.lt.s32.totalorder %v47, 24
  %vm51 = vcmp.lt.s32.totalorder %v48, 24
  %v52 = vsel %vm49, %v42, inf
  %v53 = vsel %vm50, %v43, inf
  %v54 = vsel %vm51, %v44, inf
  %vm55 = vcmask 7168
  %v56 = vsel %vm55, %v52, inf
  %v57 = vsel %vm55, %v53, inf
  %v58 = vsel %vm55, %v54, inf
  %v59 = vmin.f32 %v56, %v57
  %v60 = vmin.f32 %v59, %v58
  %61 = vmin.xlane.f32.xlu0 %v60
  %v62 = vpop.xlane.xlu0 %61
  %v63 = vrot.slane %v62, 4
  %v64 = vmin.f32 %v62, %v63
  %v65 = vrot.slane %v64, 2
  %v66 = vmin.f32 %v64, %v65
  %v67 = vrot.slane %v66, 1
  %v68 = vmin.f32 %v66, %v67
  %s69 = vtos %v68
  %v70 = vsel %vm49, %v42, -inf
  %v71 = vsel %vm50, %v43, -inf
  %v72 = vsel %vm51, %v44, -inf
  %v73 = vsel %vm55, %v70, -inf
  %v74 = vsel %vm55, %v71, -inf
  %v75 = vsel %vm55, %v72, -inf
  %v76 = vmax.f32 %v73, %v74
  %v77 = vmax.f32 %v76, %v75
  %78 = vmax.xlane.f32.xlu0 %v77
  %v79 = vpop.xlane.xlu0 %78
  %v80 = vrot.slane %v79, 4
  %v81 = vmax.f32 %v79, %v80
  %v82 = vrot.slane %v81, 2
  %v83 = vmax.f32 %v81, %v82
  %v84 = vrot.slane %v83, 1
  %v85 = vmax.f32 %v83, %v84
  %s86 = vtos %v85
  %s87 = ssub.f32 %s86, %s69
  %p88 = scmp.eq.f32.partialorder %s87, 0.0
  %s89 = scalar_select %p88, 1.0, %s87
  %v90 = vstv %s69
  %v91 = vsub.f32 %v42, %v90
  %v92 = vsub.f32 %v43, %v90
  %v93 = vsub.f32 %v44, %v90
  %v94 = vstv %s89
  %v95 = vrcp.pop %v94
  %v96 = vmul.f32 %v91, %v95
  %v97 = vmul.f32 %v92, %v95
  %v98 = vmul.f32 %v93, %v95
  %v99 = vsel %vm49, %v96, 0.0
  %v100 = vsel %vm50, %v97, 0.0
  %v101 = vsel %vm51, %v98, 0.0
  %103 = vset.pattern.permute.xlu0 0
  %104 = vperm.xlu0 %103, %v99
  %v105 = vpop.permute.xlu0 %104
  %108 = vset.pattern.permute.xlu0 0
  %109 = vperm.xlu0 %108, %v100
  %v110 = vpop.permute.xlu0 %109
  %113 = vset.pattern.permute.xlu0 0
  %114 = vperm.xlu0 %113, %v101
  %v115 = vpop.permute.xlu0 %114
  %117 = vst [vmem:[%s3] sm:$0xff] %v105
  %118 = vst [vmem:[%s3 + $0x8] sm:$0xff] %v110
  %119 = vst [vmem:[%s3 + $0x10] sm:$0xff] %v115
  // Predicated region
  $region14: #{model_forward.59} parent=0 // pred_check
    _
  $region15: #{model_forward.59} parent=0 // pred_check_branch
    %121 = sbr.rel (0) target = $region17
  $region16: #{model_forward.59} parent=0 // pred_region
    _
  $region17: #{model_forward.59} parent=0 // pred_fallthru
    _
  // Predicated region
  $region18: #{model_forward.59} parent=0 // pred_check
    _
  $region19: #{model_forward.59} parent=0 // pred_check_branch
    %123 = sbr.rel (0) target = $region21
  $region20: #{model_forward.59} parent=0 // pred_region
    _
  $region21: #{model_forward.59} parent=0 // pred_fallthru
    _

// kernel: model_forward.86
$region0: #{model_forward.86}
  #allocation0 [shape = 'u32[]', space=smem, size = 0x4, offset = 0x4, fixed_abs, tag = 'smem constant byte address 0x4 - core index']
  #allocation1 [shape = 'u32[144,128]{1,0:T(1,128)}', space=vmem, size = 0x12000, scoped, tag = 'internal scratch']
  #allocation2 [shape = 'f32[16,128]{1,0:T(8,128)}', space=vmem, size = 0x2000, scoped, tag = 'scratch operand']
  %s0 = inlined_call_operand.vmem [shape: bf16[16,128], index: 0, kind: input, shape index: {}]
  %s1 = inlined_call_operand.vmem [shape: bf16[128,128], index: 1, kind: input, shape index: {}]
  %s2 = inlined_call_operand.vmem [shape: f32[1,128], index: 2, kind: input, shape index: {}]
  %s3 = inlined_call_operand.vmem [shape: f32[16,128], index: 3, kind: output, shape index: {}]
  %s4 = sld [smem:[#allocation0]]
  $region30: #{model_forward.86} parent=0
    _
  %s6 = ssub.s32 1, %s4
  %s7 = scalar_select 0, %s6, %s4
  // Predicated region
  $region2: #{model_forward.86} parent=0 // pred_check
    _
  $region3: #{model_forward.86} parent=0 // pred_check_branch
    %9 = sbr.rel (0) target = $region5
  $region4: #{model_forward.86} parent=0 // pred_region
    _
  $region5: #{model_forward.86} parent=0 // pred_fallthru
    _
  // Predicated region
  $region6: #{model_forward.86} parent=0 // pred_check
    _
  $region7: #{model_forward.86} parent=0 // pred_check_branch
    %11 = sbr.rel (0) target = $region9
  $region8: #{model_forward.86} parent=0 // pred_region
    _
  $region9: #{model_forward.86} parent=0 // pred_fallthru
    _
  // Predicated region
  $region10: #{model_forward.86} parent=0 // pred_check
    _
  $region11: #{model_forward.86} parent=0 // pred_check_branch
    %13 = sbr.rel (0) target = $region13
  $region12: #{model_forward.86} parent=0 // pred_region
    _
  $region13: #{model_forward.86} parent=0 // pred_fallthru
    _
  %p15 = scmp.eq.s32.totalorder 0, 0
  // Predicated region
  $region14: #{model_forward.86} parent=0 // pred_check
    %p16 = pneg %p15
  $region15: #{model_forward.86} parent=0 // pred_check_branch
    %18 = sbr.rel (%p16) target = $region17
  $region16: #{model_forward.86} parent=0 // pred_region
    %19 = vst [vmem:[#allocation2] sm:$0xff] 0.0
    %20 = vst [vmem:[#allocation2 + $0x8] sm:$0xff] 0.0
  $region17: #{model_forward.86} parent=0 // pred_fallthru
    _
  %v21 = vld [vmem:[%s0] sm:$0xf]
  %v22 = vld [vmem:[%s0 + $0x4] sm:$0xf]
  %v23 = vld [vmem:[%s1] sm:$0xf]
  %v24 = vld [vmem:[%s1 + $0x4] sm:$0xf]
  %v25 = vld [vmem:[%s1 + $0x8] sm:$0xf]
  %v26 = vld [vmem:[%s1 + $0xc] sm:$0xf]
  %v27 = vld [vmem:[%s1 + $0x10] sm:$0xf]
  %v28 = vld [vmem:[%s1 + $0x14] sm:$0xf]
  %v29 = vld [vmem:[%s1 + $0x18] sm:$0xf]
  %v30 = vld [vmem:[%s1 + $0x1c] sm:$0xf]
  %v31 = vld [vmem:[%s1 + $0x20] sm:$0xf]
  %v32 = vld [vmem:[%s1 + $0x24] sm:$0xf]
  %v33 = vld [vmem:[%s1 + $0x28] sm:$0xf]
  %v34 = vld [vmem:[%s1 + $0x2c] sm:$0xf]
  %v35 = vld [vmem:[%s1 + $0x30] sm:$0xf]
  %v36 = vld [vmem:[%s1 + $0x34] sm:$0xf]
  %v37 = vld [vmem:[%s1 + $0x38] sm:$0xf]
  %v38 = vld [vmem:[%s1 + $0x3c] sm:$0xf]
  %v41 = vunpack.c.l.b16 %v21
  %v42 = vunpack.c.l.b16 %v22
  %v43 = vpack.c.b16 %v42, %v41
  %v61 = vunpack.c.l.b16 %v23
  %v62 = vunpack.c.l.b16 %v24
  %v63 = vunpack.c.l.b16 %v25
  %v64 = vunpack.c.l.b16 %v26
  %v65 = vunpack.c.l.b16 %v27
  %v66 = vunpack.c.l.b16 %v28
  %v67 = vunpack.c.l.b16 %v29
  %v68 = vunpack.c.l.b16 %v30
  %v69 = vunpack.c.l.b16 %v31
  %v70 = vunpack.c.l.b16 %v32
  %v71 = vunpack.c.l.b16 %v33
  %v72 = vunpack.c.l.b16 %v34
  %v73 = vunpack.c.l.b16 %v35
  %v74 = vunpack.c.l.b16 %v36
  %v75 = vunpack.c.l.b16 %v37
  %v76 = vunpack.c.l.b16 %v38
  %v77 = vpack.c.b16 %v62, %v61
  %v78 = vpack.c.b16 %v64, %v63
  %v79 = vpack.c.b16 %v66, %v65
  %v80 = vpack.c.b16 %v68, %v67
  %v81 = vpack.c.b16 %v70, %v69
  %v82 = vpack.c.b16 %v72, %v71
  %v83 = vpack.c.b16 %v74, %v73
  %v84 = vpack.c.b16 %v76, %v75
  %93 = vmatprep.subr.bf16.mxu0 0
  %94 = vmatpush1.bf16.msra.mxu0 %v77
  %95 = vmatprep.subr.bf16.mxu0 0
  %96 = vmatpush1.bf16.msra.mxu0 %v78
  %97 = vmatprep.subr.bf16.mxu0 0
  %98 = vmatpush1.bf16.msra.mxu0 %v79
  %99 = vmatprep.subr.bf16.mxu0 0
  %100 = vmatpush1.bf16.msra.mxu0 %v80
  %101 = vmatprep.subr.bf16.mxu0 0
  %102 = vmatpush1.bf16.msra.mxu0 %v81
  %103 = vmatprep.subr.bf16.mxu0 0
  %104 = vmatpush1.bf16.msra.mxu0 %v82
  %105 = vmatprep.subr.bf16.mxu0 0
  %106 = vmatpush1.bf16.msra.mxu0 %v83
  %107 = vmatprep.subr.bf16.mxu0 0
  %108 = vmatpush1.bf16.msra.mxu0 %v84
  %109 = vmatprep.subr.bf16.mxu0 0
  %110 = vmatpush1.bf16.msra.mxu0 0
  %111 = vmatprep.subr.bf16.mxu0 0
  %112 = vmatpush1.bf16.msra.mxu0 0
  %113 = vmatprep.subr.bf16.mxu0 0
  %114 = vmatpush1.bf16.msra.mxu0 0
  %115 = vmatprep.subr.bf16.mxu0 0
  %116 = vmatpush1.bf16.msra.mxu0 0
  %117 = vmatprep.subr.bf16.mxu0 0
  %118 = vmatpush1.bf16.msra.mxu0 0
  %119 = vmatprep.subr.bf16.mxu0 0
  %120 = vmatpush1.bf16.msra.mxu0 0
  %121 = vmatprep.subr.bf16.mxu0 0
  %122 = vmatpush1.bf16.msra.mxu0 0
  %123 = vmatprep.subr.bf16.mxu0 0
  %124 = vmatpush1.bf16.msra.mxu0 0
  %125 = vmatprep.mubr.bf16.mxu0 0
  %126 = vmatmul.mubr.bf16.gmra.mrb[0].mxu0 %v43
  %v127 = vpop.f32.mrb[0].mxu0
  %v128 = vadd.f32 0.0, %v127
  %v129 = vpop.f32.mrb[0].mxu0
  %v130 = vpop.f32.mrb[0].mxu0
  %v131 = vadd.f32 0.0, %v130
  %v132 = vpop.f32.mrb[0].mxu0
  %133 = vdwg.mxu0
  %v134 = vld [vmem:[#allocation2] sm:$0xff]
  %v135 = vld [vmem:[#allocation2 + $0x8] sm:$0xff]
  %v136 = vadd.f32 %v134, %v128
  %v137 = vadd.f32 %v135, %v131
  %138 = vst [vmem:[#allocation2] sm:$0xff] %v136
  %139 = vst [vmem:[#allocation2 + $0x8] sm:$0xff] %v137
  // Predicated region
  $region18: #{model_forward.86} parent=0 // pred_check
    %p140 = pneg %p15
  $region19: #{model_forward.86} parent=0 // pred_check_branch
    %142 = sbr.rel (%p140) target = $region21
  $region20: #{model_forward.86} parent=0 // pred_region
    %v143 = vld [vmem:[#allocation2] sm:$0xff]
    %v144 = vld [vmem:[#allocation2 + $0x8] sm:$0xff]
    %v145 = vld [vmem:[%s2] sm:$0x1]
    %v147 = vlaneseq
    %v148 = vshrl.u32 %v147, 7
    %v149 = vsub.s32 0, %v148
    %v150 = vrot.slane %v145, %v149
    %v152 = vadd.f32 %v143, %v150
    %v153 = vadd.f32 %v144, %v150
    %v154 = vmax.f32 %v152, 0.0
    %v155 = vmax.f32 %v153, 0.0
    %156 = vst [vmem:[%s3] sm:$0xff] %v154
    %157 = vst [vmem:[%s3 + $0x8] sm:$0xff] %v155
  $region21: #{model_forward.86} parent=0 // pred_fallthru
    _
  // Predicated region
  $region22: #{model_forward.86} parent=0 // pred_check
    _
  $region23: #{model_forward.86} parent=0 // pred_check_branch
    %159 = sbr.rel (0) target = $region25
  $region24: #{model_forward.86} parent=0 // pred_region
    _
  $region25: #{model_forward.86} parent=0 // pred_fallthru
    _
  // Predicated region
  $region26: #{model_forward.86} parent=0 // pred_check
    _
  $region27: #{model_forward.86} parent=0 // pred_check_branch
    %161 = sbr.rel (0) target = $region29
  $region28: #{model_forward.86} parent=0 // pred_region
    _
  $region29: #{model_forward.86} parent=0 // pred_fallthru
    _

// kernel: model_forward.88
$region0: #{model_forward.88}
  #allocation0 [shape = 'u32[]', space=smem, size = 0x4, offset = 0x4, fixed_abs, tag = 'smem constant byte address 0x4 - core index']
  #allocation1 [shape = 'u32[144,128]{1,0:T(1,128)}', space=vmem, size = 0x12000, scoped, tag = 'internal scratch']
  #allocation2 [shape = 'f32[16,128]{1,0:T(8,128)}', space=vmem, size = 0x2000, scoped, tag = 'scratch operand']
  %s0 = inlined_call_operand.vmem [shape: bf16[16,128], index: 0, kind: input, shape index: {}]
  %s1 = inlined_call_operand.vmem [shape: bf16[128,128], index: 1, kind: input, shape index: {}]
  %s2 = inlined_call_operand.vmem [shape: f32[1,128], index: 2, kind: input, shape index: {}]
  %s3 = inlined_call_operand.vmem [shape: f32[16,128], index: 3, kind: output, shape index: {}]
  %s4 = sld [smem:[#allocation0]]
  $region30: #{model_forward.88} parent=0
    _
  %s6 = ssub.s32 1, %s4
  %s7 = scalar_select 0, %s6, %s4
  // Predicated region
  $region2: #{model_forward.88} parent=0 // pred_check
    _
  $region3: #{model_forward.88} parent=0 // pred_check_branch
    %9 = sbr.rel (0) target = $region5
  $region4: #{model_forward.88} parent=0 // pred_region
    _
  $region5: #{model_forward.88} parent=0 // pred_fallthru
    _
  // Predicated region
  $region6: #{model_forward.88} parent=0 // pred_check
    _
  $region7: #{model_forward.88} parent=0 // pred_check_branch
    %11 = sbr.rel (0) target = $region9
  $region8: #{model_forward.88} parent=0 // pred_region
    _
  $region9: #{model_forward.88} parent=0 // pred_fallthru
    _
  // Predicated region
  $region10: #{model_forward.88} parent=0 // pred_check
    _
  $region11: #{model_forward.88} parent=0 // pred_check_branch
    %13 = sbr.rel (0) target = $region13
  $region12: #{model_forward.88} parent=0 // pred_region
    _
  $region13: #{model_forward.88} parent=0 // pred_fallthru
    _
  %p15 = scmp.eq.s32.totalorder 0, 0
  // Predicated region
  $region14: #{model_forward.88} parent=0 // pred_check
    %p16 = pneg %p15
  $region15: #{model_forward.88} parent=0 // pred_check_branch
    %18 = sbr.rel (%p16) target = $region17
  $region16: #{model_forward.88} parent=0 // pred_region
    %19 = vst [vmem:[#allocation2] sm:$0xff] 0.0
    %20 = vst [vmem:[#allocation2 + $0x8] sm:$0xff] 0.0
  $region17: #{model_forward.88} parent=0 // pred_fallthru
    _
  %v21 = vld [vmem:[%s0] sm:$0xf]
  %v22 = vld [vmem:[%s0 + $0x4] sm:$0xf]
  %v23 = vld [vmem:[%s1] sm:$0xf]
  %v24 = vld [vmem:[%s1 + $0x4] sm:$0xf]
  %v25 = vld [vmem:[%s1 + $0x8] sm:$0xf]
  %v26 = vld [vmem:[%s1 + $0xc] sm:$0xf]
  %v27 = vld [vmem:[%s1 + $0x10] sm:$0xf]
  %v28 = vld [vmem:[%s1 + $0x14] sm:$0xf]
  %v29 = vld [vmem:[%s1 + $0x18] sm:$0xf]
  %v30 = vld [vmem:[%s1 + $0x1c] sm:$0xf]
  %v31 = vld [vmem:[%s1 + $0x20] sm:$0xf]
  %v32 = vld [vmem:[%s1 + $0x24] sm:$0xf]
  %v33 = vld [vmem:[%s1 + $0x28] sm:$0xf]
  %v34 = vld [vmem:[%s1 + $0x2c] sm:$0xf]
  %v35 = vld [vmem:[%s1 + $0x30] sm:$0xf]
  %v36 = vld [vmem:[%s1 + $0x34] sm:$0xf]
  %v37 = vld [vmem:[%s1 + $0x38] sm:$0xf]
  %v38 = vld [vmem:[%s1 + $0x3c] sm:$0xf]
  %v41 = vunpack.c.l.b16 %v21
  %v42 = vunpack.c.l.b16 %v22
  %v43 = vpack.c.b16 %v42, %v41
  %v61 = vunpack.c.l.b16 %v23
  %v62 = vunpack.c.l.b16 %v24
  %v63 = vunpack.c.l.b16 %v25
  %v64 = vunpack.c.l.b16 %v26
  %v65 = vunpack.c.l.b16 %v27
  %v66 = vunpack.c.l.b16 %v28
  %v67 = vunpack.c.l.b16 %v29
  %v68 = vunpack.c.l.b16 %v30
  %v69 = vunpack.c.l.b16 %v31
  %v70 = vunpack.c.l.b16 %v32
  %v71 = vunpack.c.l.b16 %v33
  %v72 = vunpack.c.l.b16 %v34
  %v73 = vunpack.c.l.b16 %v35
  %v74 = vunpack.c.l.b16 %v36
  %v75 = vunpack.c.l.b16 %v37
  %v76 = vunpack.c.l.b16 %v38
  %v77 = vpack.c.b16 %v62, %v61
  %v78 = vpack.c.b16 %v64, %v63
  %v79 = vpack.c.b16 %v66, %v65
  %v80 = vpack.c.b16 %v68, %v67
  %v81 = vpack.c.b16 %v70, %v69
  %v82 = vpack.c.b16 %v72, %v71
  %v83 = vpack.c.b16 %v74, %v73
  %v84 = vpack.c.b16 %v76, %v75
  %93 = vmatprep.subr.bf16.mxu0 0
  %94 = vmatpush1.bf16.msra.mxu0 %v77
  %95 = vmatprep.subr.bf16.mxu0 0
  %96 = vmatpush1.bf16.msra.mxu0 %v78
  %97 = vmatprep.subr.bf16.mxu0 0
  %98 = vmatpush1.bf16.msra.mxu0 %v79
  %99 = vmatprep.subr.bf16.mxu0 0
  %100 = vmatpush1.bf16.msra.mxu0 %v80
  %101 = vmatprep.subr.bf16.mxu0 0
  %102 = vmatpush1.bf16.msra.mxu0 %v81
  %103 = vmatprep.subr.bf16.mxu0 0
  %104 = vmatpush1.bf16.msra.mxu0 %v82
  %105 = vmatprep.subr.bf16.mxu0 0
  %106 = vmatpush1.bf16.msra.mxu0 %v83
  %107 = vmatprep.subr.bf16.mxu0 0
  %108 = vmatpush1.bf16.msra.mxu0 %v84
  %109 = vmatprep.subr.bf16.mxu0 0
  %110 = vmatpush1.bf16.msra.mxu0 0
  %111 = vmatprep.subr.bf16.mxu0 0
  %112 = vmatpush1.bf16.msra.mxu0 0
  %113 = vmatprep.subr.bf16.mxu0 0
  %114 = vmatpush1.bf16.msra.mxu0 0
  %115 = vmatprep.subr.bf16.mxu0 0
  %116 = vmatpush1.bf16.msra.mxu0 0
  %117 = vmatprep.subr.bf16.mxu0 0
  %118 = vmatpush1.bf16.msra.mxu0 0
  %119 = vmatprep.subr.bf16.mxu0 0
  %120 = vmatpush1.bf16.msra.mxu0 0
  %121 = vmatprep.subr.bf16.mxu0 0
  %122 = vmatpush1.bf16.msra.mxu0 0
  %123 = vmatprep.subr.bf16.mxu0 0
  %124 = vmatpush1.bf16.msra.mxu0 0
  %125 = vmatprep.mubr.bf16.mxu0 0
  %126 = vmatmul.mubr.bf16.gmra.mrb[0].mxu0 %v43
  %v127 = vpop.f32.mrb[0].mxu0
  %v128 = vadd.f32 0.0, %v127
  %v129 = vpop.f32.mrb[0].mxu0
  %v130 = vpop.f32.mrb[0].mxu0
  %v131 = vadd.f32 0.0, %v130
  %v132 = vpop.f32.mrb[0].mxu0
  %133 = vdwg.mxu0
  %v134 = vld [vmem:[#allocation2] sm:$0xff]
  %v135 = vld [vmem:[#allocation2 + $0x8] sm:$0xff]
  %v136 = vadd.f32 %v134, %v128
  %v137 = vadd.f32 %v135, %v131
  %138 = vst [vmem:[#allocation2] sm:$0xff] %v136
  %139 = vst [vmem:[#allocation2 + $0x8] sm:$0xff] %v137
  // Predicated region
  $region18: #{model_forward.88} parent=0 // pred_check
    %p140 = pneg %p15
  $region19: #{model_forward.88} parent=0 // pred_check_branch
    %142 = sbr.rel (%p140) target = $region21
  $region20: #{model_forward.88} parent=0 // pred_region
    %v143 = vld [vmem:[#allocation2] sm:$0xff]
    %v144 = vld [vmem:[#allocation2 + $0x8] sm:$0xff]
    %v145 = vld [vmem:[%s2] sm:$0x1]
    %v147 = vlaneseq
    %v148 = vshrl.u32 %v147, 7
    %v149 = vsub.s32 0, %v148
    %v150 = vrot.slane %v145, %v149
    %v152 = vadd.f32 %v143, %v150
    %v153 = vadd.f32 %v144, %v150
    %154 = vst [vmem:[%s3] sm:$0xff] %v152
    %155 = vst [vmem:[%s3 + $0x8] sm:$0xff] %v153
  $region21: #{model_forward.88} parent=0 // pred_fallthru
    _
  // Predicated region
  $region22: #{model_forward.88} parent=0 // pred_check
    _
  $region23: #{model_forward.88} parent=0 // pred_check_branch
    %157 = sbr.rel (0) target = $region25
  $region24: #{model_forward.88} parent=0 // pred_region
    _
  $region25: #{model_forward.88} parent=0 // pred_fallthru
    _
  // Predicated region
  $region26: #{model_forward.88} parent=0 // pred_check
    _
  $region27: #{model_forward.88} parent=0 // pred_check_branch
    %159 = sbr.rel (0) target = $region29
  $region28: #{model_forward.88} parent=0 // pred_region
    _
  $region29: #{model_forward.88} parent=0 // pred_fallthru
    _

// kernel: model_forward.97
$region0: #{model_forward.97}
  #allocation0 [shape = 'u32[]', space=smem, size = 0x4, offset = 0x4, fixed_abs, tag = 'smem constant byte address 0x4 - core index']
  #allocation1 [shape = 'u32[144,128]{1,0:T(1,128)}', space=vmem, size = 0x12000, scoped, tag = 'internal scratch']
  #allocation2 [shape = 'f32[16,128]{1,0:T(8,128)}', space=vmem, size = 0x2000, scoped, tag = 'scratch operand']
  %s0 = inlined_call_operand.vmem [shape: f32[16,128], index: 0, kind: input, shape index: {}]
  %s1 = inlined_call_operand.vmem [shape: f32[128,128], index: 1, kind: input, shape index: {}]
  %s2 = inlined_call_operand.vmem [shape: f32[1,128], index: 2, kind: input, shape index: {}]
  %s3 = inlined_call_operand.vmem [shape: f32[16,128], index: 3, kind: output, shape index: {}]
  %s4 = sld [smem:[#allocation0]]
  $region30: #{model_forward.97} parent=0
    _
  %s6 = ssub.s32 1, %s4
  %s7 = scalar_select 0, %s6, %s4
  // Predicated region
  $region2: #{model_forward.97} parent=0 // pred_check
    _
  $region3: #{model_forward.97} parent=0 // pred_check_branch
    %9 = sbr.rel (0) target = $region5
  $region4: #{model_forward.97} parent=0 // pred_region
    _
  $region5: #{model_forward.97} parent=0 // pred_fallthru
    _
  // Predicated region
  $region6: #{model_forward.97} parent=0 // pred_check
    _
  $region7: #{model_forward.97} parent=0 // pred_check_branch
    %11 = sbr.rel (0) target = $region9
  $region8: #{model_forward.97} parent=0 // pred_region
    _
  $region9: #{model_forward.97} parent=0 // pred_fallthru
    _
  // Predicated region
  $region10: #{model_forward.97} parent=0 // pred_check
    _
  $region11: #{model_forward.97} parent=0 // pred_check_branch
    %13 = sbr.rel (0) target = $region13
  $region12: #{model_forward.97} parent=0 // pred_region
    _
  $region13: #{model_forward.97} parent=0 // pred_fallthru
    _
  %p14 = scmp.eq.s32.totalorder 0, 0
  // Predicated region
  $region14: #{model_forward.97} parent=0 // pred_check
    %p15 = pneg %p14
  $region15: #{model_forward.97} parent=0 // pred_check_branch
    %17 = sbr.rel (%p15) target = $region17
  $region16: #{model_forward.97} parent=0 // pred_region
    %18 = vst [vmem:[#allocation2] sm:$0xff] 0.0
    %19 = vst [vmem:[#allocation2 + $0x8] sm:$0xff] 0.0
  $region17: #{model_forward.97} parent=0 // pred_fallthru
    _
  %v20 = vld [vmem:[#allocation2] sm:$0xff]
  %v21 = vld [vmem:[#allocation2 + $0x8] sm:$0xff]
  %v22 = vld [vmem:[%s0] sm:$0xff]
  %v23 = vld [vmem:[%s0 + $0x8] sm:$0xff]
  %v24 = vld [vmem:[%s1] sm:$0xff]
  %v25 = vld [vmem:[%s1 + $0x8] sm:$0xff]
  %v26 = vld [vmem:[%s1 + $0x10] sm:$0xff]
  %v27 = vld [vmem:[%s1 + $0x18] sm:$0xff]
  %v28 = vld [vmem:[%s1 + $0x20] sm:$0xff]
  %v29 = vld [vmem:[%s1 + $0x28] sm:$0xff]
  %v30 = vld [vmem:[%s1 + $0x30] sm:$0xff]
  %v31 = vld [vmem:[%s1 + $0x38] sm:$0xff]
  %v32 = vld [vmem:[%s1 + $0x40] sm:$0xff]
  %v33 = vld [vmem:[%s1 + $0x48] sm:$0xff]
  %v34 = vld [vmem:[%s1 + $0x50] sm:$0xff]
  %v35 = vld [vmem:[%s1 + $0x58] sm:$0xff]
  %v36 = vld [vmem:[%s1 + $0x60] sm:$0xff]
  %v37 = vld [vmem:[%s1 + $0x68] sm:$0xff]
  %v38 = vld [vmem:[%s1 + $0x70] sm:$0xff]
  %v39 = vld [vmem:[%s1 + $0x78] sm:$0xff]
  %40 = vmatprep.subr.mxu0 0.0
  %41 = vmatpush1.msra.mxu0 %v24
  %42 = vmatprep.subr.mxu0 0.0
  %43 = vmatpush1.msra.mxu0 %v25
  %44 = vmatprep.subr.mxu0 0.0
  %45 = vmatpush1.msra.mxu0 %v26
  %46 = vmatprep.subr.mxu0 0.0
  %47 = vmatpush1.msra.mxu0 %v27
  %48 = vmatprep.subr.mxu0 0.0
  %49 = vmatpush1.msra.mxu0 %v28
  %50 = vmatprep.subr.mxu0 0.0
  %51 = vmatpush1.msra.mxu0 %v29
  %52 = vmatprep.subr.mxu0 0.0
  %53 = vmatpush1.msra.mxu0 %v30
  %54 = vmatprep.subr.mxu0 0.0
  %55 = vmatpush1.msra.mxu0 %v31
  %56 = vmatprep.subr.mxu0 0.0
  %57 = vmatpush1.msra.mxu0 %v32
  %58 = vmatprep.subr.mxu0 0.0
  %59 = vmatpush1.msra.mxu0 %v33
  %60 = vmatprep.subr.mxu0 0.0
  %61 = vmatpush1.msra.mxu0 %v34
  %62 = vmatprep.subr.mxu0 0.0
  %63 = vmatpush1.msra.mxu0 %v35
  %64 = vmatprep.subr.mxu0 0.0
  %65 = vmatpush1.msra.mxu0 %v36
  %66 = vmatprep.subr.mxu0 0.0
  %67 = vmatpush1.msra.mxu0 %v37
  %68 = vmatprep.subr.mxu0 0.0
  %69 = vmatpush1.msra.mxu0 %v38
  %70 = vmatprep.subr.mxu0 0.0
  %71 = vmatpush1.msra.mxu0 %v39
  %72 = vmatprep.subr.mxu0 0.0
  %73 = vmatpush1.msra.mxu0 0.0
  %74 = vmatprep.subr.mxu0 0.0
  %75 = vmatpush1.msra.mxu0 0.0
  %76 = vmatprep.subr.mxu0 0.0
  %77 = vmatpush1.msra.mxu0 0.0
  %78 = vmatprep.subr.mxu0 0.0
  %79 = vmatpush1.msra.mxu0 0.0
  %80 = vmatprep.subr.mxu0 0.0
  %81 = vmatpush1.msra.mxu0 0.0
  %82 = vmatprep.subr.mxu0 0.0
  %83 = vmatpush1.msra.mxu0 0.0
  %84 = vmatprep.subr.mxu0 0.0
  %85 = vmatpush1.msra.mxu0 0.0
  %86 = vmatprep.subr.mxu0 0.0
  %87 = vmatpush1.msra.mxu0 0.0
  %88 = vmatprep.subr.mxu0 0.0
  %89 = vmatpush1.msra.mxu0 0.0
  %90 = vmatprep.subr.mxu0 0.0
  %91 = vmatpush1.msra.mxu0 0.0
  %92 = vmatprep.subr.mxu0 0.0
  %93 = vmatpush1.msra.mxu0 0.0
  %94 = vmatprep.subr.mxu0 0.0
  %95 = vmatpush1.msra.mxu0 0.0
  %96 = vmatprep.subr.mxu0 0.0
  %97 = vmatpush1.msra.mxu0 0.0
  %98 = vmatprep.subr.mxu0 0.0
  %99 = vmatpush1.msra.mxu0 0.0
  %100 = vmatprep.subr.mxu0 0.0
  %101 = vmatpush1.msra.mxu0 0.0
  %102 = vmatprep.subr.mxu0 0.0
  %103 = vmatpush1.msra.mxu0 0.0
  %104 = vmatprep.mubr.f32.mxu0 0.0
  %105 = vmatmul.mubr.f32.gmra.mrb[0].mxu0 %v22
  %v106 = vpop.f32.mrb[0].mxu0
  %v107 = vadd.f32 0.0, %v106
  %v108 = vpop.f32.mrb[0].mxu0
  %109 = vmatprep.mubr.f32.mxu0 0.0
  %110 = vmatmul.mubr.f32.gmra.mrb[0].mxu0 %v23
  %v111 = vpop.f32.mrb[0].mxu0
  %v112 = vadd.f32 0.0, %v111
  %v113 = vpop.f32.mrb[0].mxu0
  %114 = vdwg.mxu0
  %v115 = vadd.f32 %v20, %v107
  %v116 = vadd.f32 %v21, %v112
  %117 = vst [vmem:[#allocation2] sm:$0xff] %v115
  %118 = vst [vmem:[#allocation2 + $0x8] sm:$0xff] %v116
  // Predicated region
  $region18: #{model_forward.97} parent=0 // pred_check
    %p119 = pneg %p14
  $region19: #{model_forward.97} parent=0 // pred_check_branch
    %121 = sbr.rel (%p119) target = $region21
  $region20: #{model_forward.97} parent=0 // pred_region
    %v122 = vld [vmem:[#allocation2] sm:$0xff]
    %v123 = vld [vmem:[#allocation2 + $0x8] sm:$0xff]
    %v124 = vld [vmem:[%s2] sm:$0x1]
    %v126 = vlaneseq
    %v127 = vshrl.u32 %v126, 7
    %v128 = vsub.s32 0, %v127
    %v129 = vrot.slane %v124, %v128
    %v131 = vadd.f32 %v122, %v129
    %v132 = vadd.f32 %v123, %v129
    %v133 = vmax.f32 %v131, -1e+10
    %v134 = vmax.f32 %v132, -1e+10
    %v135 = vmin.f32 %v133, 1e+10
    %v136 = vmin.f32 %v134, 1e+10
    %v137 = vlaneseq
    %v138 = vand.u32 %v137, 127
    %vm139 = vcmp.lt.s32.totalorder %v138, 4
    %v140 = vsel %vm139, %v135, -inf
    %v141 = vsel %vm139, %v136, -inf
    %142 = vmax.xlane.f32.xlu0 %v140
    %v143 = vpop.xlane.xlu0 %142
    %144 = vmax.xlane.f32.xlu0 %v141
    %v145 = vpop.xlane.xlu0 %144
    %v146 = vsub.f32 %v135, %v143
    %v147 = vsub.f32 %v136, %v145
    %v148 = vmul.f32 %v146, 1.442695
    %v149 = vpow.pop %v148
    %v150 = vmul.f32 %v147, 1.442695
    %v151 = vpow.pop %v150
    %v152 = vsel %vm139, %v149, 0.0
    %v153 = vsel %vm139, %v151, 0.0
    %154 = vadd.xlane.f32.xlu0 %v152
    %v155 = vpop.xlane.xlu0 %154
    %156 = vadd.xlane.f32.xlu0 %v153
    %v157 = vpop.xlane.xlu0 %156
    %v158 = vlog2.pop %v155
    %v159 = vmul.f32 %v158, 0.6931472
    %v160 = vlog2.pop %v157
    %v161 = vmul.f32 %v160, 0.6931472
    %v162 = vsub.f32 %v146, %v159
    %v163 = vsub.f32 %v147, %v161
    %v164 = vsel %vm139, %v162, 0.0
    %v165 = vsel %vm139, %v163, 0.0
    %166 = vst [vmem:[%s3] sm:$0xff] %v164
    %167 = vst [vmem:[%s3 + $0x8] sm:$0xff] %v165
  $region21: #{model_forward.97} parent=0 // pred_fallthru
    _
  // Predicated region
  $region22: #{model_forward.97} parent=0 // pred_check
    _
  $region23: #{model_forward.97} parent=0 // pred_check_branch
    %169 = sbr.rel (0) target = $region25
  $region24: #{model_forward.97} parent=0 // pred_region
    _
  $region25: #{model_forward.97} parent=0 // pred_fallthru
    _
  // Predicated region
  $region26: #{model_forward.97} parent=0 // pred_check
    _
  $region27: #{model_forward.97} parent=0 // pred_check_branch
    %171 = sbr.rel (0) target = $region29
  $region28: #{model_forward.97} parent=0 // pred_region
    _
  $region29: #{model_forward.97} parent=0 // pred_fallthru
    _

</llo_original>
